<compile_context>
chip_gen: v7x
topology: tpu7x:2x2x1
jax: 0.10.0
libtpu: 0.0.40
codegen_flags: <defaults>
</compile_context>

<pallas_src>
import jax
import jax.numpy as jnp
from jax.experimental import pallas as pl
from jax.experimental.pallas import tpu as pltpu


# ------------------------------ fused kernel -------------------------------

def _lenet_kernel(x1_ref, m1e_ref, m1o_ref, b1_ref,
                  m2e_ref, m2o_ref, b2_ref,
                  wf1_ref, bf1_ref, wf2_ref, bf2_ref, wf3_ref, bf3_ref,
                  out_ref):
    f32 = jnp.float32
    tb = x1_ref.shape[0]

    # ---- conv1 (5x5, 1->6) + 2x2 max-pool: banded matmuls per column parity.
    # x1[n, i, ki*28 + p] = x[n, i + ki, p]           (host-side im2row)
    # m1e/m1o[ki*28+p, b*6+co] = w1[co, 0, ki, p - (2b + parity)]
    x1 = x1_ref[...].reshape(tb * 24, 140)
    z1e = jnp.dot(x1, m1e_ref[...], preferred_element_type=f32)      # (tb*24, 72)
    z1o = jnp.dot(x1, m1o_ref[...], preferred_element_type=f32)      # (tb*24, 72)
    p1 = jnp.maximum(z1e, z1o).reshape(tb * 12, 2, 72)               # column pool
    p1 = jnp.maximum(p1[:, 0, :], p1[:, 1, :]).reshape(tb, 12, 72)   # row pool
    h1 = jnp.maximum(p1 + b1_ref[...], 0.0)          # lane index = col*6 + chan

    # ---- conv2 (5x5, 6->16) + 2x2 max-pool: 5 row-tap matmuls per parity.
    # m2e/m2o[ki][c*6+ci, b*16+co] = w2[co, ci, ki, c - (2b + parity)]
    z2e = jnp.zeros((tb * 8, 64), f32)
    z2o = jnp.zeros((tb * 8, 64), f32)
    for ki in range(5):
        hk = h1[:, ki:ki + 8, :].reshape(tb * 8, 72)
        z2e = z2e + jnp.dot(hk, m2e_ref[ki], preferred_element_type=f32)
        z2o = z2o + jnp.dot(hk, m2o_ref[ki], preferred_element_type=f32)
    p2 = jnp.maximum(z2e, z2o).reshape(tb * 4, 2, 64)                # column pool
    p2 = jnp.maximum(p2[:, 0, :], p2[:, 1, :]).reshape(tb, 4, 64)    # row pool
    h2 = jnp.maximum(p2 + b2_ref[...], 0.0)          # lane index = col*16 + chan

    # ---- fc1 on the MXU: NCHW flatten folded into the (4, 64, 128) weight.
    r1 = jnp.dot(h2[:, 0, :], wf1_ref[0], preferred_element_type=f32)
    for a in range(1, 4):
        r1 = r1 + jnp.dot(h2[:, a, :], wf1_ref[a], preferred_element_type=f32)
    r1 = jnp.maximum(r1 + bf1_ref[...], 0.0)                         # (tb, 128)

    # ---- fc2 / fc3: lane-dense 128-wide matmuls (output lanes 10..127 = pad).
    r2 = jnp.maximum(jnp.dot(r1, wf2_ref[...], preferred_element_type=f32)
                     + bf2_ref[...], 0.0)
    out = jnp.dot(r2, wf3_ref[...], preferred_element_type=f32) + bf3_ref[...]
    out_ref[...] = out.astype(out_ref.dtype)


# ------------------------------- wrapper ------------------------------------

def _round_up(v, m):
    return -(-v // m) * m


def _resident(shape):
    nd = len(shape)
    return pl.BlockSpec(shape, lambda i, _nd=nd: (0,) * _nd)


@jax.jit
def net_forward(params, x_nchw):
    n, c, h, w = x_nchw.shape
    assert c == 1 and h == 28 and w == 28, f"expected (N,1,28,28), got {x_nchw.shape}"
    x = x_nchw.astype(jnp.float32).reshape(n, 28, 28)

    # Batch tile: lane/sublane friendly, bounded so one tile plus the resident
    # weights fits comfortably under v7x's 64 MiB VMEM with double buffering.
    tb = 128 if n >= 128 else _round_up(n, 8)
    n_pad = _round_up(n, tb)
    if n_pad != n:
        x = jnp.pad(x, ((0, n_pad - n), (0, 0), (0, 0)))

    # Host-side im2row over the 5 kernel rows (the only host-side prep):
    # x1[n, i, ki*28 + p] = x[n, i + ki, p]  -> (N, 24, 140), lane-dense.
    x1 = jnp.concatenate([x[:, ki:ki + 24, :] for ki in range(5)], axis=-1)

    args = (x1, params["m1e"], params["m1o"], params["b1t"],
            params["m2e"], params["m2o"], params["b2t"],
            params["wf1"], params["bf1"], params["wf2"], params["bf2"],
            params["wf3"], params["bf3"])

    # Derived from padded tile sizes: ~150 KiB of live activations per sample
    # plus ~1.7 MiB of double-buffered VMEM-resident weights, with headroom.
    vmem_limit = int(min(56 * 2 ** 20, 8 * 2 ** 20 + tb * 224 * 1024))
    flops = 2 * n_pad * (24 * 140 * 144 + 5 * 8 * 72 * 128
                         + 4 * 64 * 128 + 2 * 128 * 128)
    bytes_accessed = 4 * (int(x1.size) + n_pad * 128
                          + sum(int(a.size) for a in args[1:]))

    out = pl.pallas_call(
        _lenet_kernel,
        grid=(n_pad // tb,),
        out_shape=jax.ShapeDtypeStruct((n_pad, 128), jnp.float32),
        in_specs=[pl.BlockSpec((tb, 24, 140), lambda i: (i, 0, 0))]
                 + [_resident(a.shape) for a in args[1:]],
        out_specs=pl.BlockSpec((tb, 128), lambda i: (i, 0)),
        compiler_params=pltpu.CompilerParams(
            dimension_semantics=("parallel",),
            vmem_limit_bytes=vmem_limit),
        cost_estimate=pl.CostEstimate(flops=flops, transcendentals=0,
                                      bytes_accessed=bytes_accessed),
    )(*args)
    return out[:n, :10]


# ------------------------------ parameters ----------------------------------

def _band(w, w_in, parity):
    """Banded conv->matmul weight for one output-column parity.

    w: (Cout, Cin, KH, KW).  Returns (KH, W_in, Cin, Wb, Cout) where
    entry[ki, p, ci, b, co] = w[co, ci, ki, p - (2*b + parity)] (0 outside the
    kernel support), so `patch_row @ band` evaluates the convolution at output
    columns j = 2*b + parity.
    """
    cout, cin, kh, kw = w.shape
    wb = (w_in - kw + 1) // 2
    p = jnp.arange(w_in)[:, None]                  # (W_in, 1)
    b = jnp.arange(wb)[None, :]                    # (1, Wb)
    kj = p - (2 * b + parity)                      # (W_in, Wb)
    valid = (kj >= 0) & (kj < kw)
    wt = jnp.transpose(w, (2, 3, 1, 0))            # (KH, KW, Cin, Cout)
    m = wt[:, jnp.clip(kj, 0, kw - 1)]             # (KH, W_in, Wb, Cin, Cout)
    m = jnp.where(valid[None, :, :, None, None], m, 0.0)
    return jnp.transpose(m, (0, 1, 3, 2, 4))       # (KH, W_in, Cin, Wb, Cout)


def init_raw_params(key):
    """Torch-layout parameters (uniform +-1/sqrt(fan_in), like nn defaults)."""
    def uni(k, shape, fan_in):
        bound = 1.0 / jnp.sqrt(jnp.float32(fan_in))
        return jax.random.uniform(k, shape, jnp.float32, -bound, bound)

    ks = jax.random.split(key, 10)
    return {
        "w1": uni(ks[0], (6, 1, 5, 5), 25),   "b1": uni(ks[1], (6,), 25),
        "w2": uni(ks[2], (16, 6, 5, 5), 150), "b2": uni(ks[3], (16,), 150),
        "wf1": uni(ks[4], (120, 256), 256),   "bf1": uni(ks[5], (120,), 256),
        "wf2": uni(ks[6], (84, 120), 120),    "bf2": uni(ks[7], (84,), 120),
        "wf3": uni(ks[8], (10, 84), 84),      "bf3": uni(ks[9], (10,), 84),
    }


def pack_params(raw):
    """Convert torch-layout weights into the kernel's MXU-friendly layouts."""
    # conv1: (140, 72) banded matrices; rows = ki*28 + p, cols = b*6 + co.
    m1e = _band(raw["w1"], 28, 0).reshape(140, 72)
    m1o = _band(raw["w1"], 28, 1).reshape(140, 72)
    b1t = jnp.tile(raw["b1"], 12).reshape(1, 72)

    # conv2: per kernel-row (5, 72, 64); rows = c*6 + ci, cols = b*16 + co.
    m2e = _band(raw["w2"], 12, 0).reshape(5, 72, 64)
    m2o = _band(raw["w2"], 12, 1).reshape(5, 72, 64)
    b2t = jnp.tile(raw["b2"], 4).reshape(1, 64)

    # fc1: fold the torch NCHW flatten (idx = co*16 + a*4 + b) into a
    # (4a, 64[b*16+co], 128f) layout; pad the 120 outputs to 128 lanes.
    wf1 = jnp.pad(raw["wf1"], ((0, 8), (0, 0)))            # (128, 256)
    wf1 = wf1.reshape(128, 16, 4, 4)                       # [f, co, a, b]
    wf1 = jnp.transpose(wf1, (2, 3, 1, 0)).reshape(4, 64, 128)
    bf1 = jnp.pad(raw["bf1"], (0, 8)).reshape(1, 128)

    # fc2 / fc3: zero-padded to lane-dense 128x128 (pads stay exactly zero
    # through the ReLUs because the bias pads are zero).
    wf2 = jnp.zeros((128, 128), jnp.float32).at[:120, :84].set(raw["wf2"].T)
    bf2 = jnp.pad(raw["bf2"], (0, 44)).reshape(1, 128)
    wf3 = jnp.zeros((128, 128), jnp.float32).at[:84, :10].set(raw["wf3"].T)
    bf3 = jnp.pad(raw["bf3"], (0, 118)).reshape(1, 128)

    return {"m1e": m1e, "m1o": m1o, "b1t": b1t,
            "m2e": m2e, "m2o": m2o, "b2t": b2t,
            "wf1": wf1, "bf1": bf1, "wf2": wf2, "bf2": bf2,
            "wf3": wf3, "bf3": bf3}


# ------------------------------ reference -----------------------------------

def reference_forward(raw, x):
    """Pure-JAX reference that mirrors the PyTorch module exactly."""
    hi = jax.lax.Precision.HIGHEST
    dn = ("NCHW", "OIHW", "NCHW")
    y = jax.lax.conv_general_dilated(x.astype(jnp.float32), raw["w1"], (1, 1),
                                     "VALID", dimension_numbers=dn, precision=hi)
    y = jax.nn.relu(y + raw["b1"][None, :, None, None])
    y = jax.lax.reduce_window(y, -jnp.inf, jax.lax.max,
                              (1, 1, 2, 2), (1, 1, 2, 2), "VALID")
    y = jax.lax.conv_general_dilated(y, raw["w2"], (1, 1), "VALID",
                                     dimension_numbers=dn, precision=hi)
    y = jax.nn.relu(y + raw["b2"][None, :, None, None])
    y = jax.lax.reduce_window(y, -jnp.inf, jax.lax.max,
                              (1, 1, 2, 2), (1, 1, 2, 2), "VALID")
    y = y.reshape(y.shape[0], 16 * 4 * 4)
    y = jax.nn.relu(jnp.dot(y, raw["wf1"].T, precision=hi) + raw["bf1"])
    y = jax.nn.relu(jnp.dot(y, raw["wf2"].T, precision=hi) + raw["bf2"])
    return jnp.dot(y, raw["wf3"].T, precision=hi) + raw["bf3"]


if __name__ == "__main__":
    key = jax.random.PRNGKey(0)
    k_param, k_x = jax.random.split(key)
    raw = init_raw_params(k_param)
    params = pack_params(raw)
    # Input must be 28x28 so two (conv5 + pool2) stages yield 16*4*4 = 256.
    x = jax.random.normal(k_x, (2, 1, 28, 28), jnp.float32)

    out = jax.block_until_ready(net_forward(params, x))
    assert out.shape == (2, 10), out.shape
    assert out.dtype == jnp.float32

    ref = jax.block_until_ready(reference_forward(raw, x))
    err = float(jnp.max(jnp.abs(out - ref)))
    assert err < 5e-2, f"kernel/reference mismatch, max abs err = {err}"
    print("KERNEL_OK")
</pallas_src>

<mosaic_0001>
module attributes {stable_mosaic.version = 11 : i64} {
  func.func @_lenet_kernel(%arg0: i32, %arg1: memref<8x24x140xf32, #tpu.memory_space<vmem>>, %arg2: memref<140x72xf32, #tpu.memory_space<vmem>>, %arg3: memref<140x72xf32, #tpu.memory_space<vmem>>, %arg4: memref<1x72xf32, #tpu.memory_space<vmem>>, %arg5: memref<5x72x64xf32, #tpu.memory_space<vmem>>, %arg6: memref<5x72x64xf32, #tpu.memory_space<vmem>>, %arg7: memref<1x64xf32, #tpu.memory_space<vmem>>, %arg8: memref<4x64x128xf32, #tpu.memory_space<vmem>>, %arg9: memref<1x128xf32, #tpu.memory_space<vmem>>, %arg10: memref<128x128xf32, #tpu.memory_space<vmem>>, %arg11: memref<1x128xf32, #tpu.memory_space<vmem>>, %arg12: memref<128x128xf32, #tpu.memory_space<vmem>>, %arg13: memref<1x128xf32, #tpu.memory_space<vmem>>, %arg14: memref<8x128xf32, #tpu.memory_space<vmem>>) attributes {dimension_semantics = [#tpu.dimension_semantics<parallel>], iteration_bounds = array<i64: 1>, scalar_prefetch = 0 : i64, scratch_operands = 0 : i64, tpu.core_type = #tpu.core_type<tc>, window_params = [{transform_indices = @transform_0, window_bounds = array<i64: 8, 24, 140>}, {pipeline_mode = #tpu.pipeline_mode<synchronous>, transform_indices = @transform_1, window_bounds = array<i64: 140, 72>}, {pipeline_mode = #tpu.pipeline_mode<synchronous>, transform_indices = @transform_2, window_bounds = array<i64: 140, 72>}, {pipeline_mode = #tpu.pipeline_mode<synchronous>, transform_indices = @transform_3, window_bounds = array<i64: 1, 72>}, {pipeline_mode = #tpu.pipeline_mode<synchronous>, transform_indices = @transform_4, window_bounds = array<i64: 5, 72, 64>}, {pipeline_mode = #tpu.pipeline_mode<synchronous>, transform_indices = @transform_5, window_bounds = array<i64: 5, 72, 64>}, {pipeline_mode = #tpu.pipeline_mode<synchronous>, transform_indices = @transform_6, window_bounds = array<i64: 1, 64>}, {pipeline_mode = #tpu.pipeline_mode<synchronous>, transform_indices = @transform_7, window_bounds = array<i64: 4, 64, 128>}, {pipeline_mode = #tpu.pipeline_mode<synchronous>, transform_indices = @transform_8, window_bounds = array<i64: 1, 128>}, {pipeline_mode = #tpu.pipeline_mode<synchronous>, transform_indices = @transform_9, window_bounds = array<i64: 128, 128>}, {pipeline_mode = #tpu.pipeline_mode<synchronous>, transform_indices = @transform_10, window_bounds = array<i64: 1, 128>}, {pipeline_mode = #tpu.pipeline_mode<synchronous>, transform_indices = @transform_11, window_bounds = array<i64: 128, 128>}, {pipeline_mode = #tpu.pipeline_mode<synchronous>, transform_indices = @transform_12, window_bounds = array<i64: 1, 128>}, {transform_indices = @transform_13, window_bounds = array<i64: 8, 128>}]} {
    %c0 = arith.constant 0 : index
    %c0_0 = arith.constant 0 : index
    %c0_1 = arith.constant 0 : index
    %0 = vector.load %arg1[%c0, %c0_0, %c0_1] : memref<8x24x140xf32, #tpu.memory_space<vmem>>, vector<8x24x140xf32>
    %1 = vector.shape_cast %0 : vector<8x24x140xf32> to vector<192x140xf32>
    %c0_2 = arith.constant 0 : index
    %c0_3 = arith.constant 0 : index
    %2 = vector.load %arg2[%c0_2, %c0_3] : memref<140x72xf32, #tpu.memory_space<vmem>>, vector<140x72xf32>
    %cst = arith.constant dense<0.000000e+00> : vector<192x72xf32>
    %3 = tpu.matmul %1, %2, %cst {dimension_numbers = #tpu.dot_dimension_numbers<[1], [0], [0], [1], [0, 0, 1, 1], [], []>} : vector<192x140xf32>, vector<140x72xf32>, vector<192x72xf32> -> vector<192x72xf32>
    %c0_4 = arith.constant 0 : index
    %c0_5 = arith.constant 0 : index
    %4 = vector.load %arg3[%c0_4, %c0_5] : memref<140x72xf32, #tpu.memory_space<vmem>>, vector<140x72xf32>
    %cst_6 = arith.constant dense<0.000000e+00> : vector<192x72xf32>
    %5 = tpu.matmul %1, %4, %cst_6 {dimension_numbers = #tpu.dot_dimension_numbers<[1], [0], [0], [1], [0, 0, 1, 1], [], []>} : vector<192x140xf32>, vector<140x72xf32>, vector<192x72xf32> -> vector<192x72xf32>
    %6 = arith.maximumf %3, %5 : vector<192x72xf32>
    %7 = vector.shape_cast %6 : vector<192x72xf32> to vector<96x2x72xf32>
    %8 = vector.extract_strided_slice %7 {offsets = [0, 0, 0], sizes = [96, 1, 72], strides = [1, 1, 1]} : vector<96x2x72xf32> to vector<96x1x72xf32>
    %9 = vector.shape_cast %8 : vector<96x1x72xf32> to vector<96x72xf32>
    %10 = vector.extract_strided_slice %7 {offsets = [0, 1, 0], sizes = [96, 1, 72], strides = [1, 1, 1]} : vector<96x2x72xf32> to vector<96x1x72xf32>
    %11 = vector.shape_cast %10 : vector<96x1x72xf32> to vector<96x72xf32>
    %12 = arith.maximumf %9, %11 : vector<96x72xf32>
    %13 = vector.shape_cast %12 : vector<96x72xf32> to vector<8x12x72xf32>
    %c0_7 = arith.constant 0 : index
    %c0_8 = arith.constant 0 : index
    %14 = vector.load %arg4[%c0_7, %c0_8] : memref<1x72xf32, #tpu.memory_space<vmem>>, vector<1x72xf32>
    %15 = vector.shape_cast %14 : vector<1x72xf32> to vector<1x1x72xf32>
    %16 = vector.broadcast %15 : vector<1x1x72xf32> to vector<8x12x72xf32>
    %17 = arith.addf %13, %16 : vector<8x12x72xf32>
    %cst_9 = arith.constant 0.000000e+00 : f32
    %18 = vector.broadcast %cst_9 : f32 to vector<8x12x72xf32>
    %19 = arith.maximumf %17, %18 : vector<8x12x72xf32>
    %cst_10 = arith.constant 0.000000e+00 : f32
    %20 = vector.broadcast %cst_10 : f32 to vector<64x64xf32>
    %cst_11 = arith.constant 0.000000e+00 : f32
    %21 = vector.broadcast %cst_11 : f32 to vector<64x64xf32>
    %22 = vector.extract_strided_slice %19 {offsets = [0, 0, 0], sizes = [8, 8, 72], strides = [1, 1, 1]} : vector<8x12x72xf32> to vector<8x8x72xf32>
    %23 = vector.shape_cast %22 : vector<8x8x72xf32> to vector<64x72xf32>
    %c0_12 = arith.constant 0 : index
    %c0_13 = arith.constant 0 : index
    %c0_14 = arith.constant 0 : index
    %24 = vector.load %arg5[%c0_12, %c0_13, %c0_14] : memref<5x72x64xf32, #tpu.memory_space<vmem>>, vector<1x72x64xf32>
    %25 = vector.shape_cast %24 : vector<1x72x64xf32> to vector<72x64xf32>
    %cst_15 = arith.constant dense<0.000000e+00> : vector<64x64xf32>
    %26 = tpu.matmul %23, %25, %cst_15 {dimension_numbers = #tpu.dot_dimension_numbers<[1], [0], [0], [1], [0, 0, 1, 1], [], []>} : vector<64x72xf32>, vector<72x64xf32>, vector<64x64xf32> -> vector<64x64xf32>
    %27 = arith.addf %20, %26 : vector<64x64xf32>
    %c0_16 = arith.constant 0 : index
    %c0_17 = arith.constant 0 : index
    %c0_18 = arith.constant 0 : index
    %28 = vector.load %arg6[%c0_16, %c0_17, %c0_18] : memref<5x72x64xf32, #tpu.memory_space<vmem>>, vector<1x72x64xf32>
    %29 = vector.shape_cast %28 : vector<1x72x64xf32> to vector<72x64xf32>
    %cst_19 = arith.constant dense<0.000000e+00> : vector<64x64xf32>
    %30 = tpu.matmul %23, %29, %cst_19 {dimension_numbers = #tpu.dot_dimension_numbers<[1], [0], [0], [1], [0, 0, 1, 1], [], []>} : vector<64x72xf32>, vector<72x64xf32>, vector<64x64xf32> -> vector<64x64xf32>
    %31 = arith.addf %21, %30 : vector<64x64xf32>
    %32 = vector.extract_strided_slice %19 {offsets = [0, 1, 0], sizes = [8, 8, 72], strides = [1, 1, 1]} : vector<8x12x72xf32> to vector<8x8x72xf32>
    %33 = vector.shape_cast %32 : vector<8x8x72xf32> to vector<64x72xf32>
    %c1 = arith.constant 1 : index
    %c0_20 = arith.constant 0 : index
    %c0_21 = arith.constant 0 : index
    %34 = vector.load %arg5[%c1, %c0_20, %c0_21] : memref<5x72x64xf32, #tpu.memory_space<vmem>>, vector<1x72x64xf32>
    %35 = vector.shape_cast %34 : vector<1x72x64xf32> to vector<72x64xf32>
    %cst_22 = arith.constant dense<0.000000e+00> : vector<64x64xf32>
    %36 = tpu.matmul %33, %35, %cst_22 {dimension_numbers = #tpu.dot_dimension_numbers<[1], [0], [0], [1], [0, 0, 1, 1], [], []>} : vector<64x72xf32>, vector<72x64xf32>, vector<64x64xf32> -> vector<64x64xf32>
    %37 = arith.addf %27, %36 : vector<64x64xf32>
    %c1_23 = arith.constant 1 : index
    %c0_24 = arith.constant 0 : index
    %c0_25 = arith.constant 0 : index
    %38 = vector.load %arg6[%c1_23, %c0_24, %c0_25] : memref<5x72x64xf32, #tpu.memory_space<vmem>>, vector<1x72x64xf32>
    %39 = vector.shape_cast %38 : vector<1x72x64xf32> to vector<72x64xf32>
    %cst_26 = arith.constant dense<0.000000e+00> : vector<64x64xf32>
    %40 = tpu.matmul %33, %39, %cst_26 {dimension_numbers = #tpu.dot_dimension_numbers<[1], [0], [0], [1], [0, 0, 1, 1], [], []>} : vector<64x72xf32>, vector<72x64xf32>, vector<64x64xf32> -> vector<64x64xf32>
    %41 = arith.addf %31, %40 : vector<64x64xf32>
    %42 = vector.extract_strided_slice %19 {offsets = [0, 2, 0], sizes = [8, 8, 72], strides = [1, 1, 1]} : vector<8x12x72xf32> to vector<8x8x72xf32>
    %43 = vector.shape_cast %42 : vector<8x8x72xf32> to vector<64x72xf32>
    %c2 = arith.constant 2 : index
    %c0_27 = arith.constant 0 : index
    %c0_28 = arith.constant 0 : index
    %44 = vector.load %arg5[%c2, %c0_27, %c0_28] : memref<5x72x64xf32, #tpu.memory_space<vmem>>, vector<1x72x64xf32>
    %45 = vector.shape_cast %44 : vector<1x72x64xf32> to vector<72x64xf32>
    %cst_29 = arith.constant dense<0.000000e+00> : vector<64x64xf32>
    %46 = tpu.matmul %43, %45, %cst_29 {dimension_numbers = #tpu.dot_dimension_numbers<[1], [0], [0], [1], [0, 0, 1, 1], [], []>} : vector<64x72xf32>, vector<72x64xf32>, vector<64x64xf32> -> vector<64x64xf32>
    %47 = arith.addf %37, %46 : vector<64x64xf32>
    %c2_30 = arith.constant 2 : index
    %c0_31 = arith.constant 0 : index
    %c0_32 = arith.constant 0 : index
    %48 = vector.load %arg6[%c2_30, %c0_31, %c0_32] : memref<5x72x64xf32, #tpu.memory_space<vmem>>, vector<1x72x64xf32>
    %49 = vector.shape_cast %48 : vector<1x72x64xf32> to vector<72x64xf32>
    %cst_33 = arith.constant dense<0.000000e+00> : vector<64x64xf32>
    %50 = tpu.matmul %43, %49, %cst_33 {dimension_numbers = #tpu.dot_dimension_numbers<[1], [0], [0], [1], [0, 0, 1, 1], [], []>} : vector<64x72xf32>, vector<72x64xf32>, vector<64x64xf32> -> vector<64x64xf32>
    %51 = arith.addf %41, %50 : vector<64x64xf32>
    %52 = vector.extract_strided_slice %19 {offsets = [0, 3, 0], sizes = [8, 8, 72], strides = [1, 1, 1]} : vector<8x12x72xf32> to vector<8x8x72xf32>
    %53 = vector.shape_cast %52 : vector<8x8x72xf32> to vector<64x72xf32>
    %c3 = arith.constant 3 : index
    %c0_34 = arith.constant 0 : index
    %c0_35 = arith.constant 0 : index
    %54 = vector.load %arg5[%c3, %c0_34, %c0_35] : memref<5x72x64xf32, #tpu.memory_space<vmem>>, vector<1x72x64xf32>
    %55 = vector.shape_cast %54 : vector<1x72x64xf32> to vector<72x64xf32>
    %cst_36 = arith.constant dense<0.000000e+00> : vector<64x64xf32>
    %56 = tpu.matmul %53, %55, %cst_36 {dimension_numbers = #tpu.dot_dimension_numbers<[1], [0], [0], [1], [0, 0, 1, 1], [], []>} : vector<64x72xf32>, vector<72x64xf32>, vector<64x64xf32> -> vector<64x64xf32>
    %57 = arith.addf %47, %56 : vector<64x64xf32>
    %c3_37 = arith.constant 3 : index
    %c0_38 = arith.constant 0 : index
    %c0_39 = arith.constant 0 : index
    %58 = vector.load %arg6[%c3_37, %c0_38, %c0_39] : memref<5x72x64xf32, #tpu.memory_space<vmem>>, vector<1x72x64xf32>
    %59 = vector.shape_cast %58 : vector<1x72x64xf32> to vector<72x64xf32>
    %cst_40 = arith.constant dense<0.000000e+00> : vector<64x64xf32>
    %60 = tpu.matmul %53, %59, %cst_40 {dimension_numbers = #tpu.dot_dimension_numbers<[1], [0], [0], [1], [0, 0, 1, 1], [], []>} : vector<64x72xf32>, vector<72x64xf32>, vector<64x64xf32> -> vector<64x64xf32>
    %61 = arith.addf %51, %60 : vector<64x64xf32>
    %62 = vector.extract_strided_slice %19 {offsets = [0, 4, 0], sizes = [8, 8, 72], strides = [1, 1, 1]} : vector<8x12x72xf32> to vector<8x8x72xf32>
    %63 = vector.shape_cast %62 : vector<8x8x72xf32> to vector<64x72xf32>
    %c4 = arith.constant 4 : index
    %c0_41 = arith.constant 0 : index
    %c0_42 = arith.constant 0 : index
    %64 = vector.load %arg5[%c4, %c0_41, %c0_42] : memref<5x72x64xf32, #tpu.memory_space<vmem>>, vector<1x72x64xf32>
    %65 = vector.shape_cast %64 : vector<1x72x64xf32> to vector<72x64xf32>
    %cst_43 = arith.constant dense<0.000000e+00> : vector<64x64xf32>
    %66 = tpu.matmul %63, %65, %cst_43 {dimension_numbers = #tpu.dot_dimension_numbers<[1], [0], [0], [1], [0, 0, 1, 1], [], []>} : vector<64x72xf32>, vector<72x64xf32>, vector<64x64xf32> -> vector<64x64xf32>
    %67 = arith.addf %57, %66 : vector<64x64xf32>
    %c4_44 = arith.constant 4 : index
    %c0_45 = arith.constant 0 : index
    %c0_46 = arith.constant 0 : index
    %68 = vector.load %arg6[%c4_44, %c0_45, %c0_46] : memref<5x72x64xf32, #tpu.memory_space<vmem>>, vector<1x72x64xf32>
    %69 = vector.shape_cast %68 : vector<1x72x64xf32> to vector<72x64xf32>
    %cst_47 = arith.constant dense<0.000000e+00> : vector<64x64xf32>
    %70 = tpu.matmul %63, %69, %cst_47 {dimension_numbers = #tpu.dot_dimension_numbers<[1], [0], [0], [1], [0, 0, 1, 1], [], []>} : vector<64x72xf32>, vector<72x64xf32>, vector<64x64xf32> -> vector<64x64xf32>
    %71 = arith.addf %61, %70 : vector<64x64xf32>
    %72 = arith.maximumf %67, %71 : vector<64x64xf32>
    %73 = vector.shape_cast %72 : vector<64x64xf32> to vector<32x2x64xf32>
    %74 = vector.extract_strided_slice %73 {offsets = [0, 0, 0], sizes = [32, 1, 64], strides = [1, 1, 1]} : vector<32x2x64xf32> to vector<32x1x64xf32>
    %75 = vector.shape_cast %74 : vector<32x1x64xf32> to vector<32x64xf32>
    %76 = vector.extract_strided_slice %73 {offsets = [0, 1, 0], sizes = [32, 1, 64], strides = [1, 1, 1]} : vector<32x2x64xf32> to vector<32x1x64xf32>
    %77 = vector.shape_cast %76 : vector<32x1x64xf32> to vector<32x64xf32>
    %78 = arith.maximumf %75, %77 : vector<32x64xf32>
    %79 = vector.shape_cast %78 : vector<32x64xf32> to vector<8x4x64xf32>
    %c0_48 = arith.constant 0 : index
    %c0_49 = arith.constant 0 : index
    %80 = vector.load %arg7[%c0_48, %c0_49] : memref<1x64xf32, #tpu.memory_space<vmem>>, vector<1x64xf32>
    %81 = vector.shape_cast %80 : vector<1x64xf32> to vector<1x1x64xf32>
    %82 = vector.broadcast %81 : vector<1x1x64xf32> to vector<8x4x64xf32>
    %83 = arith.addf %79, %82 : vector<8x4x64xf32>
    %cst_50 = arith.constant 0.000000e+00 : f32
    %84 = vector.broadcast %cst_50 : f32 to vector<8x4x64xf32>
    %85 = arith.maximumf %83, %84 : vector<8x4x64xf32>
    %86 = vector.extract_strided_slice %85 {offsets = [0, 0, 0], sizes = [8, 1, 64], strides = [1, 1, 1]} : vector<8x4x64xf32> to vector<8x1x64xf32>
    %87 = vector.shape_cast %86 : vector<8x1x64xf32> to vector<8x64xf32>
    %c0_51 = arith.constant 0 : index
    %c0_52 = arith.constant 0 : index
    %c0_53 = arith.constant 0 : index
    %88 = vector.load %arg8[%c0_51, %c0_52, %c0_53] : memref<4x64x128xf32, #tpu.memory_space<vmem>>, vector<1x64x128xf32>
    %89 = vector.shape_cast %88 : vector<1x64x128xf32> to vector<64x128xf32>
    %cst_54 = arith.constant dense<0.000000e+00> : vector<8x128xf32>
    %90 = tpu.matmul %87, %89, %cst_54 {dimension_numbers = #tpu.dot_dimension_numbers<[1], [0], [0], [1], [0, 0, 1, 1], [], []>} : vector<8x64xf32>, vector<64x128xf32>, vector<8x128xf32> -> vector<8x128xf32>
    %91 = vector.extract_strided_slice %85 {offsets = [0, 1, 0], sizes = [8, 1, 64], strides = [1, 1, 1]} : vector<8x4x64xf32> to vector<8x1x64xf32>
    %92 = vector.shape_cast %91 : vector<8x1x64xf32> to vector<8x64xf32>
    %c1_55 = arith.constant 1 : index
    %c0_56 = arith.constant 0 : index
    %c0_57 = arith.constant 0 : index
    %93 = vector.load %arg8[%c1_55, %c0_56, %c0_57] : memref<4x64x128xf32, #tpu.memory_space<vmem>>, vector<1x64x128xf32>
    %94 = vector.shape_cast %93 : vector<1x64x128xf32> to vector<64x128xf32>
    %cst_58 = arith.constant dense<0.000000e+00> : vector<8x128xf32>
    %95 = tpu.matmul %92, %94, %cst_58 {dimension_numbers = #tpu.dot_dimension_numbers<[1], [0], [0], [1], [0, 0, 1, 1], [], []>} : vector<8x64xf32>, vector<64x128xf32>, vector<8x128xf32> -> vector<8x128xf32>
    %96 = arith.addf %90, %95 : vector<8x128xf32>
    %97 = vector.extract_strided_slice %85 {offsets = [0, 2, 0], sizes = [8, 1, 64], strides = [1, 1, 1]} : vector<8x4x64xf32> to vector<8x1x64xf32>
    %98 = vector.shape_cast %97 : vector<8x1x64xf32> to vector<8x64xf32>
    %c2_59 = arith.constant 2 : index
    %c0_60 = arith.constant 0 : index
    %c0_61 = arith.constant 0 : index
    %99 = vector.load %arg8[%c2_59, %c0_60, %c0_61] : memref<4x64x128xf32, #tpu.memory_space<vmem>>, vector<1x64x128xf32>
    %100 = vector.shape_cast %99 : vector<1x64x128xf32> to vector<64x128xf32>
    %cst_62 = arith.constant dense<0.000000e+00> : vector<8x128xf32>
    %101 = tpu.matmul %98, %100, %cst_62 {dimension_numbers = #tpu.dot_dimension_numbers<[1], [0], [0], [1], [0, 0, 1, 1], [], []>} : vector<8x64xf32>, vector<64x128xf32>, vector<8x128xf32> -> vector<8x128xf32>
    %102 = arith.addf %96, %101 : vector<8x128xf32>
    %103 = vector.extract_strided_slice %85 {offsets = [0, 3, 0], sizes = [8, 1, 64], strides = [1, 1, 1]} : vector<8x4x64xf32> to vector<8x1x64xf32>
    %104 = vector.shape_cast %103 : vector<8x1x64xf32> to vector<8x64xf32>
    %c3_63 = arith.constant 3 : index
    %c0_64 = arith.constant 0 : index
    %c0_65 = arith.constant 0 : index
    %105 = vector.load %arg8[%c3_63, %c0_64, %c0_65] : memref<4x64x128xf32, #tpu.memory_space<vmem>>, vector<1x64x128xf32>
    %106 = vector.shape_cast %105 : vector<1x64x128xf32> to vector<64x128xf32>
    %cst_66 = arith.constant dense<0.000000e+00> : vector<8x128xf32>
    %107 = tpu.matmul %104, %106, %cst_66 {dimension_numbers = #tpu.dot_dimension_numbers<[1], [0], [0], [1], [0, 0, 1, 1], [], []>} : vector<8x64xf32>, vector<64x128xf32>, vector<8x128xf32> -> vector<8x128xf32>
    %108 = arith.addf %102, %107 : vector<8x128xf32>
    %c0_67 = arith.constant 0 : index
    %c0_68 = arith.constant 0 : index
    %109 = vector.load %arg9[%c0_67, %c0_68] : memref<1x128xf32, #tpu.memory_space<vmem>>, vector<1x128xf32>
    %110 = vector.broadcast %109 : vector<1x128xf32> to vector<8x128xf32>
    %111 = arith.addf %108, %110 : vector<8x128xf32>
    %cst_69 = arith.constant 0.000000e+00 : f32
    %112 = vector.broadcast %cst_69 : f32 to vector<8x128xf32>
    %113 = arith.maximumf %111, %112 : vector<8x128xf32>
    %c0_70 = arith.constant 0 : index
    %c0_71 = arith.constant 0 : index
    %114 = vector.load %arg10[%c0_70, %c0_71] : memref<128x128xf32, #tpu.memory_space<vmem>>, vector<128x128xf32>
    %cst_72 = arith.constant dense<0.000000e+00> : vector<8x128xf32>
    %115 = tpu.matmul %113, %114, %cst_72 {dimension_numbers = #tpu.dot_dimension_numbers<[1], [0], [0], [1], [0, 0, 1, 1], [], []>} : vector<8x128xf32>, vector<128x128xf32>, vector<8x128xf32> -> vector<8x128xf32>
    %c0_73 = arith.constant 0 : index
    %c0_74 = arith.constant 0 : index
    %116 = vector.load %arg11[%c0_73, %c0_74] : memref<1x128xf32, #tpu.memory_space<vmem>>, vector<1x128xf32>
    %117 = vector.broadcast %116 : vector<1x128xf32> to vector<8x128xf32>
    %118 = arith.addf %115, %117 : vector<8x128xf32>
    %cst_75 = arith.constant 0.000000e+00 : f32
    %119 = vector.broadcast %cst_75 : f32 to vector<8x128xf32>
    %120 = arith.maximumf %118, %119 : vector<8x128xf32>
    %c0_76 = arith.constant 0 : index
    %c0_77 = arith.constant 0 : index
    %121 = vector.load %arg12[%c0_76, %c0_77] : memref<128x128xf32, #tpu.memory_space<vmem>>, vector<128x128xf32>
    %cst_78 = arith.constant dense<0.000000e+00> : vector<8x128xf32>
    %122 = tpu.matmul %120, %121, %cst_78 {dimension_numbers = #tpu.dot_dimension_numbers<[1], [0], [0], [1], [0, 0, 1, 1], [], []>} : vector<8x128xf32>, vector<128x128xf32>, vector<8x128xf32> -> vector<8x128xf32>
    %c0_79 = arith.constant 0 : index
    %c0_80 = arith.constant 0 : index
    %123 = vector.load %arg13[%c0_79, %c0_80] : memref<1x128xf32, #tpu.memory_space<vmem>>, vector<1x128xf32>
    %124 = vector.broadcast %123 : vector<1x128xf32> to vector<8x128xf32>
    %125 = arith.addf %122, %124 : vector<8x128xf32>
    %c0_81 = arith.constant 0 : index
    %c0_82 = arith.constant 0 : index
    %126 = vector.load %arg14[%c0_81, %c0_82] : memref<8x128xf32, #tpu.memory_space<vmem>>, vector<8x128xf32>
    tpu.vector_store %arg14[%c0_81, %c0_82], %125 {strides = array<i32>} : memref<8x128xf32, #tpu.memory_space<vmem>>, vector<8x128xf32>,
    return
  }
  func.func @transform_0(%arg0: i32) -> (i32, i32, i32) {
    %c0_i32 = arith.constant 0 : i32
    %c0_i32_0 = arith.constant 0 : i32
    %c0_i32_1 = arith.constant 0 : i32
    return %arg0, %c0_i32, %c0_i32_0 : i32, i32, i32
  }
  func.func @transform_1(%arg0: i32) -> (i32, i32) {
    %c0_i32 = arith.constant 0 : i32
    %c0_i32_0 = arith.constant 0 : i32
    %c0_i32_1 = arith.constant 0 : i32
    return %c0_i32, %c0_i32_0 : i32, i32
  }
  func.func @transform_2(%arg0: i32) -> (i32, i32) {
    %c0_i32 = arith.constant 0 : i32
    %c0_i32_0 = arith.constant 0 : i32
    %c0_i32_1 = arith.constant 0 : i32
    return %c0_i32, %c0_i32_0 : i32, i32
  }
  func.func @transform_3(%arg0: i32) -> (i32, i32) {
    %c0_i32 = arith.constant 0 : i32
    %c0_i32_0 = arith.constant 0 : i32
    %c0_i32_1 = arith.constant 0 : i32
    return %c0_i32, %c0_i32_0 : i32, i32
  }
  func.func @transform_4(%arg0: i32) -> (i32, i32, i32) {
    %c0_i32 = arith.constant 0 : i32
    %c0_i32_0 = arith.constant 0 : i32
    %c0_i32_1 = arith.constant 0 : i32
    %c0_i32_2 = arith.constant 0 : i32
    return %c0_i32, %c0_i32_0, %c0_i32_1 : i32, i32, i32
  }
  func.func @transform_5(%arg0: i32) -> (i32, i32, i32) {
    %c0_i32 = arith.constant 0 : i32
    %c0_i32_0 = arith.constant 0 : i32
    %c0_i32_1 = arith.constant 0 : i32
    %c0_i32_2 = arith.constant 0 : i32
    return %c0_i32, %c0_i32_0, %c0_i32_1 : i32, i32, i32
  }
  func.func @transform_6(%arg0: i32) -> (i32, i32) {
    %c0_i32 = arith.constant 0 : i32
    %c0_i32_0 = arith.constant 0 : i32
    %c0_i32_1 = arith.constant 0 : i32
    return %c0_i32, %c0_i32_0 : i32, i32
  }
  func.func @transform_7(%arg0: i32) -> (i32, i32, i32) {
    %c0_i32 = arith.constant 0 : i32
    %c0_i32_0 = arith.constant 0 : i32
    %c0_i32_1 = arith.constant 0 : i32
    %c0_i32_2 = arith.constant 0 : i32
    return %c0_i32, %c0_i32_0, %c0_i32_1 : i32, i32, i32
  }
  func.func @transform_8(%arg0: i32) -> (i32, i32) {
    %c0_i32 = arith.constant 0 : i32
    %c0_i32_0 = arith.constant 0 : i32
    %c0_i32_1 = arith.constant 0 : i32
    return %c0_i32, %c0_i32_0 : i32, i32
  }
  func.func @transform_9(%arg0: i32) -> (i32, i32) {
    %c0_i32 = arith.constant 0 : i32
    %c0_i32_0 = arith.constant 0 : i32
    %c0_i32_1 = arith.constant 0 : i32
    return %c0_i32, %c0_i32_0 : i32, i32
  }
  func.func @transform_10(%arg0: i32) -> (i32, i32) {
    %c0_i32 = arith.constant 0 : i32
    %c0_i32_0 = arith.constant 0 : i32
    %c0_i32_1 = arith.constant 0 : i32
    return %c0_i32, %c0_i32_0 : i32, i32
  }
  func.func @transform_11(%arg0: i32) -> (i32, i32) {
    %c0_i32 = arith.constant 0 : i32
    %c0_i32_0 = arith.constant 0 : i32
    %c0_i32_1 = arith.constant 0 : i32
    return %c0_i32, %c0_i32_0 : i32, i32
  }
  func.func @transform_12(%arg0: i32) -> (i32, i32) {
    %c0_i32 = arith.constant 0 : i32
    %c0_i32_0 = arith.constant 0 : i32
    %c0_i32_1 = arith.constant 0 : i32
    return %c0_i32, %c0_i32_0 : i32, i32
  }
  func.func @transform_13(%arg0: i32) -> (i32, i32) {
    %c0_i32 = arith.constant 0 : i32
    %c0_i32_0 = arith.constant 0 : i32
    return %arg0, %c0_i32 : i32, i32
  }
}

</mosaic_0001>

<llo_original>
// kernel: net_forward.1
$region0: #{net_forward.1}
  #allocation0 [shape = 'u32[]', space=smem, size = 0x4, offset = 0x4, fixed_abs, tag = 'smem constant byte address 0x4 - core index']
  #allocation1 [shape = 'u32[144,128]{1,0:T(1,128)}', space=vmem, size = 0x12000, scoped, tag = 'internal scratch']
  %s0 = inlined_call_operand.vmem [shape: f32[8,24,140], index: 0, kind: input, shape index: {}]
  %s1 = inlined_call_operand.vmem [shape: f32[140,72], index: 1, kind: input, shape index: {}]
  %s2 = inlined_call_operand.vmem [shape: f32[140,72], index: 2, kind: input, shape index: {}]
  %s3 = inlined_call_operand.vmem [shape: f32[1,72], index: 3, kind: input, shape index: {}]
  %s4 = inlined_call_operand.vmem [shape: f32[5,72,64], index: 4, kind: input, shape index: {}]
  %s5 = inlined_call_operand.vmem [shape: f32[5,72,64], index: 5, kind: input, shape index: {}]
  %s6 = inlined_call_operand.vmem [shape: f32[1,64], index: 6, kind: input, shape index: {}]
  %s7 = inlined_call_operand.vmem [shape: f32[4,64,128], index: 7, kind: input, shape index: {}]
  %s8 = inlined_call_operand.vmem [shape: f32[1,128], index: 8, kind: input, shape index: {}]
  %s9 = inlined_call_operand.vmem [shape: f32[128,128], index: 9, kind: input, shape index: {}]
  %s10 = inlined_call_operand.vmem [shape: f32[1,128], index: 10, kind: input, shape index: {}]
  %s11 = inlined_call_operand.vmem [shape: f32[128,128], index: 11, kind: input, shape index: {}]
  %s12 = inlined_call_operand.vmem [shape: f32[1,128], index: 12, kind: input, shape index: {}]
  %s13 = inlined_call_operand.vmem [shape: f32[8,128], index: 13, kind: output, shape index: {}]
  %s14 = sld [smem:[#allocation0]]
  $region62: #{net_forward.1} parent=0
    _
  %s16 = ssub.s32 1, %s14
  %s17 = scalar_select 0, %s16, %s14
  // Predicated region
  $region2: #{net_forward.1} parent=0 // pred_check
    _
  $region3: #{net_forward.1} parent=0 // pred_check_branch
    %19 = sbr.rel (0) target = $region5
  $region4: #{net_forward.1} parent=0 // pred_region
    _
  $region5: #{net_forward.1} parent=0 // pred_fallthru
    _
  // Predicated region
  $region6: #{net_forward.1} parent=0 // pred_check
    _
  $region7: #{net_forward.1} parent=0 // pred_check_branch
    %21 = sbr.rel (0) target = $region9
  $region8: #{net_forward.1} parent=0 // pred_region
    _
  $region9: #{net_forward.1} parent=0 // pred_fallthru
    _
  // Predicated region
  $region10: #{net_forward.1} parent=0 // pred_check
    _
  $region11: #{net_forward.1} parent=0 // pred_check_branch
    %23 = sbr.rel (0) target = $region13
  $region12: #{net_forward.1} parent=0 // pred_region
    _
  $region13: #{net_forward.1} parent=0 // pred_fallthru
    _
  // Predicated region
  $region14: #{net_forward.1} parent=0 // pred_check
    _
  $region15: #{net_forward.1} parent=0 // pred_check_branch
    %25 = sbr.rel (0) target = $region17
  $region16: #{net_forward.1} parent=0 // pred_region
    _
  $region17: #{net_forward.1} parent=0 // pred_fallthru
    _
  // Predicated region
  $region18: #{net_forward.1} parent=0 // pred_check
    _
  $region19: #{net_forward.1} parent=0 // pred_check_branch
    %27 = sbr.rel (0) target = $region21
  $region20: #{net_forward.1} parent=0 // pred_region
    _
  $region21: #{net_forward.1} parent=0 // pred_fallthru
    _
  // Predicated region
  $region22: #{net_forward.1} parent=0 // pred_check
    _
  $region23: #{net_forward.1} parent=0 // pred_check_branch
    %29 = sbr.rel (0) target = $region25
  $region24: #{net_forward.1} parent=0 // pred_region
    _
  $region25: #{net_forward.1} parent=0 // pred_fallthru
    _
  // Predicated region
  $region26: #{net_forward.1} parent=0 // pred_check
    _
  $region27: #{net_forward.1} parent=0 // pred_check_branch
    %31 = sbr.rel (0) target = $region29
  $region28: #{net_forward.1} parent=0 // pred_region
    _
  $region29: #{net_forward.1} parent=0 // pred_fallthru
    _
  // Predicated region
  $region30: #{net_forward.1} parent=0 // pred_check
    _
  $region31: #{net_forward.1} parent=0 // pred_check_branch
    %33 = sbr.rel (0) target = $region33
  $region32: #{net_forward.1} parent=0 // pred_region
    _
  $region33: #{net_forward.1} parent=0 // pred_fallthru
    _
  // Predicated region
  $region34: #{net_forward.1} parent=0 // pred_check
    _
  $region35: #{net_forward.1} parent=0 // pred_check_branch
    %35 = sbr.rel (0) target = $region37
  $region36: #{net_forward.1} parent=0 // pred_region
    _
  $region37: #{net_forward.1} parent=0 // pred_fallthru
    _
  // Predicated region
  $region38: #{net_forward.1} parent=0 // pred_check
    _
  $region39: #{net_forward.1} parent=0 // pred_check_branch
    %37 = sbr.rel (0) target = $region41
  $region40: #{net_forward.1} parent=0 // pred_region
    _
  $region41: #{net_forward.1} parent=0 // pred_fallthru
    _
  // Predicated region
  $region42: #{net_forward.1} parent=0 // pred_check
    _
  $region43: #{net_forward.1} parent=0 // pred_check_branch
    %39 = sbr.rel (0) target = $region45
  $region44: #{net_forward.1} parent=0 // pred_region
    _
  $region45: #{net_forward.1} parent=0 // pred_fallthru
    _
  // Predicated region
  $region46: #{net_forward.1} parent=0 // pred_check
    _
  $region47: #{net_forward.1} parent=0 // pred_check_branch
    %41 = sbr.rel (0) target = $region49
  $region48: #{net_forward.1} parent=0 // pred_region
    _
  $region49: #{net_forward.1} parent=0 // pred_fallthru
    _
  // Predicated region
  $region50: #{net_forward.1} parent=0 // pred_check
    _
  $region51: #{net_forward.1} parent=0 // pred_check_branch
    %43 = sbr.rel (0) target = $region53
  $region52: #{net_forward.1} parent=0 // pred_region
    _
  $region53: #{net_forward.1} parent=0 // pred_fallthru
    _
  %v44 = vld [vmem:[%s0] sm:$0xff]
  %v45 = vld [vmem:[%s0 + $0x8] sm:$0xff]
  %v46 = vld [vmem:[%s0 + $0x10] sm:$0xff]
  %v47 = vld [vmem:[%s0 + $0x18] sm:$0xff]
  %v48 = vld [vmem:[%s0 + $0x20] sm:$0xff]
  %v49 = vld [vmem:[%s0 + $0x28] sm:$0xff]
  %v50 = vld [vmem:[%s0 + $0x30] sm:$0xff]
  %v51 = vld [vmem:[%s0 + $0x38] sm:$0xff]
  %v52 = vld [vmem:[%s0 + $0x40] sm:$0xff]
  %v53 = vld [vmem:[%s0 + $0x48] sm:$0xff]
  %v54 = vld [vmem:[%s0 + $0x50] sm:$0xff]
  %v55 = vld [vmem:[%s0 + $0x58] sm:$0xff]
  %v56 = vld [vmem:[%s0 + $0x60] sm:$0xff]
  %v57 = vld [vmem:[%s0 + $0x68] sm:$0xff]
  %v58 = vld [vmem:[%s0 + $0x70] sm:$0xff]
  %v59 = vld [vmem:[%s0 + $0x78] sm:$0xff]
  %v60 = vld [vmem:[%s0 + $0x80] sm:$0xff]
  %v61 = vld [vmem:[%s0 + $0x88] sm:$0xff]
  %v62 = vld [vmem:[%s0 + $0x90] sm:$0xff]
  %v63 = vld [vmem:[%s0 + $0x98] sm:$0xff]
  %v64 = vld [vmem:[%s0 + $0xa0] sm:$0xff]
  %v65 = vld [vmem:[%s0 + $0xa8] sm:$0xff]
  %v66 = vld [vmem:[%s0 + $0xb0] sm:$0xff]
  %v67 = vld [vmem:[%s0 + $0xb8] sm:$0xff]
  %v68 = vld [vmem:[%s0 + $0xc0] sm:$0xff]
  %v69 = vld [vmem:[%s0 + $0xc8] sm:$0xff]
  %v70 = vld [vmem:[%s0 + $0xd0] sm:$0xff]
  %v71 = vld [vmem:[%s0 + $0xd8] sm:$0xff]
  %v72 = vld [vmem:[%s0 + $0xe0] sm:$0xff]
  %v73 = vld [vmem:[%s0 + $0xe8] sm:$0xff]
  %v74 = vld [vmem:[%s0 + $0xf0] sm:$0xff]
  %v75 = vld [vmem:[%s0 + $0xf8] sm:$0xff]
  %v76 = vld [vmem:[%s0 + $0x100] sm:$0xff]
  %v77 = vld [vmem:[%s0 + $0x108] sm:$0xff]
  %v78 = vld [vmem:[%s0 + $0x110] sm:$0xff]
  %v79 = vld [vmem:[%s0 + $0x118] sm:$0xff]
  %v80 = vld [vmem:[%s0 + $0x120] sm:$0xff]
  %v81 = vld [vmem:[%s0 + $0x128] sm:$0xff]
  %v82 = vld [vmem:[%s0 + $0x130] sm:$0xff]
  %v83 = vld [vmem:[%s0 + $0x138] sm:$0xff]
  %v84 = vld [vmem:[%s0 + $0x140] sm:$0xff]
  %v85 = vld [vmem:[%s0 + $0x148] sm:$0xff]
  %v86 = vld [vmem:[%s0 + $0x150] sm:$0xff]
  %v87 = vld [vmem:[%s0 + $0x158] sm:$0xff]
  %v88 = vld [vmem:[%s0 + $0x160] sm:$0xff]
  %v89 = vld [vmem:[%s0 + $0x168] sm:$0xff]
  %v90 = vld [vmem:[%s0 + $0x170] sm:$0xff]
  %v91 = vld [vmem:[%s0 + $0x178] sm:$0xff]
  %v92 = vld [vmem:[%s1] sm:$0xff]
  %v93 = vld [vmem:[%s1 + $0x8] sm:$0xff]
  %v94 = vld [vmem:[%s1 + $0x10] sm:$0xff]
  %v95 = vld [vmem:[%s1 + $0x18] sm:$0xff]
  %v96 = vld [vmem:[%s1 + $0x20] sm:$0xff]
  %v97 = vld [vmem:[%s1 + $0x28] sm:$0xff]
  %v98 = vld [vmem:[%s1 + $0x30] sm:$0xff]
  %v99 = vld [vmem:[%s1 + $0x38] sm:$0xff]
  %v100 = vld [vmem:[%s1 + $0x40] sm:$0xff]
  %v101 = vld [vmem:[%s1 + $0x48] sm:$0xff]
  %v102 = vld [vmem:[%s1 + $0x50] sm:$0xff]
  %v103 = vld [vmem:[%s1 + $0x58] sm:$0xff]
  %v104 = vld [vmem:[%s1 + $0x60] sm:$0xff]
  %v105 = vld [vmem:[%s1 + $0x68] sm:$0xff]
  %v106 = vld [vmem:[%s1 + $0x70] sm:$0xff]
  %v107 = vld [vmem:[%s1 + $0x78] sm:$0xff]
  %v108 = vld [vmem:[%s1 + $0x80] sm:$0xff]
  %v109 = vld [vmem:[%s1 + $0x88] sm:$0xf]
  %vm110 = vcmask 97280
  %v112 = vsel %vm110, %v45, 0
  %v115 = vsel %vm110, %v47, 0
  %v118 = vsel %vm110, %v49, 0
  %v121 = vsel %vm110, %v51, 0
  %v124 = vsel %vm110, %v53, 0
  %v127 = vsel %vm110, %v55, 0
  %v130 = vsel %vm110, %v57, 0
  %v133 = vsel %vm110, %v59, 0
  %v136 = vsel %vm110, %v61, 0
  %v139 = vsel %vm110, %v63, 0
  %v142 = vsel %vm110, %v65, 0
  %v145 = vsel %vm110, %v67, 0
  %v148 = vsel %vm110, %v69, 0
  %v151 = vsel %vm110, %v71, 0
  %v154 = vsel %vm110, %v73, 0
  %v157 = vsel %vm110, %v75, 0
  %v160 = vsel %vm110, %v77, 0
  %v163 = vsel %vm110, %v79, 0
  %v166 = vsel %vm110, %v81, 0
  %v169 = vsel %vm110, %v83, 0
  %v172 = vsel %vm110, %v85, 0
  %v175 = vsel %vm110, %v87, 0
  %v178 = vsel %vm110, %v89, 0
  %v181 = vsel %vm110, %v91, 0
  %vm183 = vcmask 1043456
  %v185 = vsel %vm183, %v109, 0
  %187 = vmatprep.subr.mxu0 0.0
  %188 = vmatpush1.msra.mxu0 %v92
  %189 = vmatprep.subr.mxu0 0.0
  %190 = vmatpush1.msra.mxu0 %v93
  %191 = vmatprep.subr.mxu0 0.0
  %192 = vmatpush1.msra.mxu0 %v94
  %193 = vmatprep.subr.mxu0 0.0
  %194 = vmatpush1.msra.mxu0 %v95
  %195 = vmatprep.subr.mxu0 0.0
  %196 = vmatpush1.msra.mxu0 %v96
  %197 = vmatprep.subr.mxu0 0.0
  %198 = vmatpush1.msra.mxu0 %v97
  %199 = vmatprep.subr.mxu0 0.0
  %200 = vmatpush1.msra.mxu0 %v98
  %201 = vmatprep.subr.mxu0 0.0
  %202 = vmatpush1.msra.mxu0 %v99
  %203 = vmatprep.subr.mxu0 0.0
  %204 = vmatpush1.msra.mxu0 %v100
  %205 = vmatprep.subr.mxu0 0.0
  %206 = vmatpush1.msra.mxu0 %v101
  %207 = vmatprep.subr.mxu0 0.0
  %208 = vmatpush1.msra.mxu0 %v102
  %209 = vmatprep.subr.mxu0 0.0
  %210 = vmatpush1.msra.mxu0 %v103
  %211 = vmatprep.subr.mxu0 0.0
  %212 = vmatpush1.msra.mxu0 %v104
  %213 = vmatprep.subr.mxu0 0.0
  %214 = vmatpush1.msra.mxu0 %v105
  %215 = vmatprep.subr.mxu0 0.0
  %216 = vmatpush1.msra.mxu0 %v106
  %217 = vmatprep.subr.mxu0 0.0
  %218 = vmatpush1.msra.mxu0 %v107
  %219 = vmatprep.subr.mxu0 0.0
  %220 = vmatpush1.msra.mxu0 %v108
  %221 = vmatprep.subr.mxu0 0.0
  %222 = vmatpush1.msra.mxu0 %v185
  %223 = vmatprep.subr.mxu0 0.0
  %224 = vmatpush1.msra.mxu0 0.0
  %225 = vmatprep.subr.mxu0 0.0
  %226 = vmatpush1.msra.mxu0 0.0
  %227 = vmatprep.subr.mxu0 0.0
  %228 = vmatpush1.msra.mxu0 0.0
  %229 = vmatprep.subr.mxu0 0.0
  %230 = vmatpush1.msra.mxu0 0.0
  %231 = vmatprep.subr.mxu0 0.0
  %232 = vmatpush1.msra.mxu0 0.0
  %233 = vmatprep.subr.mxu0 0.0
  %234 = vmatpush1.msra.mxu0 0.0
  %235 = vmatprep.subr.mxu0 0.0
  %236 = vmatpush1.msra.mxu0 0.0
  %237 = vmatprep.subr.mxu0 0.0
  %238 = vmatpush1.msra.mxu0 0.0
  %239 = vmatprep.subr.mxu0 0.0
  %240 = vmatpush1.msra.mxu0 0.0
  %241 = vmatprep.subr.mxu0 0.0
  %242 = vmatpush1.msra.mxu0 0.0
  %243 = vmatprep.subr.mxu0 0.0
  %244 = vmatpush1.msra.mxu0 0.0
  %245 = vmatprep.subr.mxu0 0.0
  %246 = vmatpush1.msra.mxu0 0.0
  %247 = vmatprep.subr.mxu0 0.0
  %248 = vmatpush1.msra.mxu0 0.0
  %249 = vmatprep.subr.mxu0 0.0
  %250 = vmatpush1.msra.mxu0 0.0
  %251 = vmatprep.mubr.f32.mxu0 %v112
  %252 = vmatmul.mubr.f32.gmra.mrb[0].mxu0 %v44
  %v253 = vpop.f32.mrb[0].mxu0
  %v254 = vadd.f32 0.0, %v253
  %v255 = vpop.f32.mrb[0].mxu0
  %256 = vmatprep.mubr.f32.mxu0 %v115
  %257 = vmatmul.mubr.f32.gmra.mrb[0].mxu0 %v46
  %v258 = vpop.f32.mrb[0].mxu0
  %v259 = vadd.f32 0.0, %v258
  %v260 = vpop.f32.mrb[0].mxu0
  %261 = vmatprep.mubr.f32.mxu0 %v118
  %262 = vmatmul.mubr.f32.gmra.mrb[0].mxu0 %v48
  %v263 = vpop.f32.mrb[0].mxu0
  %v264 = vadd.f32 0.0, %v263
  %v265 = vpop.f32.mrb[0].mxu0
  %266 = vmatprep.mubr.f32.mxu0 %v121
  %267 = vmatmul.mubr.f32.gmra.mrb[0].mxu0 %v50
  %v268 = vpop.f32.mrb[0].mxu0
  %v269 = vadd.f32 0.0, %v268
  %v270 = vpop.f32.mrb[0].mxu0
  %271 = vmatprep.mubr.f32.mxu0 %v124
  %272 = vmatmul.mubr.f32.gmra.mrb[0].mxu0 %v52
  %v273 = vpop.f32.mrb[0].mxu0
  %v274 = vadd.f32 0.0, %v273
  %v275 = vpop.f32.mrb[0].mxu0
  %276 = vmatprep.mubr.f32.mxu0 %v127
  %277 = vmatmul.mubr.f32.gmra.mrb[0].mxu0 %v54
  %v278 = vpop.f32.mrb[0].mxu0
  %v279 = vadd.f32 0.0, %v278
  %v280 = vpop.f32.mrb[0].mxu0
  %281 = vmatprep.mubr.f32.mxu0 %v130
  %282 = vmatmul.mubr.f32.gmra.mrb[0].mxu0 %v56
  %v283 = vpop.f32.mrb[0].mxu0
  %v284 = vadd.f32 0.0, %v283
  %v285 = vpop.f32.mrb[0].mxu0
  %286 = vmatprep.mubr.f32.mxu0 %v133
  %287 = vmatmul.mubr.f32.gmra.mrb[0].mxu0 %v58
  %v288 = vpop.f32.mrb[0].mxu0
  %v289 = vadd.f32 0.0, %v288
  %v290 = vpop.f32.mrb[0].mxu0
  %291 = vmatprep.mubr.f32.mxu0 %v136
  %292 = vmatmul.mubr.f32.gmra.mrb[0].mxu0 %v60
  %v293 = vpop.f32.mrb[0].mxu0
  %v294 = vadd.f32 0.0, %v293
  %v295 = vpop.f32.mrb[0].mxu0
  %296 = vmatprep.mubr.f32.mxu0 %v139
  %297 = vmatmul.mubr.f32.gmra.mrb[0].mxu0 %v62
  %v298 = vpop.f32.mrb[0].mxu0
  %v299 = vadd.f32 0.0, %v298
  %v300 = vpop.f32.mrb[0].mxu0
  %301 = vmatprep.mubr.f32.mxu0 %v142
  %302 = vmatmul.mubr.f32.gmra.mrb[0].mxu0 %v64
  %v303 = vpop.f32.mrb[0].mxu0
  %v304 = vadd.f32 0.0, %v303
  %v305 = vpop.f32.mrb[0].mxu0
  %306 = vmatprep.mubr.f32.mxu0 %v145
  %307 = vmatmul.mubr.f32.gmra.mrb[0].mxu0 %v66
  %v308 = vpop.f32.mrb[0].mxu0
  %v309 = vadd.f32 0.0, %v308
  %v310 = vpop.f32.mrb[0].mxu0
  %311 = vmatprep.mubr.f32.mxu0 %v148
  %312 = vmatmul.mubr.f32.gmra.mrb[0].mxu0 %v68
  %v313 = vpop.f32.mrb[0].mxu0
  %v314 = vadd.f32 0.0, %v313
  %v315 = vpop.f32.mrb[0].mxu0
  %316 = vmatprep.mubr.f32.mxu0 %v151
  %317 = vmatmul.mubr.f32.gmra.mrb[0].mxu0 %v70
  %v318 = vpop.f32.mrb[0].mxu0
  %v319 = vadd.f32 0.0, %v318
  %v320 = vpop.f32.mrb[0].mxu0
  %321 = vmatprep.mubr.f32.mxu0 %v154
  %322 = vmatmul.mubr.f32.gmra.mrb[0].mxu0 %v72
  %v323 = vpop.f32.mrb[0].mxu0
  %v324 = vadd.f32 0.0, %v323
  %v325 = vpop.f32.mrb[0].mxu0
  %326 = vmatprep.mubr.f32.mxu0 %v157
  %327 = vmatmul.mubr.f32.gmra.mrb[0].mxu0 %v74
  %v328 = vpop.f32.mrb[0].mxu0
  %v329 = vadd.f32 0.0, %v328
  %v330 = vpop.f32.mrb[0].mxu0
  %331 = vmatprep.mubr.f32.mxu0 %v160
  %332 = vmatmul.mubr.f32.gmra.mrb[0].mxu0 %v76
  %v333 = vpop.f32.mrb[0].mxu0
  %v334 = vadd.f32 0.0, %v333
  %v335 = vpop.f32.mrb[0].mxu0
  %336 = vmatprep.mubr.f32.mxu0 %v163
  %337 = vmatmul.mubr.f32.gmra.mrb[0].mxu0 %v78
  %v338 = vpop.f32.mrb[0].mxu0
  %v339 = vadd.f32 0.0, %v338
  %v340 = vpop.f32.mrb[0].mxu0
  %341 = vmatprep.mubr.f32.mxu0 %v166
  %342 = vmatmul.mubr.f32.gmra.mrb[0].mxu0 %v80
  %v343 = vpop.f32.mrb[0].mxu0
  %v344 = vadd.f32 0.0, %v343
  %v345 = vpop.f32.mrb[0].mxu0
  %346 = vmatprep.mubr.f32.mxu0 %v169
  %347 = vmatmul.mubr.f32.gmra.mrb[0].mxu0 %v82
  %v348 = vpop.f32.mrb[0].mxu0
  %v349 = vadd.f32 0.0, %v348
  %v350 = vpop.f32.mrb[0].mxu0
  %351 = vmatprep.mubr.f32.mxu0 %v172
  %352 = vmatmul.mubr.f32.gmra.mrb[0].mxu0 %v84
  %v353 = vpop.f32.mrb[0].mxu0
  %v354 = vadd.f32 0.0, %v353
  %v355 = vpop.f32.mrb[0].mxu0
  %356 = vmatprep.mubr.f32.mxu0 %v175
  %357 = vmatmul.mubr.f32.gmra.mrb[0].mxu0 %v86
  %v358 = vpop.f32.mrb[0].mxu0
  %v359 = vadd.f32 0.0, %v358
  %v360 = vpop.f32.mrb[0].mxu0
  %361 = vmatprep.mubr.f32.mxu0 %v178
  %362 = vmatmul.mubr.f32.gmra.mrb[0].mxu0 %v88
  %v363 = vpop.f32.mrb[0].mxu0
  %v364 = vadd.f32 0.0, %v363
  %v365 = vpop.f32.mrb[0].mxu0
  %366 = vmatprep.mubr.f32.mxu0 %v181
  %367 = vmatmul.mubr.f32.gmra.mrb[0].mxu0 %v90
  %v368 = vpop.f32.mrb[0].mxu0
  %v369 = vadd.f32 0.0, %v368
  %v370 = vpop.f32.mrb[0].mxu0
  %371 = vdwg.mxu0
  %v372 = vld [vmem:[%s2] sm:$0xff]
  %v373 = vld [vmem:[%s2 + $0x8] sm:$0xff]
  %v374 = vld [vmem:[%s2 + $0x10] sm:$0xff]
  %v375 = vld [vmem:[%s2 + $0x18] sm:$0xff]
  %v376 = vld [vmem:[%s2 + $0x20] sm:$0xff]
  %v377 = vld [vmem:[%s2 + $0x28] sm:$0xff]
  %v378 = vld [vmem:[%s2 + $0x30] sm:$0xff]
  %v379 = vld [vmem:[%s2 + $0x38] sm:$0xff]
  %v380 = vld [vmem:[%s2 + $0x40] sm:$0xff]
  %v381 = vld [vmem:[%s2 + $0x48] sm:$0xff]
  %v382 = vld [vmem:[%s2 + $0x50] sm:$0xff]
  %v383 = vld [vmem:[%s2 + $0x58] sm:$0xff]
  %v384 = vld [vmem:[%s2 + $0x60] sm:$0xff]
  %v385 = vld [vmem:[%s2 + $0x68] sm:$0xff]
  %v386 = vld [vmem:[%s2 + $0x70] sm:$0xff]
  %v387 = vld [vmem:[%s2 + $0x78] sm:$0xff]
  %v388 = vld [vmem:[%s2 + $0x80] sm:$0xff]
  %v389 = vld [vmem:[%s2 + $0x88] sm:$0xf]
  %v391 = vsel %vm183, %v389, 0
  %393 = vmatprep.subr.mxu0 0.0
  %394 = vmatpush1.msra.mxu0 %v372
  %395 = vmatprep.subr.mxu0 0.0
  %396 = vmatpush1.msra.mxu0 %v373
  %397 = vmatprep.subr.mxu0 0.0
  %398 = vmatpush1.msra.mxu0 %v374
  %399 = vmatprep.subr.mxu0 0.0
  %400 = vmatpush1.msra.mxu0 %v375
  %401 = vmatprep.subr.mxu0 0.0
  %402 = vmatpush1.msra.mxu0 %v376
  %403 = vmatprep.subr.mxu0 0.0
  %404 = vmatpush1.msra.mxu0 %v377
  %405 = vmatprep.subr.mxu0 0.0
  %406 = vmatpush1.msra.mxu0 %v378
  %407 = vmatprep.subr.mxu0 0.0
  %408 = vmatpush1.msra.mxu0 %v379
  %409 = vmatprep.subr.mxu0 0.0
  %410 = vmatpush1.msra.mxu0 %v380
  %411 = vmatprep.subr.mxu0 0.0
  %412 = vmatpush1.msra.mxu0 %v381
  %413 = vmatprep.subr.mxu0 0.0
  %414 = vmatpush1.msra.mxu0 %v382
  %415 = vmatprep.subr.mxu0 0.0
  %416 = vmatpush1.msra.mxu0 %v383
  %417 = vmatprep.subr.mxu0 0.0
  %418 = vmatpush1.msra.mxu0 %v384
  %419 = vmatprep.subr.mxu0 0.0
  %420 = vmatpush1.msra.mxu0 %v385
  %421 = vmatprep.subr.mxu0 0.0
  %422 = vmatpush1.msra.mxu0 %v386
  %423 = vmatprep.subr.mxu0 0.0
  %424 = vmatpush1.msra.mxu0 %v387
  %425 = vmatprep.subr.mxu0 0.0
  %426 = vmatpush1.msra.mxu0 %v388
  %427 = vmatprep.subr.mxu0 0.0
  %428 = vmatpush1.msra.mxu0 %v391
  %429 = vmatprep.subr.mxu0 0.0
  %430 = vmatpush1.msra.mxu0 0.0
  %431 = vmatprep.subr.mxu0 0.0
  %432 = vmatpush1.msra.mxu0 0.0
  %433 = vmatprep.subr.mxu0 0.0
  %434 = vmatpush1.msra.mxu0 0.0
  %435 = vmatprep.subr.mxu0 0.0
  %436 = vmatpush1.msra.mxu0 0.0
  %437 = vmatprep.subr.mxu0 0.0
  %438 = vmatpush1.msra.mxu0 0.0
  %439 = vmatprep.subr.mxu0 0.0
  %440 = vmatpush1.msra.mxu0 0.0
  %441 = vmatprep.subr.mxu0 0.0
  %442 = vmatpush1.msra.mxu0 0.0
  %443 = vmatprep.subr.mxu0 0.0
  %444 = vmatpush1.msra.mxu0 0.0
  %445 = vmatprep.subr.mxu0 0.0
  %446 = vmatpush1.msra.mxu0 0.0
  %447 = vmatprep.subr.mxu0 0.0
  %448 = vmatpush1.msra.mxu0 0.0
  %449 = vmatprep.subr.mxu0 0.0
  %450 = vmatpush1.msra.mxu0 0.0
  %451 = vmatprep.subr.mxu0 0.0
  %452 = vmatpush1.msra.mxu0 0.0
  %453 = vmatprep.subr.mxu0 0.0
  %454 = vmatpush1.msra.mxu0 0.0
  %455 = vmatprep.subr.mxu0 0.0
  %456 = vmatpush1.msra.mxu0 0.0
  %457 = vmatprep.mubr.f32.mxu0 %v112
  %458 = vmatmul.mubr.f32.gmra.mrb[0].mxu0 %v44
  %v459 = vpop.f32.mrb[0].mxu0
  %v460 = vadd.f32 0.0, %v459
  %v461 = vpop.f32.mrb[0].mxu0
  %462 = vmatprep.mubr.f32.mxu0 %v115
  %463 = vmatmul.mubr.f32.gmra.mrb[0].mxu0 %v46
  %v464 = vpop.f32.mrb[0].mxu0
  %v465 = vadd.f32 0.0, %v464
  %v466 = vpop.f32.mrb[0].mxu0
  %467 = vmatprep.mubr.f32.mxu0 %v118
  %468 = vmatmul.mubr.f32.gmra.mrb[0].mxu0 %v48
  %v469 = vpop.f32.mrb[0].mxu0
  %v470 = vadd.f32 0.0, %v469
  %v471 = vpop.f32.mrb[0].mxu0
  %472 = vmatprep.mubr.f32.mxu0 %v121
  %473 = vmatmul.mubr.f32.gmra.mrb[0].mxu0 %v50
  %v474 = vpop.f32.mrb[0].mxu0
  %v475 = vadd.f32 0.0, %v474
  %v476 = vpop.f32.mrb[0].mxu0
  %477 = vmatprep.mubr.f32.mxu0 %v124
  %478 = vmatmul.mubr.f32.gmra.mrb[0].mxu0 %v52
  %v479 = vpop.f32.mrb[0].mxu0
  %v480 = vadd.f32 0.0, %v479
  %v481 = vpop.f32.mrb[0].mxu0
  %482 = vmatprep.mubr.f32.mxu0 %v127
  %483 = vmatmul.mubr.f32.gmra.mrb[0].mxu0 %v54
  %v484 = vpop.f32.mrb[0].mxu0
  %v485 = vadd.f32 0.0, %v484
  %v486 = vpop.f32.mrb[0].mxu0
  %487 = vmatprep.mubr.f32.mxu0 %v130
  %488 = vmatmul.mubr.f32.gmra.mrb[0].mxu0 %v56
  %v489 = vpop.f32.mrb[0].mxu0
  %v490 = vadd.f32 0.0, %v489
  %v491 = vpop.f32.mrb[0].mxu0
  %492 = vmatprep.mubr.f32.mxu0 %v133
  %493 = vmatmul.mubr.f32.gmra.mrb[0].mxu0 %v58
  %v494 = vpop.f32.mrb[0].mxu0
  %v495 = vadd.f32 0.0, %v494
  %v496 = vpop.f32.mrb[0].mxu0
  %497 = vmatprep.mubr.f32.mxu0 %v136
  %498 = vmatmul.mubr.f32.gmra.mrb[0].mxu0 %v60
  %v499 = vpop.f32.mrb[0].mxu0
  %v500 = vadd.f32 0.0, %v499
  %v501 = vpop.f32.mrb[0].mxu0
  %502 = vmatprep.mubr.f32.mxu0 %v139
  %503 = vmatmul.mubr.f32.gmra.mrb[0].mxu0 %v62
  %v504 = vpop.f32.mrb[0].mxu0
  %v505 = vadd.f32 0.0, %v504
  %v506 = vpop.f32.mrb[0].mxu0
  %507 = vmatprep.mubr.f32.mxu0 %v142
  %508 = vmatmul.mubr.f32.gmra.mrb[0].mxu0 %v64
  %v509 = vpop.f32.mrb[0].mxu0
  %v510 = vadd.f32 0.0, %v509
  %v511 = vpop.f32.mrb[0].mxu0
  %512 = vmatprep.mubr.f32.mxu0 %v145
  %513 = vmatmul.mubr.f32.gmra.mrb[0].mxu0 %v66
  %v514 = vpop.f32.mrb[0].mxu0
  %v515 = vadd.f32 0.0, %v514
  %v516 = vpop.f32.mrb[0].mxu0
  %517 = vmatprep.mubr.f32.mxu0 %v148
  %518 = vmatmul.mubr.f32.gmra.mrb[0].mxu0 %v68
  %v519 = vpop.f32.mrb[0].mxu0
  %v520 = vadd.f32 0.0, %v519
  %v521 = vpop.f32.mrb[0].mxu0
  %522 = vmatprep.mubr.f32.mxu0 %v151
  %523 = vmatmul.mubr.f32.gmra.mrb[0].mxu0 %v70
  %v524 = vpop.f32.mrb[0].mxu0
  %v525 = vadd.f32 0.0, %v524
  %v526 = vpop.f32.mrb[0].mxu0
  %527 = vmatprep.mubr.f32.mxu0 %v154
  %528 = vmatmul.mubr.f32.gmra.mrb[0].mxu0 %v72
  %v529 = vpop.f32.mrb[0].mxu0
  %v530 = vadd.f32 0.0, %v529
  %v531 = vpop.f32.mrb[0].mxu0
  %532 = vmatprep.mubr.f32.mxu0 %v157
  %533 = vmatmul.mubr.f32.gmra.mrb[0].mxu0 %v74
  %v534 = vpop.f32.mrb[0].mxu0
  %v535 = vadd.f32 0.0, %v534
  %v536 = vpop.f32.mrb[0].mxu0
  %537 = vmatprep.mubr.f32.mxu0 %v160
  %538 = vmatmul.mubr.f32.gmra.mrb[0].mxu0 %v76
  %v539 = vpop.f32.mrb[0].mxu0
  %v540 = vadd.f32 0.0, %v539
  %v541 = vpop.f32.mrb[0].mxu0
  %542 = vmatprep.mubr.f32.mxu0 %v163
  %543 = vmatmul.mubr.f32.gmra.mrb[0].mxu0 %v78
  %v544 = vpop.f32.mrb[0].mxu0
  %v545 = vadd.f32 0.0, %v544
  %v546 = vpop.f32.mrb[0].mxu0
  %547 = vmatprep.mubr.f32.mxu0 %v166
  %548 = vmatmul.mubr.f32.gmra.mrb[0].mxu0 %v80
  %v549 = vpop.f32.mrb[0].mxu0
  %v550 = vadd.f32 0.0, %v549
  %v551 = vpop.f32.mrb[0].mxu0
  %552 = vmatprep.mubr.f32.mxu0 %v169
  %553 = vmatmul.mubr.f32.gmra.mrb[0].mxu0 %v82
  %v554 = vpop.f32.mrb[0].mxu0
  %v555 = vadd.f32 0.0, %v554
  %v556 = vpop.f32.mrb[0].mxu0
  %557 = vmatprep.mubr.f32.mxu0 %v172
  %558 = vmatmul.mubr.f32.gmra.mrb[0].mxu0 %v84
  %v559 = vpop.f32.mrb[0].mxu0
  %v560 = vadd.f32 0.0, %v559
  %v561 = vpop.f32.mrb[0].mxu0
  %562 = vmatprep.mubr.f32.mxu0 %v175
  %563 = vmatmul.mubr.f32.gmra.mrb[0].mxu0 %v86
  %v564 = vpop.f32.mrb[0].mxu0
  %v565 = vadd.f32 0.0, %v564
  %v566 = vpop.f32.mrb[0].mxu0
  %567 = vmatprep.mubr.f32.mxu0 %v178
  %568 = vmatmul.mubr.f32.gmra.mrb[0].mxu0 %v88
  %v569 = vpop.f32.mrb[0].mxu0
  %v570 = vadd.f32 0.0, %v569
  %v571 = vpop.f32.mrb[0].mxu0
  %572 = vmatprep.mubr.f32.mxu0 %v181
  %573 = vmatmul.mubr.f32.gmra.mrb[0].mxu0 %v90
  %v574 = vpop.f32.mrb[0].mxu0
  %v575 = vadd.f32 0.0, %v574
  %v576 = vpop.f32.mrb[0].mxu0
  %577 = vdwg.mxu0
  %v578 = vmax.f32 %v254, %v460
  %v579 = vmax.f32 %v259, %v465
  %v580 = vmax.f32 %v264, %v470
  %v581 = vmax.f32 %v269, %v475
  %v582 = vmax.f32 %v274, %v480
  %v583 = vmax.f32 %v279, %v485
  %v584 = vmax.f32 %v284, %v490
  %v585 = vmax.f32 %v289, %v495
  %v586 = vmax.f32 %v294, %v500
  %v587 = vmax.f32 %v299, %v505
  %v588 = vmax.f32 %v304, %v510
  %v589 = vmax.f32 %v309, %v515
  %v590 = vmax.f32 %v314, %v520
  %v591 = vmax.f32 %v319, %v525
  %v592 = vmax.f32 %v324, %v530
  %v593 = vmax.f32 %v329, %v535
  %v594 = vmax.f32 %v334, %v540
  %v595 = vmax.f32 %v339, %v545
  %v596 = vmax.f32 %v344, %v550
  %v597 = vmax.f32 %v349, %v555
  %v598 = vmax.f32 %v354, %v560
  %v599 = vmax.f32 %v359, %v565
  %v600 = vmax.f32 %v364, %v570
  %v601 = vmax.f32 %v369, %v575
  %v626 = vcombine.high %v578, %v578
  %v628 = vunpack.c.l.s4 1983009808
  %v629 = vunpack.c.0.s8 %v628
  %v630 = vlaneseq
  %v631 = vshrl.u32 %v630, 7
  %v632 = vsub.s32 %v629, %v631
  %v633 = vrot.slane %v578, %v632
  %v635 = vunpack.c.l.s4 1983009808
  %v636 = vunpack.c.0.s8 %v635
  %v637 = vlaneseq
  %v638 = vshrl.u32 %v637, 7
  %v639 = vsub.s32 %v636, %v638
  %v640 = vrot.slane %v626, %v639
  %v641 = vcombine.high %v633, %v633
  %v642 = vcombine.high %v640, %v640
  %v643 = vcombine.high %v579, %v579
  %v645 = vunpack.c.l.s4 1983009808
  %v646 = vunpack.c.0.s8 %v645
  %v647 = vlaneseq
  %v648 = vshrl.u32 %v647, 7
  %v649 = vsub.s32 %v646, %v648
  %v650 = vrot.slane %v579, %v649
  %v652 = vunpack.c.l.s4 1983009808
  %v653 = vunpack.c.0.s8 %v652
  %v654 = vlaneseq
  %v655 = vshrl.u32 %v654, 7
  %v656 = vsub.s32 %v653, %v655
  %v657 = vrot.slane %v643, %v656
  %v658 = vcombine.high %v650, %v650
  %v659 = vcombine.high %v657, %v657
  %v660 = vcombine.high %v580, %v580
  %v662 = vunpack.c.l.s4 1983009808
  %v663 = vunpack.c.0.s8 %v662
  %v664 = vlaneseq
  %v665 = vshrl.u32 %v664, 7
  %v666 = vsub.s32 %v663, %v665
  %v667 = vrot.slane %v580, %v666
  %v669 = vunpack.c.l.s4 1983009808
  %v670 = vunpack.c.0.s8 %v669
  %v671 = vlaneseq
  %v672 = vshrl.u32 %v671, 7
  %v673 = vsub.s32 %v670, %v672
  %v674 = vrot.slane %v660, %v673
  %v675 = vcombine.high %v667, %v667
  %v676 = vcombine.high %v674, %v674
  %v677 = vcombine.high %v581, %v581
  %v679 = vunpack.c.l.s4 1983009808
  %v680 = vunpack.c.0.s8 %v679
  %v681 = vlaneseq
  %v682 = vshrl.u32 %v681, 7
  %v683 = vsub.s32 %v680, %v682
  %v684 = vrot.slane %v581, %v683
  %v686 = vunpack.c.l.s4 1983009808
  %v687 = vunpack.c.0.s8 %v686
  %v688 = vlaneseq
  %v689 = vshrl.u32 %v688, 7
  %v690 = vsub.s32 %v687, %v689
  %v691 = vrot.slane %v677, %v690
  %v692 = vcombine.high %v684, %v684
  %v693 = vcombine.high %v691, %v691
  %v694 = vcombine.high %v582, %v582
  %v696 = vunpack.c.l.s4 1983009808
  %v697 = vunpack.c.0.s8 %v696
  %v698 = vlaneseq
  %v699 = vshrl.u32 %v698, 7
  %v700 = vsub.s32 %v697, %v699
  %v701 = vrot.slane %v582, %v700
  %v703 = vunpack.c.l.s4 1983009808
  %v704 = vunpack.c.0.s8 %v703
  %v705 = vlaneseq
  %v706 = vshrl.u32 %v705, 7
  %v707 = vsub.s32 %v704, %v706
  %v708 = vrot.slane %v694, %v707
  %v709 = vcombine.high %v701, %v701
  %v710 = vcombine.high %v708, %v708
  %v711 = vcombine.high %v583, %v583
  %v713 = vunpack.c.l.s4 1983009808
  %v714 = vunpack.c.0.s8 %v713
  %v715 = vlaneseq
  %v716 = vshrl.u32 %v715, 7
  %v717 = vsub.s32 %v714, %v716
  %v718 = vrot.slane %v583, %v717
  %v720 = vunpack.c.l.s4 1983009808
  %v721 = vunpack.c.0.s8 %v720
  %v722 = vlaneseq
  %v723 = vshrl.u32 %v722, 7
  %v724 = vsub.s32 %v721, %v723
  %v725 = vrot.slane %v711, %v724
  %v726 = vcombine.high %v718, %v718
  %v727 = vcombine.high %v725, %v725
  %v728 = vcombine.high %v584, %v584
  %v730 = vunpack.c.l.s4 1983009808
  %v731 = vunpack.c.0.s8 %v730
  %v732 = vlaneseq
  %v733 = vshrl.u32 %v732, 7
  %v734 = vsub.s32 %v731, %v733
  %v735 = vrot.slane %v584, %v734
  %v737 = vunpack.c.l.s4 1983009808
  %v738 = vunpack.c.0.s8 %v737
  %v739 = vlaneseq
  %v740 = vshrl.u32 %v739, 7
  %v741 = vsub.s32 %v738, %v740
  %v742 = vrot.slane %v728, %v741
  %v743 = vcombine.high %v735, %v735
  %v744 = vcombine.high %v742, %v742
  %v745 = vcombine.high %v585, %v585
  %v747 = vunpack.c.l.s4 1983009808
  %v748 = vunpack.c.0.s8 %v747
  %v749 = vlaneseq
  %v750 = vshrl.u32 %v749, 7
  %v751 = vsub.s32 %v748, %v750
  %v752 = vrot.slane %v585, %v751
  %v754 = vunpack.c.l.s4 1983009808
  %v755 = vunpack.c.0.s8 %v754
  %v756 = vlaneseq
  %v757 = vshrl.u32 %v756, 7
  %v758 = vsub.s32 %v755, %v757
  %v759 = vrot.slane %v745, %v758
  %v760 = vcombine.high %v752, %v752
  %v761 = vcombine.high %v759, %v759
  %v762 = vcombine.high %v586, %v586
  %v764 = vunpack.c.l.s4 1983009808
  %v765 = vunpack.c.0.s8 %v764
  %v766 = vlaneseq
  %v767 = vshrl.u32 %v766, 7
  %v768 = vsub.s32 %v765, %v767
  %v769 = vrot.slane %v586, %v768
  %v771 = vunpack.c.l.s4 1983009808
  %v772 = vunpack.c.0.s8 %v771
  %v773 = vlaneseq
  %v774 = vshrl.u32 %v773, 7
  %v775 = vsub.s32 %v772, %v774
  %v776 = vrot.slane %v762, %v775
  %v777 = vcombine.high %v769, %v769
  %v778 = vcombine.high %v776, %v776
  %v779 = vcombine.high %v587, %v587
  %v781 = vunpack.c.l.s4 1983009808
  %v782 = vunpack.c.0.s8 %v781
  %v783 = vlaneseq
  %v784 = vshrl.u32 %v783, 7
  %v785 = vsub.s32 %v782, %v784
  %v786 = vrot.slane %v587, %v785
  %v788 = vunpack.c.l.s4 1983009808
  %v789 = vunpack.c.0.s8 %v788
  %v790 = vlaneseq
  %v791 = vshrl.u32 %v790, 7
  %v792 = vsub.s32 %v789, %v791
  %v793 = vrot.slane %v779, %v792
  %v794 = vcombine.high %v786, %v786
  %v795 = vcombine.high %v793, %v793
  %v796 = vcombine.high %v588, %v588
  %v798 = vunpack.c.l.s4 1983009808
  %v799 = vunpack.c.0.s8 %v798
  %v800 = vlaneseq
  %v801 = vshrl.u32 %v800, 7
  %v802 = vsub.s32 %v799, %v801
  %v803 = vrot.slane %v588, %v802
  %v805 = vunpack.c.l.s4 1983009808
  %v806 = vunpack.c.0.s8 %v805
  %v807 = vlaneseq
  %v808 = vshrl.u32 %v807, 7
  %v809 = vsub.s32 %v806, %v808
  %v810 = vrot.slane %v796, %v809
  %v811 = vcombine.high %v803, %v803
  %v812 = vcombine.high %v810, %v810
  %v813 = vcombine.high %v589, %v589
  %v815 = vunpack.c.l.s4 1983009808
  %v816 = vunpack.c.0.s8 %v815
  %v817 = vlaneseq
  %v818 = vshrl.u32 %v817, 7
  %v819 = vsub.s32 %v816, %v818
  %v820 = vrot.slane %v589, %v819
  %v822 = vunpack.c.l.s4 1983009808
  %v823 = vunpack.c.0.s8 %v822
  %v824 = vlaneseq
  %v825 = vshrl.u32 %v824, 7
  %v826 = vsub.s32 %v823, %v825
  %v827 = vrot.slane %v813, %v826
  %v828 = vcombine.high %v820, %v820
  %v829 = vcombine.high %v827, %v827
  %v830 = vcombine.high %v590, %v590
  %v832 = vunpack.c.l.s4 1983009808
  %v833 = vunpack.c.0.s8 %v832
  %v834 = vlaneseq
  %v835 = vshrl.u32 %v834, 7
  %v836 = vsub.s32 %v833, %v835
  %v837 = vrot.slane %v590, %v836
  %v839 = vunpack.c.l.s4 1983009808
  %v840 = vunpack.c.0.s8 %v839
  %v841 = vlaneseq
  %v842 = vshrl.u32 %v841, 7
  %v843 = vsub.s32 %v840, %v842
  %v844 = vrot.slane %v830, %v843
  %v845 = vcombine.high %v837, %v837
  %v846 = vcombine.high %v844, %v844
  %v847 = vcombine.high %v591, %v591
  %v849 = vunpack.c.l.s4 1983009808
  %v850 = vunpack.c.0.s8 %v849
  %v851 = vlaneseq
  %v852 = vshrl.u32 %v851, 7
  %v853 = vsub.s32 %v850, %v852
  %v854 = vrot.slane %v591, %v853
  %v856 = vunpack.c.l.s4 1983009808
  %v857 = vunpack.c.0.s8 %v856
  %v858 = vlaneseq
  %v859 = vshrl.u32 %v858, 7
  %v860 = vsub.s32 %v857, %v859
  %v861 = vrot.slane %v847, %v860
  %v862 = vcombine.high %v854, %v854
  %v863 = vcombine.high %v861, %v861
  %v864 = vcombine.high %v592, %v592
  %v866 = vunpack.c.l.s4 1983009808
  %v867 = vunpack.c.0.s8 %v866
  %v868 = vlaneseq
  %v869 = vshrl.u32 %v868, 7
  %v870 = vsub.s32 %v867, %v869
  %v871 = vrot.slane %v592, %v870
  %v873 = vunpack.c.l.s4 1983009808
  %v874 = vunpack.c.0.s8 %v873
  %v875 = vlaneseq
  %v876 = vshrl.u32 %v875, 7
  %v877 = vsub.s32 %v874, %v876
  %v878 = vrot.slane %v864, %v877
  %v879 = vcombine.high %v871, %v871
  %v880 = vcombine.high %v878, %v878
  %v881 = vcombine.high %v593, %v593
  %v883 = vunpack.c.l.s4 1983009808
  %v884 = vunpack.c.0.s8 %v883
  %v885 = vlaneseq
  %v886 = vshrl.u32 %v885, 7
  %v887 = vsub.s32 %v884, %v886
  %v888 = vrot.slane %v593, %v887
  %v890 = vunpack.c.l.s4 1983009808
  %v891 = vunpack.c.0.s8 %v890
  %v892 = vlaneseq
  %v893 = vshrl.u32 %v892, 7
  %v894 = vsub.s32 %v891, %v893
  %v895 = vrot.slane %v881, %v894
  %v896 = vcombine.high %v888, %v888
  %v897 = vcombine.high %v895, %v895
  %v898 = vcombine.high %v594, %v594
  %v900 = vunpack.c.l.s4 1983009808
  %v901 = vunpack.c.0.s8 %v900
  %v902 = vlaneseq
  %v903 = vshrl.u32 %v902, 7
  %v904 = vsub.s32 %v901, %v903
  %v905 = vrot.slane %v594, %v904
  %v907 = vunpack.c.l.s4 1983009808
  %v908 = vunpack.c.0.s8 %v907
  %v909 = vlaneseq
  %v910 = vshrl.u32 %v909, 7
  %v911 = vsub.s32 %v908, %v910
  %v912 = vrot.slane %v898, %v911
  %v913 = vcombine.high %v905, %v905
  %v914 = vcombine.high %v912, %v912
  %v915 = vcombine.high %v595, %v595
  %v917 = vunpack.c.l.s4 1983009808
  %v918 = vunpack.c.0.s8 %v917
  %v919 = vlaneseq
  %v920 = vshrl.u32 %v919, 7
  %v921 = vsub.s32 %v918, %v920
  %v922 = vrot.slane %v595, %v921
  %v924 = vunpack.c.l.s4 1983009808
  %v925 = vunpack.c.0.s8 %v924
  %v926 = vlaneseq
  %v927 = vshrl.u32 %v926, 7
  %v928 = vsub.s32 %v925, %v927
  %v929 = vrot.slane %v915, %v928
  %v930 = vcombine.high %v922, %v922
  %v931 = vcombine.high %v929, %v929
  %v932 = vcombine.high %v596, %v596
  %v934 = vunpack.c.l.s4 1983009808
  %v935 = vunpack.c.0.s8 %v934
  %v936 = vlaneseq
  %v937 = vshrl.u32 %v936, 7
  %v938 = vsub.s32 %v935, %v937
  %v939 = vrot.slane %v596, %v938
  %v941 = vunpack.c.l.s4 1983009808
  %v942 = vunpack.c.0.s8 %v941
  %v943 = vlaneseq
  %v944 = vshrl.u32 %v943, 7
  %v945 = vsub.s32 %v942, %v944
  %v946 = vrot.slane %v932, %v945
  %v947 = vcombine.high %v939, %v939
  %v948 = vcombine.high %v946, %v946
  %v949 = vcombine.high %v597, %v597
  %v951 = vunpack.c.l.s4 1983009808
  %v952 = vunpack.c.0.s8 %v951
  %v953 = vlaneseq
  %v954 = vshrl.u32 %v953, 7
  %v955 = vsub.s32 %v952, %v954
  %v956 = vrot.slane %v597, %v955
  %v958 = vunpack.c.l.s4 1983009808
  %v959 = vunpack.c.0.s8 %v958
  %v960 = vlaneseq
  %v961 = vshrl.u32 %v960, 7
  %v962 = vsub.s32 %v959, %v961
  %v963 = vrot.slane %v949, %v962
  %v964 = vcombine.high %v956, %v956
  %v965 = vcombine.high %v963, %v963
  %v966 = vcombine.high %v598, %v598
  %v968 = vunpack.c.l.s4 1983009808
  %v969 = vunpack.c.0.s8 %v968
  %v970 = vlaneseq
  %v971 = vshrl.u32 %v970, 7
  %v972 = vsub.s32 %v969, %v971
  %v973 = vrot.slane %v598, %v972
  %v975 = vunpack.c.l.s4 1983009808
  %v976 = vunpack.c.0.s8 %v975
  %v977 = vlaneseq
  %v978 = vshrl.u32 %v977, 7
  %v979 = vsub.s32 %v976, %v978
  %v980 = vrot.slane %v966, %v979
  %v981 = vcombine.high %v973, %v973
  %v982 = vcombine.high %v980, %v980
  %v983 = vcombine.high %v599, %v599
  %v985 = vunpack.c.l.s4 1983009808
  %v986 = vunpack.c.0.s8 %v985
  %v987 = vlaneseq
  %v988 = vshrl.u32 %v987, 7
  %v989 = vsub.s32 %v986, %v988
  %v990 = vrot.slane %v599, %v989
  %v992 = vunpack.c.l.s4 1983009808
  %v993 = vunpack.c.0.s8 %v992
  %v994 = vlaneseq
  %v995 = vshrl.u32 %v994, 7
  %v996 = vsub.s32 %v993, %v995
  %v997 = vrot.slane %v983, %v996
  %v998 = vcombine.high %v990, %v990
  %v999 = vcombine.high %v997, %v997
  %v1000 = vcombine.high %v600, %v600
  %v1002 = vunpack.c.l.s4 1983009808
  %v1003 = vunpack.c.0.s8 %v1002
  %v1004 = vlaneseq
  %v1005 = vshrl.u32 %v1004, 7
  %v1006 = vsub.s32 %v1003, %v1005
  %v1007 = vrot.slane %v600, %v1006
  %v1009 = vunpack.c.l.s4 1983009808
  %v1010 = vunpack.c.0.s8 %v1009
  %v1011 = vlaneseq
  %v1012 = vshrl.u32 %v1011, 7
  %v1013 = vsub.s32 %v1010, %v1012
  %v1014 = vrot.slane %v1000, %v1013
  %v1015 = vcombine.high %v1007, %v1007
  %v1016 = vcombine.high %v1014, %v1014
  %v1017 = vcombine.high %v601, %v601
  %v1019 = vunpack.c.l.s4 1983009808
  %v1020 = vunpack.c.0.s8 %v1019
  %v1021 = vlaneseq
  %v1022 = vshrl.u32 %v1021, 7
  %v1023 = vsub.s32 %v1020, %v1022
  %v1024 = vrot.slane %v601, %v1023
  %v1026 = vunpack.c.l.s4 1983009808
  %v1027 = vunpack.c.0.s8 %v1026
  %v1028 = vlaneseq
  %v1029 = vshrl.u32 %v1028, 7
  %v1030 = vsub.s32 %v1027, %v1029
  %v1031 = vrot.slane %v1017, %v1030
  %v1032 = vcombine.high %v1024, %v1024
  %v1033 = vcombine.high %v1031, %v1031
  %v1130 = vrot.slane %v633, 7
  %v1131 = vrot.slane %v1130, 2
  %v1132 = vrot.slane %v641, 7
  %v1133 = vrot.slane %v1132, 2
  %v1134 = vrot.slane %v640, 7
  %v1135 = vrot.slane %v1134, 2
  %v1136 = vrot.slane %v642, 7
  %v1137 = vrot.slane %v1136, 2
  %v1138 = vrot.slane %v650, 7
  %v1139 = vrot.slane %v1138, 2
  %v1140 = vrot.slane %v658, 7
  %v1141 = vrot.slane %v1140, 2
  %v1142 = vrot.slane %v657, 7
  %v1143 = vrot.slane %v1142, 2
  %v1144 = vrot.slane %v659, 7
  %v1145 = vrot.slane %v1144, 2
  %v1146 = vrot.slane %v667, 7
  %v1147 = vrot.slane %v1146, 2
  %v1148 = vrot.slane %v675, 7
  %v1149 = vrot.slane %v1148, 2
  %v1150 = vrot.slane %v674, 7
  %v1151 = vrot.slane %v1150, 2
  %v1152 = vrot.slane %v676, 7
  %v1153 = vrot.slane %v1152, 2
  %v1154 = vrot.slane %v684, 7
  %v1155 = vrot.slane %v1154, 2
  %v1156 = vrot.slane %v692, 7
  %v1157 = vrot.slane %v1156, 2
  %v1158 = vrot.slane %v691, 7
  %v1159 = vrot.slane %v1158, 2
  %v1160 = vrot.slane %v693, 7
  %v1161 = vrot.slane %v1160, 2
  %v1162 = vrot.slane %v701, 7
  %v1163 = vrot.slane %v1162, 2
  %v1164 = vrot.slane %v709, 7
  %v1165 = vrot.slane %v1164, 2
  %v1166 = vrot.slane %v708, 7
  %v1167 = vrot.slane %v1166, 2
  %v1168 = vrot.slane %v710, 7
  %v1169 = vrot.slane %v1168, 2
  %v1170 = vrot.slane %v718, 7
  %v1171 = vrot.slane %v1170, 2
  %v1172 = vrot.slane %v726, 7
  %v1173 = vrot.slane %v1172, 2
  %v1174 = vrot.slane %v725, 7
  %v1175 = vrot.slane %v1174, 2
  %v1176 = vrot.slane %v727, 7
  %v1177 = vrot.slane %v1176, 2
  %v1178 = vrot.slane %v735, 7
  %v1179 = vrot.slane %v1178, 2
  %v1180 = vrot.slane %v743, 7
  %v1181 = vrot.slane %v1180, 2
  %v1182 = vrot.slane %v742, 7
  %v1183 = vrot.slane %v1182, 2
  %v1184 = vrot.slane %v744, 7
  %v1185 = vrot.slane %v1184, 2
  %v1186 = vrot.slane %v752, 7
  %v1187 = vrot.slane %v1186, 2
  %v1188 = vrot.slane %v760, 7
  %v1189 = vrot.slane %v1188, 2
  %v1190 = vrot.slane %v759, 7
  %v1191 = vrot.slane %v1190, 2
  %v1192 = vrot.slane %v761, 7
  %v1193 = vrot.slane %v1192, 2
  %v1194 = vrot.slane %v769, 7
  %v1195 = vrot.slane %v1194, 2
  %v1196 = vrot.slane %v777, 7
  %v1197 = vrot.slane %v1196, 2
  %v1198 = vrot.slane %v776, 7
  %v1199 = vrot.slane %v1198, 2
  %v1200 = vrot.slane %v778, 7
  %v1201 = vrot.slane %v1200, 2
  %v1202 = vrot.slane %v786, 7
  %v1203 = vrot.slane %v1202, 2
  %v1204 = vrot.slane %v794, 7
  %v1205 = vrot.slane %v1204, 2
  %v1206 = vrot.slane %v793, 7
  %v1207 = vrot.slane %v1206, 2
  %v1208 = vrot.slane %v795, 7
  %v1209 = vrot.slane %v1208, 2
  %v1210 = vrot.slane %v803, 7
  %v1211 = vrot.slane %v1210, 2
  %v1212 = vrot.slane %v811, 7
  %v1213 = vrot.slane %v1212, 2
  %v1214 = vrot.slane %v810, 7
  %v1215 = vrot.slane %v1214, 2
  %v1216 = vrot.slane %v812, 7
  %v1217 = vrot.slane %v1216, 2
  %v1218 = vrot.slane %v820, 7
  %v1219 = vrot.slane %v1218, 2
  %v1220 = vrot.slane %v828, 7
  %v1221 = vrot.slane %v1220, 2
  %v1222 = vrot.slane %v827, 7
  %v1223 = vrot.slane %v1222, 2
  %v1224 = vrot.slane %v829, 7
  %v1225 = vrot.slane %v1224, 2
  %v1226 = vrot.slane %v837, 7
  %v1227 = vrot.slane %v1226, 2
  %v1228 = vrot.slane %v845, 7
  %v1229 = vrot.slane %v1228, 2
  %v1230 = vrot.slane %v844, 7
  %v1231 = vrot.slane %v1230, 2
  %v1232 = vrot.slane %v846, 7
  %v1233 = vrot.slane %v1232, 2
  %v1234 = vrot.slane %v854, 7
  %v1235 = vrot.slane %v1234, 2
  %v1236 = vrot.slane %v862, 7
  %v1237 = vrot.slane %v1236, 2
  %v1238 = vrot.slane %v861, 7
  %v1239 = vrot.slane %v1238, 2
  %v1240 = vrot.slane %v863, 7
  %v1241 = vrot.slane %v1240, 2
  %v1242 = vrot.slane %v871, 7
  %v1243 = vrot.slane %v1242, 2
  %v1244 = vrot.slane %v879, 7
  %v1245 = vrot.slane %v1244, 2
  %v1246 = vrot.slane %v878, 7
  %v1247 = vrot.slane %v1246, 2
  %v1248 = vrot.slane %v880, 7
  %v1249 = vrot.slane %v1248, 2
  %v1250 = vrot.slane %v888, 7
  %v1251 = vrot.slane %v1250, 2
  %v1252 = vrot.slane %v896, 7
  %v1253 = vrot.slane %v1252, 2
  %v1254 = vrot.slane %v895, 7
  %v1255 = vrot.slane %v1254, 2
  %v1256 = vrot.slane %v897, 7
  %v1257 = vrot.slane %v1256, 2
  %v1258 = vrot.slane %v905, 7
  %v1259 = vrot.slane %v1258, 2
  %v1260 = vrot.slane %v913, 7
  %v1261 = vrot.slane %v1260, 2
  %v1262 = vrot.slane %v912, 7
  %v1263 = vrot.slane %v1262, 2
  %v1264 = vrot.slane %v914, 7
  %v1265 = vrot.slane %v1264, 2
  %v1266 = vrot.slane %v922, 7
  %v1267 = vrot.slane %v1266, 2
  %v1268 = vrot.slane %v930, 7
  %v1269 = vrot.slane %v1268, 2
  %v1270 = vrot.slane %v929, 7
  %v1271 = vrot.slane %v1270, 2
  %v1272 = vrot.slane %v931, 7
  %v1273 = vrot.slane %v1272, 2
  %v1274 = vrot.slane %v939, 7
  %v1275 = vrot.slane %v1274, 2
  %v1276 = vrot.slane %v947, 7
  %v1277 = vrot.slane %v1276, 2
  %v1278 = vrot.slane %v946, 7
  %v1279 = vrot.slane %v1278, 2
  %v1280 = vrot.slane %v948, 7
  %v1281 = vrot.slane %v1280, 2
  %v1282 = vrot.slane %v956, 7
  %v1283 = vrot.slane %v1282, 2
  %v1284 = vrot.slane %v964, 7
  %v1285 = vrot.slane %v1284, 2
  %v1286 = vrot.slane %v963, 7
  %v1287 = vrot.slane %v1286, 2
  %v1288 = vrot.slane %v965, 7
  %v1289 = vrot.slane %v1288, 2
  %v1290 = vrot.slane %v973, 7
  %v1291 = vrot.slane %v1290, 2
  %v1292 = vrot.slane %v981, 7
  %v1293 = vrot.slane %v1292, 2
  %v1294 = vrot.slane %v980, 7
  %v1295 = vrot.slane %v1294, 2
  %v1296 = vrot.slane %v982, 7
  %v1297 = vrot.slane %v1296, 2
  %v1298 = vrot.slane %v990, 7
  %v1299 = vrot.slane %v1298, 2
  %v1300 = vrot.slane %v998, 7
  %v1301 = vrot.slane %v1300, 2
  %v1302 = vrot.slane %v997, 7
  %v1303 = vrot.slane %v1302, 2
  %v1304 = vrot.slane %v999, 7
  %v1305 = vrot.slane %v1304, 2
  %v1306 = vrot.slane %v1007, 7
  %v1307 = vrot.slane %v1306, 2
  %v1308 = vrot.slane %v1015, 7
  %v1309 = vrot.slane %v1308, 2
  %v1310 = vrot.slane %v1014, 7
  %v1311 = vrot.slane %v1310, 2
  %v1312 = vrot.slane %v1016, 7
  %v1313 = vrot.slane %v1312, 2
  %v1314 = vrot.slane %v1024, 7
  %v1315 = vrot.slane %v1314, 2
  %v1316 = vrot.slane %v1032, 7
  %v1317 = vrot.slane %v1316, 2
  %v1318 = vrot.slane %v1031, 7
  %v1319 = vrot.slane %v1318, 2
  %v1320 = vrot.slane %v1033, 7
  %v1321 = vrot.slane %v1320, 2
  %v1418 = vmax.f32 %v633, %v1131
  %v1419 = vmax.f32 %v641, %v1133
  %v1420 = vmax.f32 %v640, %v1135
  %v1421 = vmax.f32 %v642, %v1137
  %v1422 = vmax.f32 %v650, %v1139
  %v1423 = vmax.f32 %v658, %v1141
  %v1424 = vmax.f32 %v657, %v1143
  %v1425 = vmax.f32 %v659, %v1145
  %v1426 = vmax.f32 %v667, %v1147
  %v1427 = vmax.f32 %v675, %v1149
  %v1428 = vmax.f32 %v674, %v1151
  %v1429 = vmax.f32 %v676, %v1153
  %v1430 = vmax.f32 %v684, %v1155
  %v1431 = vmax.f32 %v692, %v1157
  %v1432 = vmax.f32 %v691, %v1159
  %v1433 = vmax.f32 %v693, %v1161
  %v1434 = vmax.f32 %v701, %v1163
  %v1435 = vmax.f32 %v709, %v1165
  %v1436 = vmax.f32 %v708, %v1167
  %v1437 = vmax.f32 %v710, %v1169
  %v1438 = vmax.f32 %v718, %v1171
  %v1439 = vmax.f32 %v726, %v1173
  %v1440 = vmax.f32 %v725, %v1175
  %v1441 = vmax.f32 %v727, %v1177
  %v1442 = vmax.f32 %v735, %v1179
  %v1443 = vmax.f32 %v743, %v1181
  %v1444 = vmax.f32 %v742, %v1183
  %v1445 = vmax.f32 %v744, %v1185
  %v1446 = vmax.f32 %v752, %v1187
  %v1447 = vmax.f32 %v760, %v1189
  %v1448 = vmax.f32 %v759, %v1191
  %v1449 = vmax.f32 %v761, %v1193
  %v1450 = vmax.f32 %v769, %v1195
  %v1451 = vmax.f32 %v777, %v1197
  %v1452 = vmax.f32 %v776, %v1199
  %v1453 = vmax.f32 %v778, %v1201
  %v1454 = vmax.f32 %v786, %v1203
  %v1455 = vmax.f32 %v794, %v1205
  %v1456 = vmax.f32 %v793, %v1207
  %v1457 = vmax.f32 %v795, %v1209
  %v1458 = vmax.f32 %v803, %v1211
  %v1459 = vmax.f32 %v811, %v1213
  %v1460 = vmax.f32 %v810, %v1215
  %v1461 = vmax.f32 %v812, %v1217
  %v1462 = vmax.f32 %v820, %v1219
  %v1463 = vmax.f32 %v828, %v1221
  %v1464 = vmax.f32 %v827, %v1223
  %v1465 = vmax.f32 %v829, %v1225
  %v1466 = vmax.f32 %v837, %v1227
  %v1467 = vmax.f32 %v845, %v1229
  %v1468 = vmax.f32 %v844, %v1231
  %v1469 = vmax.f32 %v846, %v1233
  %v1470 = vmax.f32 %v854, %v1235
  %v1471 = vmax.f32 %v862, %v1237
  %v1472 = vmax.f32 %v861, %v1239
  %v1473 = vmax.f32 %v863, %v1241
  %v1474 = vmax.f32 %v871, %v1243
  %v1475 = vmax.f32 %v879, %v1245
  %v1476 = vmax.f32 %v878, %v1247
  %v1477 = vmax.f32 %v880, %v1249
  %v1478 = vmax.f32 %v888, %v1251
  %v1479 = vmax.f32 %v896, %v1253
  %v1480 = vmax.f32 %v895, %v1255
  %v1481 = vmax.f32 %v897, %v1257
  %v1482 = vmax.f32 %v905, %v1259
  %v1483 = vmax.f32 %v913, %v1261
  %v1484 = vmax.f32 %v912, %v1263
  %v1485 = vmax.f32 %v914, %v1265
  %v1486 = vmax.f32 %v922, %v1267
  %v1487 = vmax.f32 %v930, %v1269
  %v1488 = vmax.f32 %v929, %v1271
  %v1489 = vmax.f32 %v931, %v1273
  %v1490 = vmax.f32 %v939, %v1275
  %v1491 = vmax.f32 %v947, %v1277
  %v1492 = vmax.f32 %v946, %v1279
  %v1493 = vmax.f32 %v948, %v1281
  %v1494 = vmax.f32 %v956, %v1283
  %v1495 = vmax.f32 %v964, %v1285
  %v1496 = vmax.f32 %v963, %v1287
  %v1497 = vmax.f32 %v965, %v1289
  %v1498 = vmax.f32 %v973, %v1291
  %v1499 = vmax.f32 %v981, %v1293
  %v1500 = vmax.f32 %v980, %v1295
  %v1501 = vmax.f32 %v982, %v1297
  %v1502 = vmax.f32 %v990, %v1299
  %v1503 = vmax.f32 %v998, %v1301
  %v1504 = vmax.f32 %v997, %v1303
  %v1505 = vmax.f32 %v999, %v1305
  %v1506 = vmax.f32 %v1007, %v1307
  %v1507 = vmax.f32 %v1015, %v1309
  %v1508 = vmax.f32 %v1014, %v1311
  %v1509 = vmax.f32 %v1016, %v1313
  %v1510 = vmax.f32 %v1024, %v1315
  %v1511 = vmax.f32 %v1032, %v1317
  %v1512 = vmax.f32 %v1031, %v1319
  %v1513 = vmax.f32 %v1033, %v1321
  %v1514 = vld [vmem:[%s3] sm:$0x1]
  %v1516 = vlaneseq
  %v1517 = vshrl.u32 %v1516, 7
  %v1518 = vsub.s32 0, %v1517
  %v1519 = vrot.slane %v1514, %v1518
  %v1520 = vcombine.high %v1519, %v1519
  %v1522 = vunpack.c.l.s4 1983009808
  %v1523 = vunpack.c.0.s8 %v1522
  %v1524 = vlaneseq
  %v1525 = vshrl.u32 %v1524, 7
  %v1526 = vsub.s32 %v1523, %v1525
  %v1527 = vrot.slane %v1519, %v1526
  %v1529 = vunpack.c.l.s4 1983009808
  %v1530 = vunpack.c.0.s8 %v1529
  %v1531 = vlaneseq
  %v1532 = vshrl.u32 %v1531, 7
  %v1533 = vsub.s32 %v1530, %v1532
  %v1534 = vrot.slane %v1520, %v1533
  %v1535 = vcombine.high %v1527, %v1527
  %v1536 = vcombine.high %v1534, %v1534
  %v1537 = vrot.slane %v1527, 1
  %v1538 = vrot.slane %v1535, 1
  %v1539 = vrot.slane %v1534, 1
  %v1540 = vrot.slane %v1536, 1
  %v1549 = vadd.f32 %v1418, %v1527
  %v1550 = vadd.f32 %v1419, %v1537
  %v1551 = vadd.f32 %v1420, %v1535
  %v1552 = vadd.f32 %v1421, %v1538
  %v1553 = vadd.f32 %v1422, %v1534
  %v1554 = vadd.f32 %v1423, %v1539
  %v1555 = vadd.f32 %v1424, %v1536
  %v1556 = vadd.f32 %v1425, %v1540
  %v1557 = vadd.f32 %v1426, %v1527
  %v1558 = vadd.f32 %v1427, %v1537
  %v1559 = vadd.f32 %v1428, %v1535
  %v1560 = vadd.f32 %v1429, %v1538
  %v1561 = vadd.f32 %v1430, %v1527
  %v1562 = vadd.f32 %v1431, %v1537
  %v1563 = vadd.f32 %v1432, %v1535
  %v1564 = vadd.f32 %v1433, %v1538
  %v1565 = vadd.f32 %v1434, %v1534
  %v1566 = vadd.f32 %v1435, %v1539
  %v1567 = vadd.f32 %v1436, %v1536
  %v1568 = vadd.f32 %v1437, %v1540
  %v1569 = vadd.f32 %v1438, %v1527
  %v1570 = vadd.f32 %v1439, %v1537
  %v1571 = vadd.f32 %v1440, %v1535
  %v1572 = vadd.f32 %v1441, %v1538
  %v1573 = vadd.f32 %v1442, %v1527
  %v1574 = vadd.f32 %v1443, %v1537
  %v1575 = vadd.f32 %v1444, %v1535
  %v1576 = vadd.f32 %v1445, %v1538
  %v1577 = vadd.f32 %v1446, %v1534
  %v1578 = vadd.f32 %v1447, %v1539
  %v1579 = vadd.f32 %v1448, %v1536
  %v1580 = vadd.f32 %v1449, %v1540
  %v1581 = vadd.f32 %v1450, %v1527
  %v1582 = vadd.f32 %v1451, %v1537
  %v1583 = vadd.f32 %v1452, %v1535
  %v1584 = vadd.f32 %v1453, %v1538
  %v1585 = vadd.f32 %v1454, %v1527
  %v1586 = vadd.f32 %v1455, %v1537
  %v1587 = vadd.f32 %v1456, %v1535
  %v1588 = vadd.f32 %v1457, %v1538
  %v1589 = vadd.f32 %v1458, %v1534
  %v1590 = vadd.f32 %v1459, %v1539
  %v1591 = vadd.f32 %v1460, %v1536
  %v1592 = vadd.f32 %v1461, %v1540
  %v1593 = vadd.f32 %v1462, %v1527
  %v1594 = vadd.f32 %v1463, %v1537
  %v1595 = vadd.f32 %v1464, %v1535
  %v1596 = vadd.f32 %v1465, %v1538
  %v1597 = vadd.f32 %v1466, %v1527
  %v1598 = vadd.f32 %v1467, %v1537
  %v1599 = vadd.f32 %v1468, %v1535
  %v1600 = vadd.f32 %v1469, %v1538
  %v1601 = vadd.f32 %v1470, %v1534
  %v1602 = vadd.f32 %v1471, %v1539
  %v1603 = vadd.f32 %v1472, %v1536
  %v1604 = vadd.f32 %v1473, %v1540
  %v1605 = vadd.f32 %v1474, %v1527
  %v1606 = vadd.f32 %v1475, %v1537
  %v1607 = vadd.f32 %v1476, %v1535
  %v1608 = vadd.f32 %v1477, %v1538
  %v1609 = vadd.f32 %v1478, %v1527
  %v1610 = vadd.f32 %v1479, %v1537
  %v1611 = vadd.f32 %v1480, %v1535
  %v1612 = vadd.f32 %v1481, %v1538
  %v1613 = vadd.f32 %v1482, %v1534
  %v1614 = vadd.f32 %v1483, %v1539
  %v1615 = vadd.f32 %v1484, %v1536
  %v1616 = vadd.f32 %v1485, %v1540
  %v1617 = vadd.f32 %v1486, %v1527
  %v1618 = vadd.f32 %v1487, %v1537
  %v1619 = vadd.f32 %v1488, %v1535
  %v1620 = vadd.f32 %v1489, %v1538
  %v1621 = vadd.f32 %v1490, %v1527
  %v1622 = vadd.f32 %v1491, %v1537
  %v1623 = vadd.f32 %v1492, %v1535
  %v1624 = vadd.f32 %v1493, %v1538
  %v1625 = vadd.f32 %v1494, %v1534
  %v1626 = vadd.f32 %v1495, %v1539
  %v1627 = vadd.f32 %v1496, %v1536
  %v1628 = vadd.f32 %v1497, %v1540
  %v1629 = vadd.f32 %v1498, %v1527
  %v1630 = vadd.f32 %v1499, %v1537
  %v1631 = vadd.f32 %v1500, %v1535
  %v1632 = vadd.f32 %v1501, %v1538
  %v1633 = vadd.f32 %v1502, %v1527
  %v1634 = vadd.f32 %v1503, %v1537
  %v1635 = vadd.f32 %v1504, %v1535
  %v1636 = vadd.f32 %v1505, %v1538
  %v1637 = vadd.f32 %v1506, %v1534
  %v1638 = vadd.f32 %v1507, %v1539
  %v1639 = vadd.f32 %v1508, %v1536
  %v1640 = vadd.f32 %v1509, %v1540
  %v1641 = vadd.f32 %v1510, %v1527
  %v1642 = vadd.f32 %v1511, %v1537
  %v1643 = vadd.f32 %v1512, %v1535
  %v1644 = vadd.f32 %v1513, %v1538
  %v1645 = vmax.f32 %v1549, 0.0
  %v1646 = vmax.f32 %v1550, 0.0
  %v1647 = vmax.f32 %v1551, 0.0
  %v1648 = vmax.f32 %v1552, 0.0
  %v1649 = vmax.f32 %v1553, 0.0
  %v1650 = vmax.f32 %v1554, 0.0
  %v1651 = vmax.f32 %v1555, 0.0
  %v1652 = vmax.f32 %v1556, 0.0
  %v1653 = vmax.f32 %v1557, 0.0
  %v1654 = vmax.f32 %v1558, 0.0
  %v1655 = vmax.f32 %v1559, 0.0
  %v1656 = vmax.f32 %v1560, 0.0
  %v1657 = vmax.f32 %v1561, 0.0
  %v1658 = vmax.f32 %v1562, 0.0
  %v1659 = vmax.f32 %v1563, 0.0
  %v1660 = vmax.f32 %v1564, 0.0
  %v1661 = vmax.f32 %v1565, 0.0
  %v1662 = vmax.f32 %v1566, 0.0
  %v1663 = vmax.f32 %v1567, 0.0
  %v1664 = vmax.f32 %v1568, 0.0
  %v1665 = vmax.f32 %v1569, 0.0
  %v1666 = vmax.f32 %v1570, 0.0
  %v1667 = vmax.f32 %v1571, 0.0
  %v1668 = vmax.f32 %v1572, 0.0
  %v1669 = vmax.f32 %v1573, 0.0
  %v1670 = vmax.f32 %v1574, 0.0
  %v1671 = vmax.f32 %v1575, 0.0
  %v1672 = vmax.f32 %v1576, 0.0
  %v1673 = vmax.f32 %v1577, 0.0
  %v1674 = vmax.f32 %v1578, 0.0
  %v1675 = vmax.f32 %v1579, 0.0
  %v1676 = vmax.f32 %v1580, 0.0
  %v1677 = vmax.f32 %v1581, 0.0
  %v1678 = vmax.f32 %v1582, 0.0
  %v1679 = vmax.f32 %v1583, 0.0
  %v1680 = vmax.f32 %v1584, 0.0
  %v1681 = vmax.f32 %v1585, 0.0
  %v1682 = vmax.f32 %v1586, 0.0
  %v1683 = vmax.f32 %v1587, 0.0
  %v1684 = vmax.f32 %v1588, 0.0
  %v1685 = vmax.f32 %v1589, 0.0
  %v1686 = vmax.f32 %v1590, 0.0
  %v1687 = vmax.f32 %v1591, 0.0
  %v1688 = vmax.f32 %v1592, 0.0
  %v1689 = vmax.f32 %v1593, 0.0
  %v1690 = vmax.f32 %v1594, 0.0
  %v1691 = vmax.f32 %v1595, 0.0
  %v1692 = vmax.f32 %v1596, 0.0
  %v1693 = vmax.f32 %v1597, 0.0
  %v1694 = vmax.f32 %v1598, 0.0
  %v1695 = vmax.f32 %v1599, 0.0
  %v1696 = vmax.f32 %v1600, 0.0
  %v1697 = vmax.f32 %v1601, 0.0
  %v1698 = vmax.f32 %v1602, 0.0
  %v1699 = vmax.f32 %v1603, 0.0
  %v1700 = vmax.f32 %v1604, 0.0
  %v1701 = vmax.f32 %v1605, 0.0
  %v1702 = vmax.f32 %v1606, 0.0
  %v1703 = vmax.f32 %v1607, 0.0
  %v1704 = vmax.f32 %v1608, 0.0
  %v1705 = vmax.f32 %v1609, 0.0
  %v1706 = vmax.f32 %v1610, 0.0
  %v1707 = vmax.f32 %v1611, 0.0
  %v1708 = vmax.f32 %v1612, 0.0
  %v1709 = vmax.f32 %v1613, 0.0
  %v1710 = vmax.f32 %v1614, 0.0
  %v1711 = vmax.f32 %v1615, 0.0
  %v1712 = vmax.f32 %v1616, 0.0
  %v1713 = vmax.f32 %v1617, 0.0
  %v1714 = vmax.f32 %v1618, 0.0
  %v1715 = vmax.f32 %v1619, 0.0
  %v1716 = vmax.f32 %v1620, 0.0
  %v1717 = vmax.f32 %v1621, 0.0
  %v1718 = vmax.f32 %v1622, 0.0
  %v1719 = vmax.f32 %v1623, 0.0
  %v1720 = vmax.f32 %v1624, 0.0
  %v1721 = vmax.f32 %v1625, 0.0
  %v1722 = vmax.f32 %v1626, 0.0
  %v1723 = vmax.f32 %v1627, 0.0
  %v1724 = vmax.f32 %v1628, 0.0
  %v1725 = vmax.f32 %v1629, 0.0
  %v1726 = vmax.f32 %v1630, 0.0
  %v1727 = vmax.f32 %v1631, 0.0
  %v1728 = vmax.f32 %v1632, 0.0
  %v1729 = vmax.f32 %v1633, 0.0
  %v1730 = vmax.f32 %v1634, 0.0
  %v1731 = vmax.f32 %v1635, 0.0
  %v1732 = vmax.f32 %v1636, 0.0
  %v1733 = vmax.f32 %v1637, 0.0
  %v1734 = vmax.f32 %v1638, 0.0
  %v1735 = vmax.f32 %v1639, 0.0
  %v1736 = vmax.f32 %v1640, 0.0
  %v1737 = vmax.f32 %v1641, 0.0
  %v1738 = vmax.f32 %v1642, 0.0
  %v1739 = vmax.f32 %v1643, 0.0
  %v1740 = vmax.f32 %v1644, 0.0
  %v1741 = vld [vmem:[%s4] sm:$0xff]
  %v1742 = vld [vmem:[%s4 + $0x8] sm:$0xff]
  %v1743 = vld [vmem:[%s4 + $0x10] sm:$0xff]
  %v1744 = vld [vmem:[%s4 + $0x18] sm:$0xff]
  %v1745 = vld [vmem:[%s4 + $0x20] sm:$0xff]
  %v1746 = vld [vmem:[%s4 + $0x28] sm:$0xff]
  %v1747 = vld [vmem:[%s4 + $0x30] sm:$0xff]
  %v1748 = vld [vmem:[%s4 + $0x38] sm:$0xff]
  %v1749 = vld [vmem:[%s4 + $0x40] sm:$0xff]
  %v1750 = vld [vmem:[%s5] sm:$0xff]
  %v1751 = vld [vmem:[%s5 + $0x8] sm:$0xff]
  %v1752 = vld [vmem:[%s5 + $0x10] sm:$0xff]
  %v1753 = vld [vmem:[%s5 + $0x18] sm:$0xff]
  %v1754 = vld [vmem:[%s5 + $0x20] sm:$0xff]
  %v1755 = vld [vmem:[%s5 + $0x28] sm:$0xff]
  %v1756 = vld [vmem:[%s5 + $0x30] sm:$0xff]
  %v1757 = vld [vmem:[%s5 + $0x38] sm:$0xff]
  %v1758 = vld [vmem:[%s5 + $0x40] sm:$0xff]
  %s1759 = scalar_lea.vmem %s4, 72
  %v1760 = vld [vmem:[%s1759] sm:$0xff]
  %v1761 = vld [vmem:[%s1759 + $0x8] sm:$0xff]
  %v1762 = vld [vmem:[%s1759 + $0x10] sm:$0xff]
  %v1763 = vld [vmem:[%s1759 + $0x18] sm:$0xff]
  %v1764 = vld [vmem:[%s1759 + $0x20] sm:$0xff]
  %v1765 = vld [vmem:[%s1759 + $0x28] sm:$0xff]
  %v1766 = vld [vmem:[%s1759 + $0x30] sm:$0xff]
  %v1767 = vld [vmem:[%s1759 + $0x38] sm:$0xff]
  %v1768 = vld [vmem:[%s1759 + $0x40] sm:$0xff]
  %v1833 = vlaneseq
  %v1834 = vshrl.u32 %v1833, 7
  %v1835 = vsub.s32 0, %v1834
  %v1836 = vrot.slane %v1646, %v1835
  %v1837 = vlaneseq
  %v1838 = vshrl.u32 %v1837, 7
  %v1839 = vsub.s32 0, %v1838
  %v1840 = vrot.slane %v1647, %v1839
  %v1841 = vlaneseq
  %v1842 = vshrl.u32 %v1841, 7
  %v1843 = vsub.s32 0, %v1842
  %v1844 = vrot.slane %v1648, %v1843
  %v1845 = vlaneseq
  %v1846 = vshrl.u32 %v1845, 7
  %v1847 = vsub.s32 0, %v1846
  %v1848 = vrot.slane %v1649, %v1847
  %v1849 = vlaneseq
  %v1850 = vshrl.u32 %v1849, 7
  %v1851 = vsub.s32 0, %v1850
  %v1852 = vrot.slane %v1650, %v1851
  %v1853 = vlaneseq
  %v1854 = vshrl.u32 %v1853, 7
  %v1855 = vsub.s32 0, %v1854
  %v1856 = vrot.slane %v1651, %v1855
  %v1857 = vlaneseq
  %v1858 = vshrl.u32 %v1857, 7
  %v1859 = vsub.s32 0, %v1858
  %v1860 = vrot.slane %v1652, %v1859
  %v1861 = vlaneseq
  %v1862 = vshrl.u32 %v1861, 7
  %v1863 = vsub.s32 0, %v1862
  %v1864 = vrot.slane %v1653, %v1863
  %v1865 = vlaneseq
  %v1866 = vshrl.u32 %v1865, 7
  %v1867 = vsub.s32 0, %v1866
  %v1868 = vrot.slane %v1658, %v1867
  %v1869 = vlaneseq
  %v1870 = vshrl.u32 %v1869, 7
  %v1871 = vsub.s32 0, %v1870
  %v1872 = vrot.slane %v1659, %v1871
  %v1873 = vlaneseq
  %v1874 = vshrl.u32 %v1873, 7
  %v1875 = vsub.s32 0, %v1874
  %v1876 = vrot.slane %v1660, %v1875
  %v1877 = vlaneseq
  %v1878 = vshrl.u32 %v1877, 7
  %v1879 = vsub.s32 0, %v1878
  %v1880 = vrot.slane %v1661, %v1879
  %v1881 = vlaneseq
  %v1882 = vshrl.u32 %v1881, 7
  %v1883 = vsub.s32 0, %v1882
  %v1884 = vrot.slane %v1662, %v1883
  %v1885 = vlaneseq
  %v1886 = vshrl.u32 %v1885, 7
  %v1887 = vsub.s32 0, %v1886
  %v1888 = vrot.slane %v1663, %v1887
  %v1889 = vlaneseq
  %v1890 = vshrl.u32 %v1889, 7
  %v1891 = vsub.s32 0, %v1890
  %v1892 = vrot.slane %v1664, %v1891
  %v1893 = vlaneseq
  %v1894 = vshrl.u32 %v1893, 7
  %v1895 = vsub.s32 0, %v1894
  %v1896 = vrot.slane %v1665, %v1895
  %v1897 = vlaneseq
  %v1898 = vshrl.u32 %v1897, 7
  %v1899 = vsub.s32 0, %v1898
  %v1900 = vrot.slane %v1670, %v1899
  %v1901 = vlaneseq
  %v1902 = vshrl.u32 %v1901, 7
  %v1903 = vsub.s32 0, %v1902
  %v1904 = vrot.slane %v1671, %v1903
  %v1905 = vlaneseq
  %v1906 = vshrl.u32 %v1905, 7
  %v1907 = vsub.s32 0, %v1906
  %v1908 = vrot.slane %v1672, %v1907
  %v1909 = vlaneseq
  %v1910 = vshrl.u32 %v1909, 7
  %v1911 = vsub.s32 0, %v1910
  %v1912 = vrot.slane %v1673, %v1911
  %v1913 = vlaneseq
  %v1914 = vshrl.u32 %v1913, 7
  %v1915 = vsub.s32 0, %v1914
  %v1916 = vrot.slane %v1674, %v1915
  %v1917 = vlaneseq
  %v1918 = vshrl.u32 %v1917, 7
  %v1919 = vsub.s32 0, %v1918
  %v1920 = vrot.slane %v1675, %v1919
  %v1921 = vlaneseq
  %v1922 = vshrl.u32 %v1921, 7
  %v1923 = vsub.s32 0, %v1922
  %v1924 = vrot.slane %v1676, %v1923
  %v1925 = vlaneseq
  %v1926 = vshrl.u32 %v1925, 7
  %v1927 = vsub.s32 0, %v1926
  %v1928 = vrot.slane %v1677, %v1927
  %v1929 = vlaneseq
  %v1930 = vshrl.u32 %v1929, 7
  %v1931 = vsub.s32 0, %v1930
  %v1932 = vrot.slane %v1682, %v1931
  %v1933 = vlaneseq
  %v1934 = vshrl.u32 %v1933, 7
  %v1935 = vsub.s32 0, %v1934
  %v1936 = vrot.slane %v1683, %v1935
  %v1937 = vlaneseq
  %v1938 = vshrl.u32 %v1937, 7
  %v1939 = vsub.s32 0, %v1938
  %v1940 = vrot.slane %v1684, %v1939
  %v1941 = vlaneseq
  %v1942 = vshrl.u32 %v1941, 7
  %v1943 = vsub.s32 0, %v1942
  %v1944 = vrot.slane %v1685, %v1943
  %v1945 = vlaneseq
  %v1946 = vshrl.u32 %v1945, 7
  %v1947 = vsub.s32 0, %v1946
  %v1948 = vrot.slane %v1686, %v1947
  %v1949 = vlaneseq
  %v1950 = vshrl.u32 %v1949, 7
  %v1951 = vsub.s32 0, %v1950
  %v1952 = vrot.slane %v1687, %v1951
  %v1953 = vlaneseq
  %v1954 = vshrl.u32 %v1953, 7
  %v1955 = vsub.s32 0, %v1954
  %v1956 = vrot.slane %v1688, %v1955
  %v1957 = vlaneseq
  %v1958 = vshrl.u32 %v1957, 7
  %v1959 = vsub.s32 0, %v1958
  %v1960 = vrot.slane %v1689, %v1959
  %v1961 = vlaneseq
  %v1962 = vshrl.u32 %v1961, 7
  %v1963 = vsub.s32 0, %v1962
  %v1964 = vrot.slane %v1694, %v1963
  %v1965 = vlaneseq
  %v1966 = vshrl.u32 %v1965, 7
  %v1967 = vsub.s32 0, %v1966
  %v1968 = vrot.slane %v1695, %v1967
  %v1969 = vlaneseq
  %v1970 = vshrl.u32 %v1969, 7
  %v1971 = vsub.s32 0, %v1970
  %v1972 = vrot.slane %v1696, %v1971
  %v1973 = vlaneseq
  %v1974 = vshrl.u32 %v1973, 7
  %v1975 = vsub.s32 0, %v1974
  %v1976 = vrot.slane %v1697, %v1975
  %v1977 = vlaneseq
  %v1978 = vshrl.u32 %v1977, 7
  %v1979 = vsub.s32 0, %v1978
  %v1980 = vrot.slane %v1698, %v1979
  %v1981 = vlaneseq
  %v1982 = vshrl.u32 %v1981, 7
  %v1983 = vsub.s32 0, %v1982
  %v1984 = vrot.slane %v1699, %v1983
  %v1985 = vlaneseq
  %v1986 = vshrl.u32 %v1985, 7
  %v1987 = vsub.s32 0, %v1986
  %v1988 = vrot.slane %v1700, %v1987
  %v1989 = vlaneseq
  %v1990 = vshrl.u32 %v1989, 7
  %v1991 = vsub.s32 0, %v1990
  %v1992 = vrot.slane %v1701, %v1991
  %v1993 = vlaneseq
  %v1994 = vshrl.u32 %v1993, 7
  %v1995 = vsub.s32 0, %v1994
  %v1996 = vrot.slane %v1706, %v1995
  %v1997 = vlaneseq
  %v1998 = vshrl.u32 %v1997, 7
  %v1999 = vsub.s32 0, %v1998
  %v2000 = vrot.slane %v1707, %v1999
  %v2001 = vlaneseq
  %v2002 = vshrl.u32 %v2001, 7
  %v2003 = vsub.s32 0, %v2002
  %v2004 = vrot.slane %v1708, %v2003
  %v2005 = vlaneseq
  %v2006 = vshrl.u32 %v2005, 7
  %v2007 = vsub.s32 0, %v2006
  %v2008 = vrot.slane %v1709, %v2007
  %v2009 = vlaneseq
  %v2010 = vshrl.u32 %v2009, 7
  %v2011 = vsub.s32 0, %v2010
  %v2012 = vrot.slane %v1710, %v2011
  %v2013 = vlaneseq
  %v2014 = vshrl.u32 %v2013, 7
  %v2015 = vsub.s32 0, %v2014
  %v2016 = vrot.slane %v1711, %v2015
  %v2017 = vlaneseq
  %v2018 = vshrl.u32 %v2017, 7
  %v2019 = vsub.s32 0, %v2018
  %v2020 = vrot.slane %v1712, %v2019
  %v2021 = vlaneseq
  %v2022 = vshrl.u32 %v2021, 7
  %v2023 = vsub.s32 0, %v2022
  %v2024 = vrot.slane %v1713, %v2023
  %v2025 = vlaneseq
  %v2026 = vshrl.u32 %v2025, 7
  %v2027 = vsub.s32 0, %v2026
  %v2028 = vrot.slane %v1718, %v2027
  %v2029 = vlaneseq
  %v2030 = vshrl.u32 %v2029, 7
  %v2031 = vsub.s32 0, %v2030
  %v2032 = vrot.slane %v1719, %v2031
  %v2033 = vlaneseq
  %v2034 = vshrl.u32 %v2033, 7
  %v2035 = vsub.s32 0, %v2034
  %v2036 = vrot.slane %v1720, %v2035
  %v2037 = vlaneseq
  %v2038 = vshrl.u32 %v2037, 7
  %v2039 = vsub.s32 0, %v2038
  %v2040 = vrot.slane %v1721, %v2039
  %v2041 = vlaneseq
  %v2042 = vshrl.u32 %v2041, 7
  %v2043 = vsub.s32 0, %v2042
  %v2044 = vrot.slane %v1722, %v2043
  %v2045 = vlaneseq
  %v2046 = vshrl.u32 %v2045, 7
  %v2047 = vsub.s32 0, %v2046
  %v2048 = vrot.slane %v1723, %v2047
  %v2049 = vlaneseq
  %v2050 = vshrl.u32 %v2049, 7
  %v2051 = vsub.s32 0, %v2050
  %v2052 = vrot.slane %v1724, %v2051
  %v2053 = vlaneseq
  %v2054 = vshrl.u32 %v2053, 7
  %v2055 = vsub.s32 0, %v2054
  %v2056 = vrot.slane %v1725, %v2055
  %v2057 = vlaneseq
  %v2058 = vshrl.u32 %v2057, 7
  %v2059 = vsub.s32 0, %v2058
  %v2060 = vrot.slane %v1730, %v2059
  %v2061 = vlaneseq
  %v2062 = vshrl.u32 %v2061, 7
  %v2063 = vsub.s32 0, %v2062
  %v2064 = vrot.slane %v1731, %v2063
  %v2065 = vlaneseq
  %v2066 = vshrl.u32 %v2065, 7
  %v2067 = vsub.s32 0, %v2066
  %v2068 = vrot.slane %v1732, %v2067
  %v2069 = vlaneseq
  %v2070 = vshrl.u32 %v2069, 7
  %v2071 = vsub.s32 0, %v2070
  %v2072 = vrot.slane %v1733, %v2071
  %v2073 = vlaneseq
  %v2074 = vshrl.u32 %v2073, 7
  %v2075 = vsub.s32 0, %v2074
  %v2076 = vrot.slane %v1734, %v2075
  %v2077 = vlaneseq
  %v2078 = vshrl.u32 %v2077, 7
  %v2079 = vsub.s32 0, %v2078
  %v2080 = vrot.slane %v1735, %v2079
  %v2081 = vlaneseq
  %v2082 = vshrl.u32 %v2081, 7
  %v2083 = vsub.s32 0, %v2082
  %v2084 = vrot.slane %v1736, %v2083
  %v2085 = vlaneseq
  %v2086 = vshrl.u32 %v2085, 7
  %v2087 = vsub.s32 0, %v2086
  %v2088 = vrot.slane %v1737, %v2087
  %vm2089 = vcmask 1041409
  %v2090 = vsel %vm2089, %v1840, %v1836
  %vm2091 = vcmask 1042434
  %v2092 = vsel %vm2091, %v1844, %v2090
  %vm2093 = vcmask 1043459
  %v2094 = vsel %vm2093, %v1848, %v2092
  %vm2095 = vcmask 1044484
  %v2096 = vsel %vm2095, %v1852, %v2094
  %vm2097 = vcmask 1045509
  %v2098 = vsel %vm2097, %v1856, %v2096
  %vm2099 = vcmask 1046534
  %v2100 = vsel %vm2099, %v1860, %v2098
  %vm2101 = vcmask 1047559
  %v2102 = vsel %vm2101, %v1864, %v2100
  %v2103 = vsel %vm2089, %v1872, %v1868
  %v2104 = vsel %vm2091, %v1876, %v2103
  %v2105 = vsel %vm2093, %v1880, %v2104
  %v2106 = vsel %vm2095, %v1884, %v2105
  %v2107 = vsel %vm2097, %v1888, %v2106
  %v2108 = vsel %vm2099, %v1892, %v2107
  %v2109 = vsel %vm2101, %v1896, %v2108
  %v2110 = vsel %vm2089, %v1904, %v1900
  %v2111 = vsel %vm2091, %v1908, %v2110
  %v2112 = vsel %vm2093, %v1912, %v2111
  %v2113 = vsel %vm2095, %v1916, %v2112
  %v2114 = vsel %vm2097, %v1920, %v2113
  %v2115 = vsel %vm2099, %v1924, %v2114
  %v2116 = vsel %vm2101, %v1928, %v2115
  %v2117 = vsel %vm2089, %v1936, %v1932
  %v2118 = vsel %vm2091, %v1940, %v2117
  %v2119 = vsel %vm2093, %v1944, %v2118
  %v2120 = vsel %vm2095, %v1948, %v2119
  %v2121 = vsel %vm2097, %v1952, %v2120
  %v2122 = vsel %vm2099, %v1956, %v2121
  %v2123 = vsel %vm2101, %v1960, %v2122
  %v2124 = vsel %vm2089, %v1968, %v1964
  %v2125 = vsel %vm2091, %v1972, %v2124
  %v2126 = vsel %vm2093, %v1976, %v2125
  %v2127 = vsel %vm2095, %v1980, %v2126
  %v2128 = vsel %vm2097, %v1984, %v2127
  %v2129 = vsel %vm2099, %v1988, %v2128
  %v2130 = vsel %vm2101, %v1992, %v2129
  %v2131 = vsel %vm2089, %v2000, %v1996
  %v2132 = vsel %vm2091, %v2004, %v2131
  %v2133 = vsel %vm2093, %v2008, %v2132
  %v2134 = vsel %vm2095, %v2012, %v2133
  %v2135 = vsel %vm2097, %v2016, %v2134
  %v2136 = vsel %vm2099, %v2020, %v2135
  %v2137 = vsel %vm2101, %v2024, %v2136
  %v2138 = vsel %vm2089, %v2032, %v2028
  %v2139 = vsel %vm2091, %v2036, %v2138
  %v2140 = vsel %vm2093, %v2040, %v2139
  %v2141 = vsel %vm2095, %v2044, %v2140
  %v2142 = vsel %vm2097, %v2048, %v2141
  %v2143 = vsel %vm2099, %v2052, %v2142
  %v2144 = vsel %vm2101, %v2056, %v2143
  %v2145 = vsel %vm2089, %v2064, %v2060
  %v2146 = vsel %vm2091, %v2068, %v2145
  %v2147 = vsel %vm2093, %v2072, %v2146
  %v2148 = vsel %vm2095, %v2076, %v2147
  %v2149 = vsel %vm2097, %v2080, %v2148
  %v2150 = vsel %vm2099, %v2084, %v2149
  %v2151 = vsel %vm2101, %v2088, %v2150
  %vm2152 = vcmask 588800
  %v2153 = vsel %vm2152, %v2102, 0
  %v2155 = vsel %vm2152, %v2109, 0
  %v2157 = vsel %vm2152, %v2116, 0
  %v2159 = vsel %vm2152, %v2123, 0
  %v2161 = vsel %vm2152, %v2130, 0
  %v2163 = vsel %vm2152, %v2137, 0
  %v2165 = vsel %vm2152, %v2144, 0
  %v2167 = vsel %vm2152, %v2151, 0
  %2169 = vmatprep.subr.mxu0 0.0
  %2170 = vmatpush1.msra.mxu0 %v1760
  %2171 = vmatprep.subr.mxu0 0.0
  %2172 = vmatpush1.msra.mxu0 %v1761
  %2173 = vmatprep.subr.mxu0 0.0
  %2174 = vmatpush1.msra.mxu0 %v1762
  %2175 = vmatprep.subr.mxu0 0.0
  %2176 = vmatpush1.msra.mxu0 %v1763
  %2177 = vmatprep.subr.mxu0 0.0
  %2178 = vmatpush1.msra.mxu0 %v1764
  %2179 = vmatprep.subr.mxu0 0.0
  %2180 = vmatpush1.msra.mxu0 %v1765
  %2181 = vmatprep.subr.mxu0 0.0
  %2182 = vmatpush1.msra.mxu0 %v1766
  %2183 = vmatprep.subr.mxu0 0.0
  %2184 = vmatpush1.msra.mxu0 %v1767
  %2185 = vmatprep.subr.mxu0 0.0
  %2186 = vmatpush1.msra.mxu0 %v1768
  %2187 = vmatprep.subr.mxu0 0.0
  %2188 = vmatpush1.msra.mxu0 0.0
  %2189 = vmatprep.subr.mxu0 0.0
  %2190 = vmatpush1.msra.mxu0 0.0
  %2191 = vmatprep.subr.mxu0 0.0
  %2192 = vmatpush1.msra.mxu0 0.0
  %2193 = vmatprep.subr.mxu0 0.0
  %2194 = vmatpush1.msra.mxu0 0.0
  %2195 = vmatprep.subr.mxu0 0.0
  %2196 = vmatpush1.msra.mxu0 0.0
  %2197 = vmatprep.subr.mxu0 0.0
  %2198 = vmatpush1.msra.mxu0 0.0
  %2199 = vmatprep.subr.mxu0 0.0
  %2200 = vmatpush1.msra.mxu0 0.0
  %2201 = vmatprep.subr.mxu0 0.0
  %2202 = vmatpush1.msra.mxu0 0.0
  %2203 = vmatprep.subr.mxu0 0.0
  %2204 = vmatpush1.msra.mxu0 0.0
  %2205 = vmatprep.subr.mxu0 0.0
  %2206 = vmatpush1.msra.mxu0 0.0
  %2207 = vmatprep.subr.mxu0 0.0
  %2208 = vmatpush1.msra.mxu0 0.0
  %2209 = vmatprep.subr.mxu0 0.0
  %2210 = vmatpush1.msra.mxu0 0.0
  %2211 = vmatprep.subr.mxu0 0.0
  %2212 = vmatpush1.msra.mxu0 0.0
  %2213 = vmatprep.subr.mxu0 0.0
  %2214 = vmatpush1.msra.mxu0 0.0
  %2215 = vmatprep.subr.mxu0 0.0
  %2216 = vmatpush1.msra.mxu0 0.0
  %2217 = vmatprep.subr.mxu0 0.0
  %2218 = vmatpush1.msra.mxu0 0.0
  %2219 = vmatprep.subr.mxu0 0.0
  %2220 = vmatpush1.msra.mxu0 0.0
  %2221 = vmatprep.subr.mxu0 0.0
  %2222 = vmatpush1.msra.mxu0 0.0
  %2223 = vmatprep.subr.mxu0 0.0
  %2224 = vmatpush1.msra.mxu0 0.0
  %2225 = vmatprep.subr.mxu0 0.0
  %2226 = vmatpush1.msra.mxu0 0.0
  %2227 = vmatprep.subr.mxu0 0.0
  %2228 = vmatpush1.msra.mxu0 0.0
  %2229 = vmatprep.subr.mxu0 0.0
  %2230 = vmatpush1.msra.mxu0 0.0
  %2231 = vmatprep.subr.mxu0 0.0
  %2232 = vmatpush1.msra.mxu0 0.0
  %2233 = vmatprep.mubr.f32.mxu0 0.0
  %2234 = vmatmul.mubr.f32.gmra.mrb[0].mxu0 %v2153
  %v2235 = vpop.f32.mrb[0].mxu0
  %v2236 = vadd.f32 0.0, %v2235
  %v2237 = vpop.f32.mrb[0].mxu0
  %2238 = vmatprep.mubr.f32.mxu0 0.0
  %2239 = vmatmul.mubr.f32.gmra.mrb[0].mxu0 %v2155
  %v2240 = vpop.f32.mrb[0].mxu0
  %v2241 = vadd.f32 0.0, %v2240
  %v2242 = vpop.f32.mrb[0].mxu0
  %2243 = vmatprep.mubr.f32.mxu0 0.0
  %2244 = vmatmul.mubr.f32.gmra.mrb[0].mxu0 %v2157
  %v2245 = vpop.f32.mrb[0].mxu0
  %v2246 = vadd.f32 0.0, %v2245
  %v2247 = vpop.f32.mrb[0].mxu0
  %2248 = vmatprep.mubr.f32.mxu0 0.0
  %2249 = vmatmul.mubr.f32.gmra.mrb[0].mxu0 %v2159
  %v2250 = vpop.f32.mrb[0].mxu0
  %v2251 = vadd.f32 0.0, %v2250
  %v2252 = vpop.f32.mrb[0].mxu0
  %2253 = vmatprep.mubr.f32.mxu0 0.0
  %2254 = vmatmul.mubr.f32.gmra.mrb[0].mxu0 %v2161
  %v2255 = vpop.f32.mrb[0].mxu0
  %v2256 = vadd.f32 0.0, %v2255
  %v2257 = vpop.f32.mrb[0].mxu0
  %2258 = vmatprep.mubr.f32.mxu0 0.0
  %2259 = vmatmul.mubr.f32.gmra.mrb[0].mxu0 %v2163
  %v2260 = vpop.f32.mrb[0].mxu0
  %v2261 = vadd.f32 0.0, %v2260
  %v2262 = vpop.f32.mrb[0].mxu0
  %2263 = vmatprep.mubr.f32.mxu0 0.0
  %2264 = vmatmul.mubr.f32.gmra.mrb[0].mxu0 %v2165
  %v2265 = vpop.f32.mrb[0].mxu0
  %v2266 = vadd.f32 0.0, %v2265
  %v2267 = vpop.f32.mrb[0].mxu0
  %2268 = vmatprep.mubr.f32.mxu0 0.0
  %2269 = vmatmul.mubr.f32.gmra.mrb[0].mxu0 %v2167
  %v2270 = vpop.f32.mrb[0].mxu0
  %v2271 = vadd.f32 0.0, %v2270
  %v2272 = vpop.f32.mrb[0].mxu0
  %2273 = vdwg.mxu0
  %v2282 = vlaneseq
  %v2283 = vshrl.u32 %v2282, 7
  %v2284 = vsub.s32 0, %v2283
  %v2285 = vrot.slane %v1645, %v2284
  %v2286 = vlaneseq
  %v2287 = vshrl.u32 %v2286, 7
  %v2288 = vsub.s32 0, %v2287
  %v2289 = vrot.slane %v1657, %v2288
  %v2290 = vlaneseq
  %v2291 = vshrl.u32 %v2290, 7
  %v2292 = vsub.s32 0, %v2291
  %v2293 = vrot.slane %v1669, %v2292
  %v2294 = vlaneseq
  %v2295 = vshrl.u32 %v2294, 7
  %v2296 = vsub.s32 0, %v2295
  %v2297 = vrot.slane %v1681, %v2296
  %v2298 = vlaneseq
  %v2299 = vshrl.u32 %v2298, 7
  %v2300 = vsub.s32 0, %v2299
  %v2301 = vrot.slane %v1693, %v2300
  %v2302 = vlaneseq
  %v2303 = vshrl.u32 %v2302, 7
  %v2304 = vsub.s32 0, %v2303
  %v2305 = vrot.slane %v1705, %v2304
  %v2306 = vlaneseq
  %v2307 = vshrl.u32 %v2306, 7
  %v2308 = vsub.s32 0, %v2307
  %v2309 = vrot.slane %v1717, %v2308
  %v2310 = vlaneseq
  %v2311 = vshrl.u32 %v2310, 7
  %v2312 = vsub.s32 0, %v2311
  %v2313 = vrot.slane %v1729, %v2312
  %v2314 = vsel %vm2089, %v1836, %v2285
  %v2315 = vsel %vm2091, %v1840, %v2314
  %v2316 = vsel %vm2093, %v1844, %v2315
  %v2317 = vsel %vm2095, %v1848, %v2316
  %v2318 = vsel %vm2097, %v1852, %v2317
  %v2319 = vsel %vm2099, %v1856, %v2318
  %v2320 = vsel %vm2101, %v1860, %v2319
  %v2321 = vsel %vm2089, %v1868, %v2289
  %v2322 = vsel %vm2091, %v1872, %v2321
  %v2323 = vsel %vm2093, %v1876, %v2322
  %v2324 = vsel %vm2095, %v1880, %v2323
  %v2325 = vsel %vm2097, %v1884, %v2324
  %v2326 = vsel %vm2099, %v1888, %v2325
  %v2327 = vsel %vm2101, %v1892, %v2326
  %v2328 = vsel %vm2089, %v1900, %v2293
  %v2329 = vsel %vm2091, %v1904, %v2328
  %v2330 = vsel %vm2093, %v1908, %v2329
  %v2331 = vsel %vm2095, %v1912, %v2330
  %v2332 = vsel %vm2097, %v1916, %v2331
  %v2333 = vsel %vm2099, %v1920, %v2332
  %v2334 = vsel %vm2101, %v1924, %v2333
  %v2335 = vsel %vm2089, %v1932, %v2297
  %v2336 = vsel %vm2091, %v1936, %v2335
  %v2337 = vsel %vm2093, %v1940, %v2336
  %v2338 = vsel %vm2095, %v1944, %v2337
  %v2339 = vsel %vm2097, %v1948, %v2338
  %v2340 = vsel %vm2099, %v1952, %v2339
  %v2341 = vsel %vm2101, %v1956, %v2340
  %v2342 = vsel %vm2089, %v1964, %v2301
  %v2343 = vsel %vm2091, %v1968, %v2342
  %v2344 = vsel %vm2093, %v1972, %v2343
  %v2345 = vsel %vm2095, %v1976, %v2344
  %v2346 = vsel %vm2097, %v1980, %v2345
  %v2347 = vsel %vm2099, %v1984, %v2346
  %v2348 = vsel %vm2101, %v1988, %v2347
  %v2349 = vsel %vm2089, %v1996, %v2305
  %v2350 = vsel %vm2091, %v2000, %v2349
  %v2351 = vsel %vm2093, %v2004, %v2350
  %v2352 = vsel %vm2095, %v2008, %v2351
  %v2353 = vsel %vm2097, %v2012, %v2352
  %v2354 = vsel %vm2099, %v2016, %v2353
  %v2355 = vsel %vm2101, %v2020, %v2354
  %v2356 = vsel %vm2089, %v2028, %v2309
  %v2357 = vsel %vm2091, %v2032, %v2356
  %v2358 = vsel %vm2093, %v2036, %v2357
  %v2359 = vsel %vm2095, %v2040, %v2358
  %v2360 = vsel %vm2097, %v2044, %v2359
  %v2361 = vsel %vm2099, %v2048, %v2360
  %v2362 = vsel %vm2101, %v2052, %v2361
  %v2363 = vsel %vm2089, %v2060, %v2313
  %v2364 = vsel %vm2091, %v2064, %v2363
  %v2365 = vsel %vm2093, %v2068, %v2364
  %v2366 = vsel %vm2095, %v2072, %v2365
  %v2367 = vsel %vm2097, %v2076, %v2366
  %v2368 = vsel %vm2099, %v2080, %v2367
  %v2369 = vsel %vm2101, %v2084, %v2368
  %v2370 = vsel %vm2152, %v2320, 0
  %v2372 = vsel %vm2152, %v2327, 0
  %v2374 = vsel %vm2152, %v2334, 0
  %v2376 = vsel %vm2152, %v2341, 0
  %v2378 = vsel %vm2152, %v2348, 0
  %v2380 = vsel %vm2152, %v2355, 0
  %v2382 = vsel %vm2152, %v2362, 0
  %v2384 = vsel %vm2152, %v2369, 0
  %2386 = vmatprep.subr.mxu0 0.0
  %2387 = vmatpush1.msra.mxu0 %v1741
  %2388 = vmatprep.subr.mxu0 0.0
  %2389 = vmatpush1.msra.mxu0 %v1742
  %2390 = vmatprep.subr.mxu0 0.0
  %2391 = vmatpush1.msra.mxu0 %v1743
  %2392 = vmatprep.subr.mxu0 0.0
  %2393 = vmatpush1.msra.mxu0 %v1744
  %2394 = vmatprep.subr.mxu0 0.0
  %2395 = vmatpush1.msra.mxu0 %v1745
  %2396 = vmatprep.subr.mxu0 0.0
  %2397 = vmatpush1.msra.mxu0 %v1746
  %2398 = vmatprep.subr.mxu0 0.0
  %2399 = vmatpush1.msra.mxu0 %v1747
  %2400 = vmatprep.subr.mxu0 0.0
  %2401 = vmatpush1.msra.mxu0 %v1748
  %2402 = vmatprep.subr.mxu0 0.0
  %2403 = vmatpush1.msra.mxu0 %v1749
  %2404 = vmatprep.subr.mxu0 0.0
  %2405 = vmatpush1.msra.mxu0 0.0
  %2406 = vmatprep.subr.mxu0 0.0
  %2407 = vmatpush1.msra.mxu0 0.0
  %2408 = vmatprep.subr.mxu0 0.0
  %2409 = vmatpush1.msra.mxu0 0.0
  %2410 = vmatprep.subr.mxu0 0.0
  %2411 = vmatpush1.msra.mxu0 0.0
  %2412 = vmatprep.subr.mxu0 0.0
  %2413 = vmatpush1.msra.mxu0 0.0
  %2414 = vmatprep.subr.mxu0 0.0
  %2415 = vmatpush1.msra.mxu0 0.0
  %2416 = vmatprep.subr.mxu0 0.0
  %2417 = vmatpush1.msra.mxu0 0.0
  %2418 = vmatprep.subr.mxu0 0.0
  %2419 = vmatpush1.msra.mxu0 0.0
  %2420 = vmatprep.subr.mxu0 0.0
  %2421 = vmatpush1.msra.mxu0 0.0
  %2422 = vmatprep.subr.mxu0 0.0
  %2423 = vmatpush1.msra.mxu0 0.0
  %2424 = vmatprep.subr.mxu0 0.0
  %2425 = vmatpush1.msra.mxu0 0.0
  %2426 = vmatprep.subr.mxu0 0.0
  %2427 = vmatpush1.msra.mxu0 0.0
  %2428 = vmatprep.subr.mxu0 0.0
  %2429 = vmatpush1.msra.mxu0 0.0
  %2430 = vmatprep.subr.mxu0 0.0
  %2431 = vmatpush1.msra.mxu0 0.0
  %2432 = vmatprep.subr.mxu0 0.0
  %2433 = vmatpush1.msra.mxu0 0.0
  %2434 = vmatprep.subr.mxu0 0.0
  %2435 = vmatpush1.msra.mxu0 0.0
  %2436 = vmatprep.subr.mxu0 0.0
  %2437 = vmatpush1.msra.mxu0 0.0
  %2438 = vmatprep.subr.mxu0 0.0
  %2439 = vmatpush1.msra.mxu0 0.0
  %2440 = vmatprep.subr.mxu0 0.0
  %2441 = vmatpush1.msra.mxu0 0.0
  %2442 = vmatprep.subr.mxu0 0.0
  %2443 = vmatpush1.msra.mxu0 0.0
  %2444 = vmatprep.subr.mxu0 0.0
  %2445 = vmatpush1.msra.mxu0 0.0
  %2446 = vmatprep.subr.mxu0 0.0
  %2447 = vmatpush1.msra.mxu0 0.0
  %2448 = vmatprep.subr.mxu0 0.0
  %2449 = vmatpush1.msra.mxu0 0.0
  %2450 = vmatprep.mubr.f32.mxu0 0.0
  %2451 = vmatmul.mubr.f32.gmra.mrb[0].mxu0 %v2370
  %v2452 = vpop.f32.mrb[0].mxu0
  %v2453 = vadd.f32 %v2236, %v2452
  %v2454 = vpop.f32.mrb[0].mxu0
  %2455 = vmatprep.mubr.f32.mxu0 0.0
  %2456 = vmatmul.mubr.f32.gmra.mrb[0].mxu0 %v2372
  %v2457 = vpop.f32.mrb[0].mxu0
  %v2458 = vadd.f32 %v2241, %v2457
  %v2459 = vpop.f32.mrb[0].mxu0
  %2460 = vmatprep.mubr.f32.mxu0 0.0
  %2461 = vmatmul.mubr.f32.gmra.mrb[0].mxu0 %v2374
  %v2462 = vpop.f32.mrb[0].mxu0
  %v2463 = vadd.f32 %v2246, %v2462
  %v2464 = vpop.f32.mrb[0].mxu0
  %2465 = vmatprep.mubr.f32.mxu0 0.0
  %2466 = vmatmul.mubr.f32.gmra.mrb[0].mxu0 %v2376
  %v2467 = vpop.f32.mrb[0].mxu0
  %v2468 = vadd.f32 %v2251, %v2467
  %v2469 = vpop.f32.mrb[0].mxu0
  %2470 = vmatprep.mubr.f32.mxu0 0.0
  %2471 = vmatmul.mubr.f32.gmra.mrb[0].mxu0 %v2378
  %v2472 = vpop.f32.mrb[0].mxu0
  %v2473 = vadd.f32 %v2256, %v2472
  %v2474 = vpop.f32.mrb[0].mxu0
  %2475 = vmatprep.mubr.f32.mxu0 0.0
  %2476 = vmatmul.mubr.f32.gmra.mrb[0].mxu0 %v2380
  %v2477 = vpop.f32.mrb[0].mxu0
  %v2478 = vadd.f32 %v2261, %v2477
  %v2479 = vpop.f32.mrb[0].mxu0
  %2480 = vmatprep.mubr.f32.mxu0 0.0
  %2481 = vmatmul.mubr.f32.gmra.mrb[0].mxu0 %v2382
  %v2482 = vpop.f32.mrb[0].mxu0
  %v2483 = vadd.f32 %v2266, %v2482
  %v2484 = vpop.f32.mrb[0].mxu0
  %2485 = vmatprep.mubr.f32.mxu0 0.0
  %2486 = vmatmul.mubr.f32.gmra.mrb[0].mxu0 %v2384
  %v2487 = vpop.f32.mrb[0].mxu0
  %v2488 = vadd.f32 %v2271, %v2487
  %v2489 = vpop.f32.mrb[0].mxu0
  %2490 = vdwg.mxu0
  %s2491 = scalar_lea.vmem %s5, 72
  %v2492 = vld [vmem:[%s2491] sm:$0xff]
  %v2493 = vld [vmem:[%s2491 + $0x8] sm:$0xff]
  %v2494 = vld [vmem:[%s2491 + $0x10] sm:$0xff]
  %v2495 = vld [vmem:[%s2491 + $0x18] sm:$0xff]
  %v2496 = vld [vmem:[%s2491 + $0x20] sm:$0xff]
  %v2497 = vld [vmem:[%s2491 + $0x28] sm:$0xff]
  %v2498 = vld [vmem:[%s2491 + $0x30] sm:$0xff]
  %v2499 = vld [vmem:[%s2491 + $0x38] sm:$0xff]
  %v2500 = vld [vmem:[%s2491 + $0x40] sm:$0xff]
  %2501 = vmatprep.subr.mxu0 0.0
  %2502 = vmatpush1.msra.mxu0 %v2492
  %2503 = vmatprep.subr.mxu0 0.0
  %2504 = vmatpush1.msra.mxu0 %v2493
  %2505 = vmatprep.subr.mxu0 0.0
  %2506 = vmatpush1.msra.mxu0 %v2494
  %2507 = vmatprep.subr.mxu0 0.0
  %2508 = vmatpush1.msra.mxu0 %v2495
  %2509 = vmatprep.subr.mxu0 0.0
  %2510 = vmatpush1.msra.mxu0 %v2496
  %2511 = vmatprep.subr.mxu0 0.0
  %2512 = vmatpush1.msra.mxu0 %v2497
  %2513 = vmatprep.subr.mxu0 0.0
  %2514 = vmatpush1.msra.mxu0 %v2498
  %2515 = vmatprep.subr.mxu0 0.0
  %2516 = vmatpush1.msra.mxu0 %v2499
  %2517 = vmatprep.subr.mxu0 0.0
  %2518 = vmatpush1.msra.mxu0 %v2500
  %2519 = vmatprep.subr.mxu0 0.0
  %2520 = vmatpush1.msra.mxu0 0.0
  %2521 = vmatprep.subr.mxu0 0.0
  %2522 = vmatpush1.msra.mxu0 0.0
  %2523 = vmatprep.subr.mxu0 0.0
  %2524 = vmatpush1.msra.mxu0 0.0
  %2525 = vmatprep.subr.mxu0 0.0
  %2526 = vmatpush1.msra.mxu0 0.0
  %2527 = vmatprep.subr.mxu0 0.0
  %2528 = vmatpush1.msra.mxu0 0.0
  %2529 = vmatprep.subr.mxu0 0.0
  %2530 = vmatpush1.msra.mxu0 0.0
  %2531 = vmatprep.subr.mxu0 0.0
  %2532 = vmatpush1.msra.mxu0 0.0
  %2533 = vmatprep.subr.mxu0 0.0
  %2534 = vmatpush1.msra.mxu0 0.0
  %2535 = vmatprep.subr.mxu0 0.0
  %2536 = vmatpush1.msra.mxu0 0.0
  %2537 = vmatprep.subr.mxu0 0.0
  %2538 = vmatpush1.msra.mxu0 0.0
  %2539 = vmatprep.subr.mxu0 0.0
  %2540 = vmatpush1.msra.mxu0 0.0
  %2541 = vmatprep.subr.mxu0 0.0
  %2542 = vmatpush1.msra.mxu0 0.0
  %2543 = vmatprep.subr.mxu0 0.0
  %2544 = vmatpush1.msra.mxu0 0.0
  %2545 = vmatprep.subr.mxu0 0.0
  %2546 = vmatpush1.msra.mxu0 0.0
  %2547 = vmatprep.subr.mxu0 0.0
  %2548 = vmatpush1.msra.mxu0 0.0
  %2549 = vmatprep.subr.mxu0 0.0
  %2550 = vmatpush1.msra.mxu0 0.0
  %2551 = vmatprep.subr.mxu0 0.0
  %2552 = vmatpush1.msra.mxu0 0.0
  %2553 = vmatprep.subr.mxu0 0.0
  %2554 = vmatpush1.msra.mxu0 0.0
  %2555 = vmatprep.subr.mxu0 0.0
  %2556 = vmatpush1.msra.mxu0 0.0
  %2557 = vmatprep.subr.mxu0 0.0
  %2558 = vmatpush1.msra.mxu0 0.0
  %2559 = vmatprep.subr.mxu0 0.0
  %2560 = vmatpush1.msra.mxu0 0.0
  %2561 = vmatprep.subr.mxu0 0.0
  %2562 = vmatpush1.msra.mxu0 0.0
  %2563 = vmatprep.subr.mxu0 0.0
  %2564 = vmatpush1.msra.mxu0 0.0
  %2565 = vmatprep.mubr.f32.mxu0 0.0
  %2566 = vmatmul.mubr.f32.gmra.mrb[0].mxu0 %v2153
  %v2567 = vpop.f32.mrb[0].mxu0
  %v2568 = vadd.f32 0.0, %v2567
  %v2569 = vpop.f32.mrb[0].mxu0
  %2570 = vmatprep.mubr.f32.mxu0 0.0
  %2571 = vmatmul.mubr.f32.gmra.mrb[0].mxu0 %v2155
  %v2572 = vpop.f32.mrb[0].mxu0
  %v2573 = vadd.f32 0.0, %v2572
  %v2574 = vpop.f32.mrb[0].mxu0
  %2575 = vmatprep.mubr.f32.mxu0 0.0
  %2576 = vmatmul.mubr.f32.gmra.mrb[0].mxu0 %v2157
  %v2577 = vpop.f32.mrb[0].mxu0
  %v2578 = vadd.f32 0.0, %v2577
  %v2579 = vpop.f32.mrb[0].mxu0
  %2580 = vmatprep.mubr.f32.mxu0 0.0
  %2581 = vmatmul.mubr.f32.gmra.mrb[0].mxu0 %v2159
  %v2582 = vpop.f32.mrb[0].mxu0
  %v2583 = vadd.f32 0.0, %v2582
  %v2584 = vpop.f32.mrb[0].mxu0
  %2585 = vmatprep.mubr.f32.mxu0 0.0
  %2586 = vmatmul.mubr.f32.gmra.mrb[0].mxu0 %v2161
  %v2587 = vpop.f32.mrb[0].mxu0
  %v2588 = vadd.f32 0.0, %v2587
  %v2589 = vpop.f32.mrb[0].mxu0
  %2590 = vmatprep.mubr.f32.mxu0 0.0
  %2591 = vmatmul.mubr.f32.gmra.mrb[0].mxu0 %v2163
  %v2592 = vpop.f32.mrb[0].mxu0
  %v2593 = vadd.f32 0.0, %v2592
  %v2594 = vpop.f32.mrb[0].mxu0
  %2595 = vmatprep.mubr.f32.mxu0 0.0
  %2596 = vmatmul.mubr.f32.gmra.mrb[0].mxu0 %v2165
  %v2597 = vpop.f32.mrb[0].mxu0
  %v2598 = vadd.f32 0.0, %v2597
  %v2599 = vpop.f32.mrb[0].mxu0
  %2600 = vmatprep.mubr.f32.mxu0 0.0
  %2601 = vmatmul.mubr.f32.gmra.mrb[0].mxu0 %v2167
  %v2602 = vpop.f32.mrb[0].mxu0
  %v2603 = vadd.f32 0.0, %v2602
  %v2604 = vpop.f32.mrb[0].mxu0
  %2605 = vdwg.mxu0
  %2606 = vmatprep.subr.mxu0 0.0
  %2607 = vmatpush1.msra.mxu0 %v1750
  %2608 = vmatprep.subr.mxu0 0.0
  %2609 = vmatpush1.msra.mxu0 %v1751
  %2610 = vmatprep.subr.mxu0 0.0
  %2611 = vmatpush1.msra.mxu0 %v1752
  %2612 = vmatprep.subr.mxu0 0.0
  %2613 = vmatpush1.msra.mxu0 %v1753
  %2614 = vmatprep.subr.mxu0 0.0
  %2615 = vmatpush1.msra.mxu0 %v1754
  %2616 = vmatprep.subr.mxu0 0.0
  %2617 = vmatpush1.msra.mxu0 %v1755
  %2618 = vmatprep.subr.mxu0 0.0
  %2619 = vmatpush1.msra.mxu0 %v1756
  %2620 = vmatprep.subr.mxu0 0.0
  %2621 = vmatpush1.msra.mxu0 %v1757
  %2622 = vmatprep.subr.mxu0 0.0
  %2623 = vmatpush1.msra.mxu0 %v1758
  %2624 = vmatprep.subr.mxu0 0.0
  %2625 = vmatpush1.msra.mxu0 0.0
  %2626 = vmatprep.subr.mxu0 0.0
  %2627 = vmatpush1.msra.mxu0 0.0
  %2628 = vmatprep.subr.mxu0 0.0
  %2629 = vmatpush1.msra.mxu0 0.0
  %2630 = vmatprep.subr.mxu0 0.0
  %2631 = vmatpush1.msra.mxu0 0.0
  %2632 = vmatprep.subr.mxu0 0.0
  %2633 = vmatpush1.msra.mxu0 0.0
  %2634 = vmatprep.subr.mxu0 0.0
  %2635 = vmatpush1.msra.mxu0 0.0
  %2636 = vmatprep.subr.mxu0 0.0
  %2637 = vmatpush1.msra.mxu0 0.0
  %2638 = vmatprep.subr.mxu0 0.0
  %2639 = vmatpush1.msra.mxu0 0.0
  %2640 = vmatprep.subr.mxu0 0.0
  %2641 = vmatpush1.msra.mxu0 0.0
  %2642 = vmatprep.subr.mxu0 0.0
  %2643 = vmatpush1.msra.mxu0 0.0
  %2644 = vmatprep.subr.mxu0 0.0
  %2645 = vmatpush1.msra.mxu0 0.0
  %2646 = vmatprep.subr.mxu0 0.0
  %2647 = vmatpush1.msra.mxu0 0.0
  %2648 = vmatprep.subr.mxu0 0.0
  %2649 = vmatpush1.msra.mxu0 0.0
  %2650 = vmatprep.subr.mxu0 0.0
  %2651 = vmatpush1.msra.mxu0 0.0
  %2652 = vmatprep.subr.mxu0 0.0
  %2653 = vmatpush1.msra.mxu0 0.0
  %2654 = vmatprep.subr.mxu0 0.0
  %2655 = vmatpush1.msra.mxu0 0.0
  %2656 = vmatprep.subr.mxu0 0.0
  %2657 = vmatpush1.msra.mxu0 0.0
  %2658 = vmatprep.subr.mxu0 0.0
  %2659 = vmatpush1.msra.mxu0 0.0
  %2660 = vmatprep.subr.mxu0 0.0
  %2661 = vmatpush1.msra.mxu0 0.0
  %2662 = vmatprep.subr.mxu0 0.0
  %2663 = vmatpush1.msra.mxu0 0.0
  %2664 = vmatprep.subr.mxu0 0.0
  %2665 = vmatpush1.msra.mxu0 0.0
  %2666 = vmatprep.subr.mxu0 0.0
  %2667 = vmatpush1.msra.mxu0 0.0
  %2668 = vmatprep.subr.mxu0 0.0
  %2669 = vmatpush1.msra.mxu0 0.0
  %2670 = vmatprep.mubr.f32.mxu0 0.0
  %2671 = vmatmul.mubr.f32.gmra.mrb[0].mxu0 %v2370
  %v2672 = vpop.f32.mrb[0].mxu0
  %v2673 = vadd.f32 %v2568, %v2672
  %v2674 = vpop.f32.mrb[0].mxu0
  %2675 = vmatprep.mubr.f32.mxu0 0.0
  %2676 = vmatmul.mubr.f32.gmra.mrb[0].mxu0 %v2372
  %v2677 = vpop.f32.mrb[0].mxu0
  %v2678 = vadd.f32 %v2573, %v2677
  %v2679 = vpop.f32.mrb[0].mxu0
  %2680 = vmatprep.mubr.f32.mxu0 0.0
  %2681 = vmatmul.mubr.f32.gmra.mrb[0].mxu0 %v2374
  %v2682 = vpop.f32.mrb[0].mxu0
  %v2683 = vadd.f32 %v2578, %v2682
  %v2684 = vpop.f32.mrb[0].mxu0
  %2685 = vmatprep.mubr.f32.mxu0 0.0
  %2686 = vmatmul.mubr.f32.gmra.mrb[0].mxu0 %v2376
  %v2687 = vpop.f32.mrb[0].mxu0
  %v2688 = vadd.f32 %v2583, %v2687
  %v2689 = vpop.f32.mrb[0].mxu0
  %2690 = vmatprep.mubr.f32.mxu0 0.0
  %2691 = vmatmul.mubr.f32.gmra.mrb[0].mxu0 %v2378
  %v2692 = vpop.f32.mrb[0].mxu0
  %v2693 = vadd.f32 %v2588, %v2692
  %v2694 = vpop.f32.mrb[0].mxu0
  %2695 = vmatprep.mubr.f32.mxu0 0.0
  %2696 = vmatmul.mubr.f32.gmra.mrb[0].mxu0 %v2380
  %v2697 = vpop.f32.mrb[0].mxu0
  %v2698 = vadd.f32 %v2593, %v2697
  %v2699 = vpop.f32.mrb[0].mxu0
  %2700 = vmatprep.mubr.f32.mxu0 0.0
  %2701 = vmatmul.mubr.f32.gmra.mrb[0].mxu0 %v2382
  %v2702 = vpop.f32.mrb[0].mxu0
  %v2703 = vadd.f32 %v2598, %v2702
  %v2704 = vpop.f32.mrb[0].mxu0
  %2705 = vmatprep.mubr.f32.mxu0 0.0
  %2706 = vmatmul.mubr.f32.gmra.mrb[0].mxu0 %v2384
  %v2707 = vpop.f32.mrb[0].mxu0
  %v2708 = vadd.f32 %v2603, %v2707
  %v2709 = vpop.f32.mrb[0].mxu0
  %2710 = vdwg.mxu0
  %s2711 = scalar_lea.vmem %s4, 144
  %v2712 = vld [vmem:[%s2711] sm:$0xff]
  %v2713 = vld [vmem:[%s2711 + $0x8] sm:$0xff]
  %v2714 = vld [vmem:[%s2711 + $0x10] sm:$0xff]
  %v2715 = vld [vmem:[%s2711 + $0x18] sm:$0xff]
  %v2716 = vld [vmem:[%s2711 + $0x20] sm:$0xff]
  %v2717 = vld [vmem:[%s2711 + $0x28] sm:$0xff]
  %v2718 = vld [vmem:[%s2711 + $0x30] sm:$0xff]
  %v2719 = vld [vmem:[%s2711 + $0x38] sm:$0xff]
  %v2720 = vld [vmem:[%s2711 + $0x40] sm:$0xff]
  %v2729 = vlaneseq
  %v2730 = vshrl.u32 %v2729, 7
  %v2731 = vsub.s32 0, %v2730
  %v2732 = vrot.slane %v1654, %v2731
  %v2733 = vlaneseq
  %v2734 = vshrl.u32 %v2733, 7
  %v2735 = vsub.s32 0, %v2734
  %v2736 = vrot.slane %v1666, %v2735
  %v2737 = vlaneseq
  %v2738 = vshrl.u32 %v2737, 7
  %v2739 = vsub.s32 0, %v2738
  %v2740 = vrot.slane %v1678, %v2739
  %v2741 = vlaneseq
  %v2742 = vshrl.u32 %v2741, 7
  %v2743 = vsub.s32 0, %v2742
  %v2744 = vrot.slane %v1690, %v2743
  %v2745 = vlaneseq
  %v2746 = vshrl.u32 %v2745, 7
  %v2747 = vsub.s32 0, %v2746
  %v2748 = vrot.slane %v1702, %v2747
  %v2749 = vlaneseq
  %v2750 = vshrl.u32 %v2749, 7
  %v2751 = vsub.s32 0, %v2750
  %v2752 = vrot.slane %v1714, %v2751
  %v2753 = vlaneseq
  %v2754 = vshrl.u32 %v2753, 7
  %v2755 = vsub.s32 0, %v2754
  %v2756 = vrot.slane %v1726, %v2755
  %v2757 = vlaneseq
  %v2758 = vshrl.u32 %v2757, 7
  %v2759 = vsub.s32 0, %v2758
  %v2760 = vrot.slane %v1738, %v2759
  %v2761 = vsel %vm2089, %v1844, %v1840
  %v2762 = vsel %vm2091, %v1848, %v2761
  %v2763 = vsel %vm2093, %v1852, %v2762
  %v2764 = vsel %vm2095, %v1856, %v2763
  %v2765 = vsel %vm2097, %v1860, %v2764
  %v2766 = vsel %vm2099, %v1864, %v2765
  %v2767 = vsel %vm2101, %v2732, %v2766
  %v2768 = vsel %vm2089, %v1876, %v1872
  %v2769 = vsel %vm2091, %v1880, %v2768
  %v2770 = vsel %vm2093, %v1884, %v2769
  %v2771 = vsel %vm2095, %v1888, %v2770
  %v2772 = vsel %vm2097, %v1892, %v2771
  %v2773 = vsel %vm2099, %v1896, %v2772
  %v2774 = vsel %vm2101, %v2736, %v2773
  %v2775 = vsel %vm2089, %v1908, %v1904
  %v2776 = vsel %vm2091, %v1912, %v2775
  %v2777 = vsel %vm2093, %v1916, %v2776
  %v2778 = vsel %vm2095, %v1920, %v2777
  %v2779 = vsel %vm2097, %v1924, %v2778
  %v2780 = vsel %vm2099, %v1928, %v2779
  %v2781 = vsel %vm2101, %v2740, %v2780
  %v2782 = vsel %vm2089, %v1940, %v1936
  %v2783 = vsel %vm2091, %v1944, %v2782
  %v2784 = vsel %vm2093, %v1948, %v2783
  %v2785 = vsel %vm2095, %v1952, %v2784
  %v2786 = vsel %vm2097, %v1956, %v2785
  %v2787 = vsel %vm2099, %v1960, %v2786
  %v2788 = vsel %vm2101, %v2744, %v2787
  %v2789 = vsel %vm2089, %v1972, %v1968
  %v2790 = vsel %vm2091, %v1976, %v2789
  %v2791 = vsel %vm2093, %v1980, %v2790
  %v2792 = vsel %vm2095, %v1984, %v2791
  %v2793 = vsel %vm2097, %v1988, %v2792
  %v2794 = vsel %vm2099, %v1992, %v2793
  %v2795 = vsel %vm2101, %v2748, %v2794
  %v2796 = vsel %vm2089, %v2004, %v2000
  %v2797 = vsel %vm2091, %v2008, %v2796
  %v2798 = vsel %vm2093, %v2012, %v2797
  %v2799 = vsel %vm2095, %v2016, %v2798
  %v2800 = vsel %vm2097, %v2020, %v2799
  %v2801 = vsel %vm2099, %v2024, %v2800
  %v2802 = vsel %vm2101, %v2752, %v2801
  %v2803 = vsel %vm2089, %v2036, %v2032
  %v2804 = vsel %vm2091, %v2040, %v2803
  %v2805 = vsel %vm2093, %v2044, %v2804
  %v2806 = vsel %vm2095, %v2048, %v2805
  %v2807 = vsel %vm2097, %v2052, %v2806
  %v2808 = vsel %vm2099, %v2056, %v2807
  %v2809 = vsel %vm2101, %v2756, %v2808
  %v2810 = vsel %vm2089, %v2068, %v2064
  %v2811 = vsel %vm2091, %v2072, %v2810
  %v2812 = vsel %vm2093, %v2076, %v2811
  %v2813 = vsel %vm2095, %v2080, %v2812
  %v2814 = vsel %vm2097, %v2084, %v2813
  %v2815 = vsel %vm2099, %v2088, %v2814
  %v2816 = vsel %vm2101, %v2760, %v2815
  %v2817 = vsel %vm2152, %v2767, 0
  %v2819 = vsel %vm2152, %v2774, 0
  %v2821 = vsel %vm2152, %v2781, 0
  %v2823 = vsel %vm2152, %v2788, 0
  %v2825 = vsel %vm2152, %v2795, 0
  %v2827 = vsel %vm2152, %v2802, 0
  %v2829 = vsel %vm2152, %v2809, 0
  %v2831 = vsel %vm2152, %v2816, 0
  %2833 = vmatprep.subr.mxu0 0.0
  %2834 = vmatpush1.msra.mxu0 %v2712
  %2835 = vmatprep.subr.mxu0 0.0
  %2836 = vmatpush1.msra.mxu0 %v2713
  %2837 = vmatprep.subr.mxu0 0.0
  %2838 = vmatpush1.msra.mxu0 %v2714
  %2839 = vmatprep.subr.mxu0 0.0
  %2840 = vmatpush1.msra.mxu0 %v2715
  %2841 = vmatprep.subr.mxu0 0.0
  %2842 = vmatpush1.msra.mxu0 %v2716
  %2843 = vmatprep.subr.mxu0 0.0
  %2844 = vmatpush1.msra.mxu0 %v2717
  %2845 = vmatprep.subr.mxu0 0.0
  %2846 = vmatpush1.msra.mxu0 %v2718
  %2847 = vmatprep.subr.mxu0 0.0
  %2848 = vmatpush1.msra.mxu0 %v2719
  %2849 = vmatprep.subr.mxu0 0.0
  %2850 = vmatpush1.msra.mxu0 %v2720
  %2851 = vmatprep.subr.mxu0 0.0
  %2852 = vmatpush1.msra.mxu0 0.0
  %2853 = vmatprep.subr.mxu0 0.0
  %2854 = vmatpush1.msra.mxu0 0.0
  %2855 = vmatprep.subr.mxu0 0.0
  %2856 = vmatpush1.msra.mxu0 0.0
  %2857 = vmatprep.subr.mxu0 0.0
  %2858 = vmatpush1.msra.mxu0 0.0
  %2859 = vmatprep.subr.mxu0 0.0
  %2860 = vmatpush1.msra.mxu0 0.0
  %2861 = vmatprep.subr.mxu0 0.0
  %2862 = vmatpush1.msra.mxu0 0.0
  %2863 = vmatprep.subr.mxu0 0.0
  %2864 = vmatpush1.msra.mxu0 0.0
  %2865 = vmatprep.subr.mxu0 0.0
  %2866 = vmatpush1.msra.mxu0 0.0
  %2867 = vmatprep.subr.mxu0 0.0
  %2868 = vmatpush1.msra.mxu0 0.0
  %2869 = vmatprep.subr.mxu0 0.0
  %2870 = vmatpush1.msra.mxu0 0.0
  %2871 = vmatprep.subr.mxu0 0.0
  %2872 = vmatpush1.msra.mxu0 0.0
  %2873 = vmatprep.subr.mxu0 0.0
  %2874 = vmatpush1.msra.mxu0 0.0
  %2875 = vmatprep.subr.mxu0 0.0
  %2876 = vmatpush1.msra.mxu0 0.0
  %2877 = vmatprep.subr.mxu0 0.0
  %2878 = vmatpush1.msra.mxu0 0.0
  %2879 = vmatprep.subr.mxu0 0.0
  %2880 = vmatpush1.msra.mxu0 0.0
  %2881 = vmatprep.subr.mxu0 0.0
  %2882 = vmatpush1.msra.mxu0 0.0
  %2883 = vmatprep.subr.mxu0 0.0
  %2884 = vmatpush1.msra.mxu0 0.0
  %2885 = vmatprep.subr.mxu0 0.0
  %2886 = vmatpush1.msra.mxu0 0.0
  %2887 = vmatprep.subr.mxu0 0.0
  %2888 = vmatpush1.msra.mxu0 0.0
  %2889 = vmatprep.subr.mxu0 0.0
  %2890 = vmatpush1.msra.mxu0 0.0
  %2891 = vmatprep.subr.mxu0 0.0
  %2892 = vmatpush1.msra.mxu0 0.0
  %2893 = vmatprep.subr.mxu0 0.0
  %2894 = vmatpush1.msra.mxu0 0.0
  %2895 = vmatprep.subr.mxu0 0.0
  %2896 = vmatpush1.msra.mxu0 0.0
  %2897 = vmatprep.mubr.f32.mxu0 0.0
  %2898 = vmatmul.mubr.f32.gmra.mrb[0].mxu0 %v2817
  %v2899 = vpop.f32.mrb[0].mxu0
  %v2900 = vadd.f32 0.0, %v2899
  %v2901 = vpop.f32.mrb[0].mxu0
  %2902 = vmatprep.mubr.f32.mxu0 0.0
  %2903 = vmatmul.mubr.f32.gmra.mrb[0].mxu0 %v2819
  %v2904 = vpop.f32.mrb[0].mxu0
  %v2905 = vadd.f32 0.0, %v2904
  %v2906 = vpop.f32.mrb[0].mxu0
  %2907 = vmatprep.mubr.f32.mxu0 0.0
  %2908 = vmatmul.mubr.f32.gmra.mrb[0].mxu0 %v2821
  %v2909 = vpop.f32.mrb[0].mxu0
  %v2910 = vadd.f32 0.0, %v2909
  %v2911 = vpop.f32.mrb[0].mxu0
  %2912 = vmatprep.mubr.f32.mxu0 0.0
  %2913 = vmatmul.mubr.f32.gmra.mrb[0].mxu0 %v2823
  %v2914 = vpop.f32.mrb[0].mxu0
  %v2915 = vadd.f32 0.0, %v2914
  %v2916 = vpop.f32.mrb[0].mxu0
  %2917 = vmatprep.mubr.f32.mxu0 0.0
  %2918 = vmatmul.mubr.f32.gmra.mrb[0].mxu0 %v2825
  %v2919 = vpop.f32.mrb[0].mxu0
  %v2920 = vadd.f32 0.0, %v2919
  %v2921 = vpop.f32.mrb[0].mxu0
  %2922 = vmatprep.mubr.f32.mxu0 0.0
  %2923 = vmatmul.mubr.f32.gmra.mrb[0].mxu0 %v2827
  %v2924 = vpop.f32.mrb[0].mxu0
  %v2925 = vadd.f32 0.0, %v2924
  %v2926 = vpop.f32.mrb[0].mxu0
  %2927 = vmatprep.mubr.f32.mxu0 0.0
  %2928 = vmatmul.mubr.f32.gmra.mrb[0].mxu0 %v2829
  %v2929 = vpop.f32.mrb[0].mxu0
  %v2930 = vadd.f32 0.0, %v2929
  %v2931 = vpop.f32.mrb[0].mxu0
  %2932 = vmatprep.mubr.f32.mxu0 0.0
  %2933 = vmatmul.mubr.f32.gmra.mrb[0].mxu0 %v2831
  %v2934 = vpop.f32.mrb[0].mxu0
  %v2935 = vadd.f32 0.0, %v2934
  %v2936 = vpop.f32.mrb[0].mxu0
  %2937 = vdwg.mxu0
  %v2938 = vadd.f32 %v2453, %v2900
  %v2939 = vadd.f32 %v2458, %v2905
  %v2940 = vadd.f32 %v2463, %v2910
  %v2941 = vadd.f32 %v2468, %v2915
  %v2942 = vadd.f32 %v2473, %v2920
  %v2943 = vadd.f32 %v2478, %v2925
  %v2944 = vadd.f32 %v2483, %v2930
  %v2945 = vadd.f32 %v2488, %v2935
  %s2946 = scalar_lea.vmem %s5, 144
  %v2947 = vld [vmem:[%s2946] sm:$0xff]
  %v2948 = vld [vmem:[%s2946 + $0x8] sm:$0xff]
  %v2949 = vld [vmem:[%s2946 + $0x10] sm:$0xff]
  %v2950 = vld [vmem:[%s2946 + $0x18] sm:$0xff]
  %v2951 = vld [vmem:[%s2946 + $0x20] sm:$0xff]
  %v2952 = vld [vmem:[%s2946 + $0x28] sm:$0xff]
  %v2953 = vld [vmem:[%s2946 + $0x30] sm:$0xff]
  %v2954 = vld [vmem:[%s2946 + $0x38] sm:$0xff]
  %v2955 = vld [vmem:[%s2946 + $0x40] sm:$0xff]
  %2956 = vmatprep.subr.mxu0 0.0
  %2957 = vmatpush1.msra.mxu0 %v2947
  %2958 = vmatprep.subr.mxu0 0.0
  %2959 = vmatpush1.msra.mxu0 %v2948
  %2960 = vmatprep.subr.mxu0 0.0
  %2961 = vmatpush1.msra.mxu0 %v2949
  %2962 = vmatprep.subr.mxu0 0.0
  %2963 = vmatpush1.msra.mxu0 %v2950
  %2964 = vmatprep.subr.mxu0 0.0
  %2965 = vmatpush1.msra.mxu0 %v2951
  %2966 = vmatprep.subr.mxu0 0.0
  %2967 = vmatpush1.msra.mxu0 %v2952
  %2968 = vmatprep.subr.mxu0 0.0
  %2969 = vmatpush1.msra.mxu0 %v2953
  %2970 = vmatprep.subr.mxu0 0.0
  %2971 = vmatpush1.msra.mxu0 %v2954
  %2972 = vmatprep.subr.mxu0 0.0
  %2973 = vmatpush1.msra.mxu0 %v2955
  %2974 = vmatprep.subr.mxu0 0.0
  %2975 = vmatpush1.msra.mxu0 0.0
  %2976 = vmatprep.subr.mxu0 0.0
  %2977 = vmatpush1.msra.mxu0 0.0
  %2978 = vmatprep.subr.mxu0 0.0
  %2979 = vmatpush1.msra.mxu0 0.0
  %2980 = vmatprep.subr.mxu0 0.0
  %2981 = vmatpush1.msra.mxu0 0.0
  %2982 = vmatprep.subr.mxu0 0.0
  %2983 = vmatpush1.msra.mxu0 0.0
  %2984 = vmatprep.subr.mxu0 0.0
  %2985 = vmatpush1.msra.mxu0 0.0
  %2986 = vmatprep.subr.mxu0 0.0
  %2987 = vmatpush1.msra.mxu0 0.0
  %2988 = vmatprep.subr.mxu0 0.0
  %2989 = vmatpush1.msra.mxu0 0.0
  %2990 = vmatprep.subr.mxu0 0.0
  %2991 = vmatpush1.msra.mxu0 0.0
  %2992 = vmatprep.subr.mxu0 0.0
  %2993 = vmatpush1.msra.mxu0 0.0
  %2994 = vmatprep.subr.mxu0 0.0
  %2995 = vmatpush1.msra.mxu0 0.0
  %2996 = vmatprep.subr.mxu0 0.0
  %2997 = vmatpush1.msra.mxu0 0.0
  %2998 = vmatprep.subr.mxu0 0.0
  %2999 = vmatpush1.msra.mxu0 0.0
  %3000 = vmatprep.subr.mxu0 0.0
  %3001 = vmatpush1.msra.mxu0 0.0
  %3002 = vmatprep.subr.mxu0 0.0
  %3003 = vmatpush1.msra.mxu0 0.0
  %3004 = vmatprep.subr.mxu0 0.0
  %3005 = vmatpush1.msra.mxu0 0.0
  %3006 = vmatprep.subr.mxu0 0.0
  %3007 = vmatpush1.msra.mxu0 0.0
  %3008 = vmatprep.subr.mxu0 0.0
  %3009 = vmatpush1.msra.mxu0 0.0
  %3010 = vmatprep.subr.mxu0 0.0
  %3011 = vmatpush1.msra.mxu0 0.0
  %3012 = vmatprep.subr.mxu0 0.0
  %3013 = vmatpush1.msra.mxu0 0.0
  %3014 = vmatprep.subr.mxu0 0.0
  %3015 = vmatpush1.msra.mxu0 0.0
  %3016 = vmatprep.subr.mxu0 0.0
  %3017 = vmatpush1.msra.mxu0 0.0
  %3018 = vmatprep.subr.mxu0 0.0
  %3019 = vmatpush1.msra.mxu0 0.0
  %3020 = vmatprep.mubr.f32.mxu0 0.0
  %3021 = vmatmul.mubr.f32.gmra.mrb[0].mxu0 %v2817
  %v3022 = vpop.f32.mrb[0].mxu0
  %v3023 = vadd.f32 0.0, %v3022
  %v3024 = vpop.f32.mrb[0].mxu0
  %3025 = vmatprep.mubr.f32.mxu0 0.0
  %3026 = vmatmul.mubr.f32.gmra.mrb[0].mxu0 %v2819
  %v3027 = vpop.f32.mrb[0].mxu0
  %v3028 = vadd.f32 0.0, %v3027
  %v3029 = vpop.f32.mrb[0].mxu0
  %3030 = vmatprep.mubr.f32.mxu0 0.0
  %3031 = vmatmul.mubr.f32.gmra.mrb[0].mxu0 %v2821
  %v3032 = vpop.f32.mrb[0].mxu0
  %v3033 = vadd.f32 0.0, %v3032
  %v3034 = vpop.f32.mrb[0].mxu0
  %3035 = vmatprep.mubr.f32.mxu0 0.0
  %3036 = vmatmul.mubr.f32.gmra.mrb[0].mxu0 %v2823
  %v3037 = vpop.f32.mrb[0].mxu0
  %v3038 = vadd.f32 0.0, %v3037
  %v3039 = vpop.f32.mrb[0].mxu0
  %3040 = vmatprep.mubr.f32.mxu0 0.0
  %3041 = vmatmul.mubr.f32.gmra.mrb[0].mxu0 %v2825
  %v3042 = vpop.f32.mrb[0].mxu0
  %v3043 = vadd.f32 0.0, %v3042
  %v3044 = vpop.f32.mrb[0].mxu0
  %3045 = vmatprep.mubr.f32.mxu0 0.0
  %3046 = vmatmul.mubr.f32.gmra.mrb[0].mxu0 %v2827
  %v3047 = vpop.f32.mrb[0].mxu0
  %v3048 = vadd.f32 0.0, %v3047
  %v3049 = vpop.f32.mrb[0].mxu0
  %3050 = vmatprep.mubr.f32.mxu0 0.0
  %3051 = vmatmul.mubr.f32.gmra.mrb[0].mxu0 %v2829
  %v3052 = vpop.f32.mrb[0].mxu0
  %v3053 = vadd.f32 0.0, %v3052
  %v3054 = vpop.f32.mrb[0].mxu0
  %3055 = vmatprep.mubr.f32.mxu0 0.0
  %3056 = vmatmul.mubr.f32.gmra.mrb[0].mxu0 %v2831
  %v3057 = vpop.f32.mrb[0].mxu0
  %v3058 = vadd.f32 0.0, %v3057
  %v3059 = vpop.f32.mrb[0].mxu0
  %3060 = vdwg.mxu0
  %v3061 = vadd.f32 %v2673, %v3023
  %v3062 = vadd.f32 %v2678, %v3028
  %v3063 = vadd.f32 %v2683, %v3033
  %v3064 = vadd.f32 %v2688, %v3038
  %v3065 = vadd.f32 %v2693, %v3043
  %v3066 = vadd.f32 %v2698, %v3048
  %v3067 = vadd.f32 %v2703, %v3053
  %v3068 = vadd.f32 %v2708, %v3058
  %s3069 = scalar_lea.vmem %s4, 216
  %v3070 = vld [vmem:[%s3069] sm:$0xff]
  %v3071 = vld [vmem:[%s3069 + $0x8] sm:$0xff]
  %v3072 = vld [vmem:[%s3069 + $0x10] sm:$0xff]
  %v3073 = vld [vmem:[%s3069 + $0x18] sm:$0xff]
  %v3074 = vld [vmem:[%s3069 + $0x20] sm:$0xff]
  %v3075 = vld [vmem:[%s3069 + $0x28] sm:$0xff]
  %v3076 = vld [vmem:[%s3069 + $0x30] sm:$0xff]
  %v3077 = vld [vmem:[%s3069 + $0x38] sm:$0xff]
  %v3078 = vld [vmem:[%s3069 + $0x40] sm:$0xff]
  %v3087 = vlaneseq
  %v3088 = vshrl.u32 %v3087, 7
  %v3089 = vsub.s32 0, %v3088
  %v3090 = vrot.slane %v1655, %v3089
  %v3091 = vlaneseq
  %v3092 = vshrl.u32 %v3091, 7
  %v3093 = vsub.s32 0, %v3092
  %v3094 = vrot.slane %v1667, %v3093
  %v3095 = vlaneseq
  %v3096 = vshrl.u32 %v3095, 7
  %v3097 = vsub.s32 0, %v3096
  %v3098 = vrot.slane %v1679, %v3097
  %v3099 = vlaneseq
  %v3100 = vshrl.u32 %v3099, 7
  %v3101 = vsub.s32 0, %v3100
  %v3102 = vrot.slane %v1691, %v3101
  %v3103 = vlaneseq
  %v3104 = vshrl.u32 %v3103, 7
  %v3105 = vsub.s32 0, %v3104
  %v3106 = vrot.slane %v1703, %v3105
  %v3107 = vlaneseq
  %v3108 = vshrl.u32 %v3107, 7
  %v3109 = vsub.s32 0, %v3108
  %v3110 = vrot.slane %v1715, %v3109
  %v3111 = vlaneseq
  %v3112 = vshrl.u32 %v3111, 7
  %v3113 = vsub.s32 0, %v3112
  %v3114 = vrot.slane %v1727, %v3113
  %v3115 = vlaneseq
  %v3116 = vshrl.u32 %v3115, 7
  %v3117 = vsub.s32 0, %v3116
  %v3118 = vrot.slane %v1739, %v3117
  %v3119 = vsel %vm2089, %v1848, %v1844
  %v3120 = vsel %vm2091, %v1852, %v3119
  %v3121 = vsel %vm2093, %v1856, %v3120
  %v3122 = vsel %vm2095, %v1860, %v3121
  %v3123 = vsel %vm2097, %v1864, %v3122
  %v3124 = vsel %vm2099, %v2732, %v3123
  %v3125 = vsel %vm2101, %v3090, %v3124
  %v3126 = vsel %vm2089, %v1880, %v1876
  %v3127 = vsel %vm2091, %v1884, %v3126
  %v3128 = vsel %vm2093, %v1888, %v3127
  %v3129 = vsel %vm2095, %v1892, %v3128
  %v3130 = vsel %vm2097, %v1896, %v3129
  %v3131 = vsel %vm2099, %v2736, %v3130
  %v3132 = vsel %vm2101, %v3094, %v3131
  %v3133 = vsel %vm2089, %v1912, %v1908
  %v3134 = vsel %vm2091, %v1916, %v3133
  %v3135 = vsel %vm2093, %v1920, %v3134
  %v3136 = vsel %vm2095, %v1924, %v3135
  %v3137 = vsel %vm2097, %v1928, %v3136
  %v3138 = vsel %vm2099, %v2740, %v3137
  %v3139 = vsel %vm2101, %v3098, %v3138
  %v3140 = vsel %vm2089, %v1944, %v1940
  %v3141 = vsel %vm2091, %v1948, %v3140
  %v3142 = vsel %vm2093, %v1952, %v3141
  %v3143 = vsel %vm2095, %v1956, %v3142
  %v3144 = vsel %vm2097, %v1960, %v3143
  %v3145 = vsel %vm2099, %v2744, %v3144
  %v3146 = vsel %vm2101, %v3102, %v3145
  %v3147 = vsel %vm2089, %v1976, %v1972
  %v3148 = vsel %vm2091, %v1980, %v3147
  %v3149 = vsel %vm2093, %v1984, %v3148
  %v3150 = vsel %vm2095, %v1988, %v3149
  %v3151 = vsel %vm2097, %v1992, %v3150
  %v3152 = vsel %vm2099, %v2748, %v3151
  %v3153 = vsel %vm2101, %v3106, %v3152
  %v3154 = vsel %vm2089, %v2008, %v2004
  %v3155 = vsel %vm2091, %v2012, %v3154
  %v3156 = vsel %vm2093, %v2016, %v3155
  %v3157 = vsel %vm2095, %v2020, %v3156
  %v3158 = vsel %vm2097, %v2024, %v3157
  %v3159 = vsel %vm2099, %v2752, %v3158
  %v3160 = vsel %vm2101, %v3110, %v3159
  %v3161 = vsel %vm2089, %v2040, %v2036
  %v3162 = vsel %vm2091, %v2044, %v3161
  %v3163 = vsel %vm2093, %v2048, %v3162
  %v3164 = vsel %vm2095, %v2052, %v3163
  %v3165 = vsel %vm2097, %v2056, %v3164
  %v3166 = vsel %vm2099, %v2756, %v3165
  %v3167 = vsel %vm2101, %v3114, %v3166
  %v3168 = vsel %vm2089, %v2072, %v2068
  %v3169 = vsel %vm2091, %v2076, %v3168
  %v3170 = vsel %vm2093, %v2080, %v3169
  %v3171 = vsel %vm2095, %v2084, %v3170
  %v3172 = vsel %vm2097, %v2088, %v3171
  %v3173 = vsel %vm2099, %v2760, %v3172
  %v3174 = vsel %vm2101, %v3118, %v3173
  %v3175 = vsel %vm2152, %v3125, 0
  %v3177 = vsel %vm2152, %v3132, 0
  %v3179 = vsel %vm2152, %v3139, 0
  %v3181 = vsel %vm2152, %v3146, 0
  %v3183 = vsel %vm2152, %v3153, 0
  %v3185 = vsel %vm2152, %v3160, 0
  %v3187 = vsel %vm2152, %v3167, 0
  %v3189 = vsel %vm2152, %v3174, 0
  %3191 = vmatprep.subr.mxu0 0.0
  %3192 = vmatpush1.msra.mxu0 %v3070
  %3193 = vmatprep.subr.mxu0 0.0
  %3194 = vmatpush1.msra.mxu0 %v3071
  %3195 = vmatprep.subr.mxu0 0.0
  %3196 = vmatpush1.msra.mxu0 %v3072
  %3197 = vmatprep.subr.mxu0 0.0
  %3198 = vmatpush1.msra.mxu0 %v3073
  %3199 = vmatprep.subr.mxu0 0.0
  %3200 = vmatpush1.msra.mxu0 %v3074
  %3201 = vmatprep.subr.mxu0 0.0
  %3202 = vmatpush1.msra.mxu0 %v3075
  %3203 = vmatprep.subr.mxu0 0.0
  %3204 = vmatpush1.msra.mxu0 %v3076
  %3205 = vmatprep.subr.mxu0 0.0
  %3206 = vmatpush1.msra.mxu0 %v3077
  %3207 = vmatprep.subr.mxu0 0.0
  %3208 = vmatpush1.msra.mxu0 %v3078
  %3209 = vmatprep.subr.mxu0 0.0
  %3210 = vmatpush1.msra.mxu0 0.0
  %3211 = vmatprep.subr.mxu0 0.0
  %3212 = vmatpush1.msra.mxu0 0.0
  %3213 = vmatprep.subr.mxu0 0.0
  %3214 = vmatpush1.msra.mxu0 0.0
  %3215 = vmatprep.subr.mxu0 0.0
  %3216 = vmatpush1.msra.mxu0 0.0
  %3217 = vmatprep.subr.mxu0 0.0
  %3218 = vmatpush1.msra.mxu0 0.0
  %3219 = vmatprep.subr.mxu0 0.0
  %3220 = vmatpush1.msra.mxu0 0.0
  %3221 = vmatprep.subr.mxu0 0.0
  %3222 = vmatpush1.msra.mxu0 0.0
  %3223 = vmatprep.subr.mxu0 0.0
  %3224 = vmatpush1.msra.mxu0 0.0
  %3225 = vmatprep.subr.mxu0 0.0
  %3226 = vmatpush1.msra.mxu0 0.0
  %3227 = vmatprep.subr.mxu0 0.0
  %3228 = vmatpush1.msra.mxu0 0.0
  %3229 = vmatprep.subr.mxu0 0.0
  %3230 = vmatpush1.msra.mxu0 0.0
  %3231 = vmatprep.subr.mxu0 0.0
  %3232 = vmatpush1.msra.mxu0 0.0
  %3233 = vmatprep.subr.mxu0 0.0
  %3234 = vmatpush1.msra.mxu0 0.0
  %3235 = vmatprep.subr.mxu0 0.0
  %3236 = vmatpush1.msra.mxu0 0.0
  %3237 = vmatprep.subr.mxu0 0.0
  %3238 = vmatpush1.msra.mxu0 0.0
  %3239 = vmatprep.subr.mxu0 0.0
  %3240 = vmatpush1.msra.mxu0 0.0
  %3241 = vmatprep.subr.mxu0 0.0
  %3242 = vmatpush1.msra.mxu0 0.0
  %3243 = vmatprep.subr.mxu0 0.0
  %3244 = vmatpush1.msra.mxu0 0.0
  %3245 = vmatprep.subr.mxu0 0.0
  %3246 = vmatpush1.msra.mxu0 0.0
  %3247 = vmatprep.subr.mxu0 0.0
  %3248 = vmatpush1.msra.mxu0 0.0
  %3249 = vmatprep.subr.mxu0 0.0
  %3250 = vmatpush1.msra.mxu0 0.0
  %3251 = vmatprep.subr.mxu0 0.0
  %3252 = vmatpush1.msra.mxu0 0.0
  %3253 = vmatprep.subr.mxu0 0.0
  %3254 = vmatpush1.msra.mxu0 0.0
  %3255 = vmatprep.mubr.f32.mxu0 0.0
  %3256 = vmatmul.mubr.f32.gmra.mrb[0].mxu0 %v3175
  %v3257 = vpop.f32.mrb[0].mxu0
  %v3258 = vadd.f32 0.0, %v3257
  %v3259 = vpop.f32.mrb[0].mxu0
  %3260 = vmatprep.mubr.f32.mxu0 0.0
  %3261 = vmatmul.mubr.f32.gmra.mrb[0].mxu0 %v3177
  %v3262 = vpop.f32.mrb[0].mxu0
  %v3263 = vadd.f32 0.0, %v3262
  %v3264 = vpop.f32.mrb[0].mxu0
  %3265 = vmatprep.mubr.f32.mxu0 0.0
  %3266 = vmatmul.mubr.f32.gmra.mrb[0].mxu0 %v3179
  %v3267 = vpop.f32.mrb[0].mxu0
  %v3268 = vadd.f32 0.0, %v3267
  %v3269 = vpop.f32.mrb[0].mxu0
  %3270 = vmatprep.mubr.f32.mxu0 0.0
  %3271 = vmatmul.mubr.f32.gmra.mrb[0].mxu0 %v3181
  %v3272 = vpop.f32.mrb[0].mxu0
  %v3273 = vadd.f32 0.0, %v3272
  %v3274 = vpop.f32.mrb[0].mxu0
  %3275 = vmatprep.mubr.f32.mxu0 0.0
  %3276 = vmatmul.mubr.f32.gmra.mrb[0].mxu0 %v3183
  %v3277 = vpop.f32.mrb[0].mxu0
  %v3278 = vadd.f32 0.0, %v3277
  %v3279 = vpop.f32.mrb[0].mxu0
  %3280 = vmatprep.mubr.f32.mxu0 0.0
  %3281 = vmatmul.mubr.f32.gmra.mrb[0].mxu0 %v3185
  %v3282 = vpop.f32.mrb[0].mxu0
  %v3283 = vadd.f32 0.0, %v3282
  %v3284 = vpop.f32.mrb[0].mxu0
  %3285 = vmatprep.mubr.f32.mxu0 0.0
  %3286 = vmatmul.mubr.f32.gmra.mrb[0].mxu0 %v3187
  %v3287 = vpop.f32.mrb[0].mxu0
  %v3288 = vadd.f32 0.0, %v3287
  %v3289 = vpop.f32.mrb[0].mxu0
  %3290 = vmatprep.mubr.f32.mxu0 0.0
  %3291 = vmatmul.mubr.f32.gmra.mrb[0].mxu0 %v3189
  %v3292 = vpop.f32.mrb[0].mxu0
  %v3293 = vadd.f32 0.0, %v3292
  %v3294 = vpop.f32.mrb[0].mxu0
  %3295 = vdwg.mxu0
  %v3296 = vadd.f32 %v2938, %v3258
  %v3297 = vadd.f32 %v2939, %v3263
  %v3298 = vadd.f32 %v2940, %v3268
  %v3299 = vadd.f32 %v2941, %v3273
  %v3300 = vadd.f32 %v2942, %v3278
  %v3301 = vadd.f32 %v2943, %v3283
  %v3302 = vadd.f32 %v2944, %v3288
  %v3303 = vadd.f32 %v2945, %v3293
  %s3304 = scalar_lea.vmem %s5, 216
  %v3305 = vld [vmem:[%s3304] sm:$0xff]
  %v3306 = vld [vmem:[%s3304 + $0x8] sm:$0xff]
  %v3307 = vld [vmem:[%s3304 + $0x10] sm:$0xff]
  %v3308 = vld [vmem:[%s3304 + $0x18] sm:$0xff]
  %v3309 = vld [vmem:[%s3304 + $0x20] sm:$0xff]
  %v3310 = vld [vmem:[%s3304 + $0x28] sm:$0xff]
  %v3311 = vld [vmem:[%s3304 + $0x30] sm:$0xff]
  %v3312 = vld [vmem:[%s3304 + $0x38] sm:$0xff]
  %v3313 = vld [vmem:[%s3304 + $0x40] sm:$0xff]
  %3314 = vmatprep.subr.mxu0 0.0
  %3315 = vmatpush1.msra.mxu0 %v3305
  %3316 = vmatprep.subr.mxu0 0.0
  %3317 = vmatpush1.msra.mxu0 %v3306
  %3318 = vmatprep.subr.mxu0 0.0
  %3319 = vmatpush1.msra.mxu0 %v3307
  %3320 = vmatprep.subr.mxu0 0.0
  %3321 = vmatpush1.msra.mxu0 %v3308
  %3322 = vmatprep.subr.mxu0 0.0
  %3323 = vmatpush1.msra.mxu0 %v3309
  %3324 = vmatprep.subr.mxu0 0.0
  %3325 = vmatpush1.msra.mxu0 %v3310
  %3326 = vmatprep.subr.mxu0 0.0
  %3327 = vmatpush1.msra.mxu0 %v3311
  %3328 = vmatprep.subr.mxu0 0.0
  %3329 = vmatpush1.msra.mxu0 %v3312
  %3330 = vmatprep.subr.mxu0 0.0
  %3331 = vmatpush1.msra.mxu0 %v3313
  %3332 = vmatprep.subr.mxu0 0.0
  %3333 = vmatpush1.msra.mxu0 0.0
  %3334 = vmatprep.subr.mxu0 0.0
  %3335 = vmatpush1.msra.mxu0 0.0
  %3336 = vmatprep.subr.mxu0 0.0
  %3337 = vmatpush1.msra.mxu0 0.0
  %3338 = vmatprep.subr.mxu0 0.0
  %3339 = vmatpush1.msra.mxu0 0.0
  %3340 = vmatprep.subr.mxu0 0.0
  %3341 = vmatpush1.msra.mxu0 0.0
  %3342 = vmatprep.subr.mxu0 0.0
  %3343 = vmatpush1.msra.mxu0 0.0
  %3344 = vmatprep.subr.mxu0 0.0
  %3345 = vmatpush1.msra.mxu0 0.0
  %3346 = vmatprep.subr.mxu0 0.0
  %3347 = vmatpush1.msra.mxu0 0.0
  %3348 = vmatprep.subr.mxu0 0.0
  %3349 = vmatpush1.msra.mxu0 0.0
  %3350 = vmatprep.subr.mxu0 0.0
  %3351 = vmatpush1.msra.mxu0 0.0
  %3352 = vmatprep.subr.mxu0 0.0
  %3353 = vmatpush1.msra.mxu0 0.0
  %3354 = vmatprep.subr.mxu0 0.0
  %3355 = vmatpush1.msra.mxu0 0.0
  %3356 = vmatprep.subr.mxu0 0.0
  %3357 = vmatpush1.msra.mxu0 0.0
  %3358 = vmatprep.subr.mxu0 0.0
  %3359 = vmatpush1.msra.mxu0 0.0
  %3360 = vmatprep.subr.mxu0 0.0
  %3361 = vmatpush1.msra.mxu0 0.0
  %3362 = vmatprep.subr.mxu0 0.0
  %3363 = vmatpush1.msra.mxu0 0.0
  %3364 = vmatprep.subr.mxu0 0.0
  %3365 = vmatpush1.msra.mxu0 0.0
  %3366 = vmatprep.subr.mxu0 0.0
  %3367 = vmatpush1.msra.mxu0 0.0
  %3368 = vmatprep.subr.mxu0 0.0
  %3369 = vmatpush1.msra.mxu0 0.0
  %3370 = vmatprep.subr.mxu0 0.0
  %3371 = vmatpush1.msra.mxu0 0.0
  %3372 = vmatprep.subr.mxu0 0.0
  %3373 = vmatpush1.msra.mxu0 0.0
  %3374 = vmatprep.subr.mxu0 0.0
  %3375 = vmatpush1.msra.mxu0 0.0
  %3376 = vmatprep.subr.mxu0 0.0
  %3377 = vmatpush1.msra.mxu0 0.0
  %3378 = vmatprep.mubr.f32.mxu0 0.0
  %3379 = vmatmul.mubr.f32.gmra.mrb[0].mxu0 %v3175
  %v3380 = vpop.f32.mrb[0].mxu0
  %v3381 = vadd.f32 0.0, %v3380
  %v3382 = vpop.f32.mrb[0].mxu0
  %3383 = vmatprep.mubr.f32.mxu0 0.0
  %3384 = vmatmul.mubr.f32.gmra.mrb[0].mxu0 %v3177
  %v3385 = vpop.f32.mrb[0].mxu0
  %v3386 = vadd.f32 0.0, %v3385
  %v3387 = vpop.f32.mrb[0].mxu0
  %3388 = vmatprep.mubr.f32.mxu0 0.0
  %3389 = vmatmul.mubr.f32.gmra.mrb[0].mxu0 %v3179
  %v3390 = vpop.f32.mrb[0].mxu0
  %v3391 = vadd.f32 0.0, %v3390
  %v3392 = vpop.f32.mrb[0].mxu0
  %3393 = vmatprep.mubr.f32.mxu0 0.0
  %3394 = vmatmul.mubr.f32.gmra.mrb[0].mxu0 %v3181
  %v3395 = vpop.f32.mrb[0].mxu0
  %v3396 = vadd.f32 0.0, %v3395
  %v3397 = vpop.f32.mrb[0].mxu0
  %3398 = vmatprep.mubr.f32.mxu0 0.0
  %3399 = vmatmul.mubr.f32.gmra.mrb[0].mxu0 %v3183
  %v3400 = vpop.f32.mrb[0].mxu0
  %v3401 = vadd.f32 0.0, %v3400
  %v3402 = vpop.f32.mrb[0].mxu0
  %3403 = vmatprep.mubr.f32.mxu0 0.0
  %3404 = vmatmul.mubr.f32.gmra.mrb[0].mxu0 %v3185
  %v3405 = vpop.f32.mrb[0].mxu0
  %v3406 = vadd.f32 0.0, %v3405
  %v3407 = vpop.f32.mrb[0].mxu0
  %3408 = vmatprep.mubr.f32.mxu0 0.0
  %3409 = vmatmul.mubr.f32.gmra.mrb[0].mxu0 %v3187
  %v3410 = vpop.f32.mrb[0].mxu0
  %v3411 = vadd.f32 0.0, %v3410
  %v3412 = vpop.f32.mrb[0].mxu0
  %3413 = vmatprep.mubr.f32.mxu0 0.0
  %3414 = vmatmul.mubr.f32.gmra.mrb[0].mxu0 %v3189
  %v3415 = vpop.f32.mrb[0].mxu0
  %v3416 = vadd.f32 0.0, %v3415
  %v3417 = vpop.f32.mrb[0].mxu0
  %3418 = vdwg.mxu0
  %v3419 = vadd.f32 %v3061, %v3381
  %v3420 = vadd.f32 %v3062, %v3386
  %v3421 = vadd.f32 %v3063, %v3391
  %v3422 = vadd.f32 %v3064, %v3396
  %v3423 = vadd.f32 %v3065, %v3401
  %v3424 = vadd.f32 %v3066, %v3406
  %v3425 = vadd.f32 %v3067, %v3411
  %v3426 = vadd.f32 %v3068, %v3416
  %s3427 = scalar_lea.vmem %s4, 288
  %v3428 = vld [vmem:[%s3427] sm:$0xff]
  %v3429 = vld [vmem:[%s3427 + $0x8] sm:$0xff]
  %v3430 = vld [vmem:[%s3427 + $0x10] sm:$0xff]
  %v3431 = vld [vmem:[%s3427 + $0x18] sm:$0xff]
  %v3432 = vld [vmem:[%s3427 + $0x20] sm:$0xff]
  %v3433 = vld [vmem:[%s3427 + $0x28] sm:$0xff]
  %v3434 = vld [vmem:[%s3427 + $0x30] sm:$0xff]
  %v3435 = vld [vmem:[%s3427 + $0x38] sm:$0xff]
  %v3436 = vld [vmem:[%s3427 + $0x40] sm:$0xff]
  %v3445 = vlaneseq
  %v3446 = vshrl.u32 %v3445, 7
  %v3447 = vsub.s32 0, %v3446
  %v3448 = vrot.slane %v1656, %v3447
  %v3449 = vlaneseq
  %v3450 = vshrl.u32 %v3449, 7
  %v3451 = vsub.s32 0, %v3450
  %v3452 = vrot.slane %v1668, %v3451
  %v3453 = vlaneseq
  %v3454 = vshrl.u32 %v3453, 7
  %v3455 = vsub.s32 0, %v3454
  %v3456 = vrot.slane %v1680, %v3455
  %v3457 = vlaneseq
  %v3458 = vshrl.u32 %v3457, 7
  %v3459 = vsub.s32 0, %v3458
  %v3460 = vrot.slane %v1692, %v3459
  %v3461 = vlaneseq
  %v3462 = vshrl.u32 %v3461, 7
  %v3463 = vsub.s32 0, %v3462
  %v3464 = vrot.slane %v1704, %v3463
  %v3465 = vlaneseq
  %v3466 = vshrl.u32 %v3465, 7
  %v3467 = vsub.s32 0, %v3466
  %v3468 = vrot.slane %v1716, %v3467
  %v3469 = vlaneseq
  %v3470 = vshrl.u32 %v3469, 7
  %v3471 = vsub.s32 0, %v3470
  %v3472 = vrot.slane %v1728, %v3471
  %v3473 = vlaneseq
  %v3474 = vshrl.u32 %v3473, 7
  %v3475 = vsub.s32 0, %v3474
  %v3476 = vrot.slane %v1740, %v3475
  %v3477 = vsel %vm2089, %v1852, %v1848
  %v3478 = vsel %vm2091, %v1856, %v3477
  %v3479 = vsel %vm2093, %v1860, %v3478
  %v3480 = vsel %vm2095, %v1864, %v3479
  %v3481 = vsel %vm2097, %v2732, %v3480
  %v3482 = vsel %vm2099, %v3090, %v3481
  %v3483 = vsel %vm2101, %v3448, %v3482
  %v3484 = vsel %vm2089, %v1884, %v1880
  %v3485 = vsel %vm2091, %v1888, %v3484
  %v3486 = vsel %vm2093, %v1892, %v3485
  %v3487 = vsel %vm2095, %v1896, %v3486
  %v3488 = vsel %vm2097, %v2736, %v3487
  %v3489 = vsel %vm2099, %v3094, %v3488
  %v3490 = vsel %vm2101, %v3452, %v3489
  %v3491 = vsel %vm2089, %v1916, %v1912
  %v3492 = vsel %vm2091, %v1920, %v3491
  %v3493 = vsel %vm2093, %v1924, %v3492
  %v3494 = vsel %vm2095, %v1928, %v3493
  %v3495 = vsel %vm2097, %v2740, %v3494
  %v3496 = vsel %vm2099, %v3098, %v3495
  %v3497 = vsel %vm2101, %v3456, %v3496
  %v3498 = vsel %vm2089, %v1948, %v1944
  %v3499 = vsel %vm2091, %v1952, %v3498
  %v3500 = vsel %vm2093, %v1956, %v3499
  %v3501 = vsel %vm2095, %v1960, %v3500
  %v3502 = vsel %vm2097, %v2744, %v3501
  %v3503 = vsel %vm2099, %v3102, %v3502
  %v3504 = vsel %vm2101, %v3460, %v3503
  %v3505 = vsel %vm2089, %v1980, %v1976
  %v3506 = vsel %vm2091, %v1984, %v3505
  %v3507 = vsel %vm2093, %v1988, %v3506
  %v3508 = vsel %vm2095, %v1992, %v3507
  %v3509 = vsel %vm2097, %v2748, %v3508
  %v3510 = vsel %vm2099, %v3106, %v3509
  %v3511 = vsel %vm2101, %v3464, %v3510
  %v3512 = vsel %vm2089, %v2012, %v2008
  %v3513 = vsel %vm2091, %v2016, %v3512
  %v3514 = vsel %vm2093, %v2020, %v3513
  %v3515 = vsel %vm2095, %v2024, %v3514
  %v3516 = vsel %vm2097, %v2752, %v3515
  %v3517 = vsel %vm2099, %v3110, %v3516
  %v3518 = vsel %vm2101, %v3468, %v3517
  %v3519 = vsel %vm2089, %v2044, %v2040
  %v3520 = vsel %vm2091, %v2048, %v3519
  %v3521 = vsel %vm2093, %v2052, %v3520
  %v3522 = vsel %vm2095, %v2056, %v3521
  %v3523 = vsel %vm2097, %v2756, %v3522
  %v3524 = vsel %vm2099, %v3114, %v3523
  %v3525 = vsel %vm2101, %v3472, %v3524
  %v3526 = vsel %vm2089, %v2076, %v2072
  %v3527 = vsel %vm2091, %v2080, %v3526
  %v3528 = vsel %vm2093, %v2084, %v3527
  %v3529 = vsel %vm2095, %v2088, %v3528
  %v3530 = vsel %vm2097, %v2760, %v3529
  %v3531 = vsel %vm2099, %v3118, %v3530
  %v3532 = vsel %vm2101, %v3476, %v3531
  %v3533 = vsel %vm2152, %v3483, 0
  %v3535 = vsel %vm2152, %v3490, 0
  %v3537 = vsel %vm2152, %v3497, 0
  %v3539 = vsel %vm2152, %v3504, 0
  %v3541 = vsel %vm2152, %v3511, 0
  %v3543 = vsel %vm2152, %v3518, 0
  %v3545 = vsel %vm2152, %v3525, 0
  %v3547 = vsel %vm2152, %v3532, 0
  %3549 = vmatprep.subr.mxu0 0.0
  %3550 = vmatpush1.msra.mxu0 %v3428
  %3551 = vmatprep.subr.mxu0 0.0
  %3552 = vmatpush1.msra.mxu0 %v3429
  %3553 = vmatprep.subr.mxu0 0.0
  %3554 = vmatpush1.msra.mxu0 %v3430
  %3555 = vmatprep.subr.mxu0 0.0
  %3556 = vmatpush1.msra.mxu0 %v3431
  %3557 = vmatprep.subr.mxu0 0.0
  %3558 = vmatpush1.msra.mxu0 %v3432
  %3559 = vmatprep.subr.mxu0 0.0
  %3560 = vmatpush1.msra.mxu0 %v3433
  %3561 = vmatprep.subr.mxu0 0.0
  %3562 = vmatpush1.msra.mxu0 %v3434
  %3563 = vmatprep.subr.mxu0 0.0
  %3564 = vmatpush1.msra.mxu0 %v3435
  %3565 = vmatprep.subr.mxu0 0.0
  %3566 = vmatpush1.msra.mxu0 %v3436
  %3567 = vmatprep.subr.mxu0 0.0
  %3568 = vmatpush1.msra.mxu0 0.0
  %3569 = vmatprep.subr.mxu0 0.0
  %3570 = vmatpush1.msra.mxu0 0.0
  %3571 = vmatprep.subr.mxu0 0.0
  %3572 = vmatpush1.msra.mxu0 0.0
  %3573 = vmatprep.subr.mxu0 0.0
  %3574 = vmatpush1.msra.mxu0 0.0
  %3575 = vmatprep.subr.mxu0 0.0
  %3576 = vmatpush1.msra.mxu0 0.0
  %3577 = vmatprep.subr.mxu0 0.0
  %3578 = vmatpush1.msra.mxu0 0.0
  %3579 = vmatprep.subr.mxu0 0.0
  %3580 = vmatpush1.msra.mxu0 0.0
  %3581 = vmatprep.subr.mxu0 0.0
  %3582 = vmatpush1.msra.mxu0 0.0
  %3583 = vmatprep.subr.mxu0 0.0
  %3584 = vmatpush1.msra.mxu0 0.0
  %3585 = vmatprep.subr.mxu0 0.0
  %3586 = vmatpush1.msra.mxu0 0.0
  %3587 = vmatprep.subr.mxu0 0.0
  %3588 = vmatpush1.msra.mxu0 0.0
  %3589 = vmatprep.subr.mxu0 0.0
  %3590 = vmatpush1.msra.mxu0 0.0
  %3591 = vmatprep.subr.mxu0 0.0
  %3592 = vmatpush1.msra.mxu0 0.0
  %3593 = vmatprep.subr.mxu0 0.0
  %3594 = vmatpush1.msra.mxu0 0.0
  %3595 = vmatprep.subr.mxu0 0.0
  %3596 = vmatpush1.msra.mxu0 0.0
  %3597 = vmatprep.subr.mxu0 0.0
  %3598 = vmatpush1.msra.mxu0 0.0
  %3599 = vmatprep.subr.mxu0 0.0
  %3600 = vmatpush1.msra.mxu0 0.0
  %3601 = vmatprep.subr.mxu0 0.0
  %3602 = vmatpush1.msra.mxu0 0.0
  %3603 = vmatprep.subr.mxu0 0.0
  %3604 = vmatpush1.msra.mxu0 0.0
  %3605 = vmatprep.subr.mxu0 0.0
  %3606 = vmatpush1.msra.mxu0 0.0
  %3607 = vmatprep.subr.mxu0 0.0
  %3608 = vmatpush1.msra.mxu0 0.0
  %3609 = vmatprep.subr.mxu0 0.0
  %3610 = vmatpush1.msra.mxu0 0.0
  %3611 = vmatprep.subr.mxu0 0.0
  %3612 = vmatpush1.msra.mxu0 0.0
  %3613 = vmatprep.mubr.f32.mxu0 0.0
  %3614 = vmatmul.mubr.f32.gmra.mrb[0].mxu0 %v3533
  %v3615 = vpop.f32.mrb[0].mxu0
  %v3616 = vadd.f32 0.0, %v3615
  %v3617 = vpop.f32.mrb[0].mxu0
  %3618 = vmatprep.mubr.f32.mxu0 0.0
  %3619 = vmatmul.mubr.f32.gmra.mrb[0].mxu0 %v3535
  %v3620 = vpop.f32.mrb[0].mxu0
  %v3621 = vadd.f32 0.0, %v3620
  %v3622 = vpop.f32.mrb[0].mxu0
  %3623 = vmatprep.mubr.f32.mxu0 0.0
  %3624 = vmatmul.mubr.f32.gmra.mrb[0].mxu0 %v3537
  %v3625 = vpop.f32.mrb[0].mxu0
  %v3626 = vadd.f32 0.0, %v3625
  %v3627 = vpop.f32.mrb[0].mxu0
  %3628 = vmatprep.mubr.f32.mxu0 0.0
  %3629 = vmatmul.mubr.f32.gmra.mrb[0].mxu0 %v3539
  %v3630 = vpop.f32.mrb[0].mxu0
  %v3631 = vadd.f32 0.0, %v3630
  %v3632 = vpop.f32.mrb[0].mxu0
  %3633 = vmatprep.mubr.f32.mxu0 0.0
  %3634 = vmatmul.mubr.f32.gmra.mrb[0].mxu0 %v3541
  %v3635 = vpop.f32.mrb[0].mxu0
  %v3636 = vadd.f32 0.0, %v3635
  %v3637 = vpop.f32.mrb[0].mxu0
  %3638 = vmatprep.mubr.f32.mxu0 0.0
  %3639 = vmatmul.mubr.f32.gmra.mrb[0].mxu0 %v3543
  %v3640 = vpop.f32.mrb[0].mxu0
  %v3641 = vadd.f32 0.0, %v3640
  %v3642 = vpop.f32.mrb[0].mxu0
  %3643 = vmatprep.mubr.f32.mxu0 0.0
  %3644 = vmatmul.mubr.f32.gmra.mrb[0].mxu0 %v3545
  %v3645 = vpop.f32.mrb[0].mxu0
  %v3646 = vadd.f32 0.0, %v3645
  %v3647 = vpop.f32.mrb[0].mxu0
  %3648 = vmatprep.mubr.f32.mxu0 0.0
  %3649 = vmatmul.mubr.f32.gmra.mrb[0].mxu0 %v3547
  %v3650 = vpop.f32.mrb[0].mxu0
  %v3651 = vadd.f32 0.0, %v3650
  %v3652 = vpop.f32.mrb[0].mxu0
  %3653 = vdwg.mxu0
  %v3654 = vadd.f32 %v3296, %v3616
  %v3655 = vadd.f32 %v3297, %v3621
  %v3656 = vadd.f32 %v3298, %v3626
  %v3657 = vadd.f32 %v3299, %v3631
  %v3658 = vadd.f32 %v3300, %v3636
  %v3659 = vadd.f32 %v3301, %v3641
  %v3660 = vadd.f32 %v3302, %v3646
  %v3661 = vadd.f32 %v3303, %v3651
  %s3662 = scalar_lea.vmem %s5, 288
  %v3663 = vld [vmem:[%s3662] sm:$0xff]
  %v3664 = vld [vmem:[%s3662 + $0x8] sm:$0xff]
  %v3665 = vld [vmem:[%s3662 + $0x10] sm:$0xff]
  %v3666 = vld [vmem:[%s3662 + $0x18] sm:$0xff]
  %v3667 = vld [vmem:[%s3662 + $0x20] sm:$0xff]
  %v3668 = vld [vmem:[%s3662 + $0x28] sm:$0xff]
  %v3669 = vld [vmem:[%s3662 + $0x30] sm:$0xff]
  %v3670 = vld [vmem:[%s3662 + $0x38] sm:$0xff]
  %v3671 = vld [vmem:[%s3662 + $0x40] sm:$0xff]
  %3672 = vmatprep.subr.mxu0 0.0
  %3673 = vmatpush1.msra.mxu0 %v3663
  %3674 = vmatprep.subr.mxu0 0.0
  %3675 = vmatpush1.msra.mxu0 %v3664
  %3676 = vmatprep.subr.mxu0 0.0
  %3677 = vmatpush1.msra.mxu0 %v3665
  %3678 = vmatprep.subr.mxu0 0.0
  %3679 = vmatpush1.msra.mxu0 %v3666
  %3680 = vmatprep.subr.mxu0 0.0
  %3681 = vmatpush1.msra.mxu0 %v3667
  %3682 = vmatprep.subr.mxu0 0.0
  %3683 = vmatpush1.msra.mxu0 %v3668
  %3684 = vmatprep.subr.mxu0 0.0
  %3685 = vmatpush1.msra.mxu0 %v3669
  %3686 = vmatprep.subr.mxu0 0.0
  %3687 = vmatpush1.msra.mxu0 %v3670
  %3688 = vmatprep.subr.mxu0 0.0
  %3689 = vmatpush1.msra.mxu0 %v3671
  %3690 = vmatprep.subr.mxu0 0.0
  %3691 = vmatpush1.msra.mxu0 0.0
  %3692 = vmatprep.subr.mxu0 0.0
  %3693 = vmatpush1.msra.mxu0 0.0
  %3694 = vmatprep.subr.mxu0 0.0
  %3695 = vmatpush1.msra.mxu0 0.0
  %3696 = vmatprep.subr.mxu0 0.0
  %3697 = vmatpush1.msra.mxu0 0.0
  %3698 = vmatprep.subr.mxu0 0.0
  %3699 = vmatpush1.msra.mxu0 0.0
  %3700 = vmatprep.subr.mxu0 0.0
  %3701 = vmatpush1.msra.mxu0 0.0
  %3702 = vmatprep.subr.mxu0 0.0
  %3703 = vmatpush1.msra.mxu0 0.0
  %3704 = vmatprep.subr.mxu0 0.0
  %3705 = vmatpush1.msra.mxu0 0.0
  %3706 = vmatprep.subr.mxu0 0.0
  %3707 = vmatpush1.msra.mxu0 0.0
  %3708 = vmatprep.subr.mxu0 0.0
  %3709 = vmatpush1.msra.mxu0 0.0
  %3710 = vmatprep.subr.mxu0 0.0
  %3711 = vmatpush1.msra.mxu0 0.0
  %3712 = vmatprep.subr.mxu0 0.0
  %3713 = vmatpush1.msra.mxu0 0.0
  %3714 = vmatprep.subr.mxu0 0.0
  %3715 = vmatpush1.msra.mxu0 0.0
  %3716 = vmatprep.subr.mxu0 0.0
  %3717 = vmatpush1.msra.mxu0 0.0
  %3718 = vmatprep.subr.mxu0 0.0
  %3719 = vmatpush1.msra.mxu0 0.0
  %3720 = vmatprep.subr.mxu0 0.0
  %3721 = vmatpush1.msra.mxu0 0.0
  %3722 = vmatprep.subr.mxu0 0.0
  %3723 = vmatpush1.msra.mxu0 0.0
  %3724 = vmatprep.subr.mxu0 0.0
  %3725 = vmatpush1.msra.mxu0 0.0
  %3726 = vmatprep.subr.mxu0 0.0
  %3727 = vmatpush1.msra.mxu0 0.0
  %3728 = vmatprep.subr.mxu0 0.0
  %3729 = vmatpush1.msra.mxu0 0.0
  %3730 = vmatprep.subr.mxu0 0.0
  %3731 = vmatpush1.msra.mxu0 0.0
  %3732 = vmatprep.subr.mxu0 0.0
  %3733 = vmatpush1.msra.mxu0 0.0
  %3734 = vmatprep.subr.mxu0 0.0
  %3735 = vmatpush1.msra.mxu0 0.0
  %3736 = vmatprep.mubr.f32.mxu0 0.0
  %3737 = vmatmul.mubr.f32.gmra.mrb[0].mxu0 %v3533
  %v3738 = vpop.f32.mrb[0].mxu0
  %v3739 = vadd.f32 0.0, %v3738
  %v3740 = vpop.f32.mrb[0].mxu0
  %3741 = vmatprep.mubr.f32.mxu0 0.0
  %3742 = vmatmul.mubr.f32.gmra.mrb[0].mxu0 %v3535
  %v3743 = vpop.f32.mrb[0].mxu0
  %v3744 = vadd.f32 0.0, %v3743
  %v3745 = vpop.f32.mrb[0].mxu0
  %3746 = vmatprep.mubr.f32.mxu0 0.0
  %3747 = vmatmul.mubr.f32.gmra.mrb[0].mxu0 %v3537
  %v3748 = vpop.f32.mrb[0].mxu0
  %v3749 = vadd.f32 0.0, %v3748
  %v3750 = vpop.f32.mrb[0].mxu0
  %3751 = vmatprep.mubr.f32.mxu0 0.0
  %3752 = vmatmul.mubr.f32.gmra.mrb[0].mxu0 %v3539
  %v3753 = vpop.f32.mrb[0].mxu0
  %v3754 = vadd.f32 0.0, %v3753
  %v3755 = vpop.f32.mrb[0].mxu0
  %3756 = vmatprep.mubr.f32.mxu0 0.0
  %3757 = vmatmul.mubr.f32.gmra.mrb[0].mxu0 %v3541
  %v3758 = vpop.f32.mrb[0].mxu0
  %v3759 = vadd.f32 0.0, %v3758
  %v3760 = vpop.f32.mrb[0].mxu0
  %3761 = vmatprep.mubr.f32.mxu0 0.0
  %3762 = vmatmul.mubr.f32.gmra.mrb[0].mxu0 %v3543
  %v3763 = vpop.f32.mrb[0].mxu0
  %v3764 = vadd.f32 0.0, %v3763
  %v3765 = vpop.f32.mrb[0].mxu0
  %3766 = vmatprep.mubr.f32.mxu0 0.0
  %3767 = vmatmul.mubr.f32.gmra.mrb[0].mxu0 %v3545
  %v3768 = vpop.f32.mrb[0].mxu0
  %v3769 = vadd.f32 0.0, %v3768
  %v3770 = vpop.f32.mrb[0].mxu0
  %3771 = vmatprep.mubr.f32.mxu0 0.0
  %3772 = vmatmul.mubr.f32.gmra.mrb[0].mxu0 %v3547
  %v3773 = vpop.f32.mrb[0].mxu0
  %v3774 = vadd.f32 0.0, %v3773
  %v3775 = vpop.f32.mrb[0].mxu0
  %3776 = vdwg.mxu0
  %v3777 = vadd.f32 %v3419, %v3739
  %v3778 = vadd.f32 %v3420, %v3744
  %v3779 = vadd.f32 %v3421, %v3749
  %v3780 = vadd.f32 %v3422, %v3754
  %v3781 = vadd.f32 %v3423, %v3759
  %v3782 = vadd.f32 %v3424, %v3764
  %v3783 = vadd.f32 %v3425, %v3769
  %v3784 = vadd.f32 %v3426, %v3774
  %v3785 = vmax.f32 %v3654, %v3777
  %v3786 = vmax.f32 %v3655, %v3778
  %v3787 = vmax.f32 %v3656, %v3779
  %v3788 = vmax.f32 %v3657, %v3780
  %v3789 = vmax.f32 %v3658, %v3781
  %v3790 = vmax.f32 %v3659, %v3782
  %v3791 = vmax.f32 %v3660, %v3783
  %v3792 = vmax.f32 %v3661, %v3784
  %v3801 = vcombine.high %v3785, %v3785
  %v3803 = vunpack.c.l.s4 1983009808
  %v3804 = vunpack.c.0.s8 %v3803
  %v3805 = vlaneseq
  %v3806 = vshrl.u32 %v3805, 7
  %v3807 = vsub.s32 %v3804, %v3806
  %v3808 = vrot.slane %v3785, %v3807
  %v3810 = vunpack.c.l.s4 1983009808
  %v3811 = vunpack.c.0.s8 %v3810
  %v3812 = vlaneseq
  %v3813 = vshrl.u32 %v3812, 7
  %v3814 = vsub.s32 %v3811, %v3813
  %v3815 = vrot.slane %v3801, %v3814
  %v3816 = vcombine.high %v3808, %v3808
  %v3817 = vcombine.high %v3815, %v3815
  %v3818 = vcombine.high %v3786, %v3786
  %v3820 = vunpack.c.l.s4 1983009808
  %v3821 = vunpack.c.0.s8 %v3820
  %v3822 = vlaneseq
  %v3823 = vshrl.u32 %v3822, 7
  %v3824 = vsub.s32 %v3821, %v3823
  %v3825 = vrot.slane %v3786, %v3824
  %v3827 = vunpack.c.l.s4 1983009808
  %v3828 = vunpack.c.0.s8 %v3827
  %v3829 = vlaneseq
  %v3830 = vshrl.u32 %v3829, 7
  %v3831 = vsub.s32 %v3828, %v3830
  %v3832 = vrot.slane %v3818, %v3831
  %v3833 = vcombine.high %v3825, %v3825
  %v3834 = vcombine.high %v3832, %v3832
  %v3835 = vcombine.high %v3787, %v3787
  %v3837 = vunpack.c.l.s4 1983009808
  %v3838 = vunpack.c.0.s8 %v3837
  %v3839 = vlaneseq
  %v3840 = vshrl.u32 %v3839, 7
  %v3841 = vsub.s32 %v3838, %v3840
  %v3842 = vrot.slane %v3787, %v3841
  %v3844 = vunpack.c.l.s4 1983009808
  %v3845 = vunpack.c.0.s8 %v3844
  %v3846 = vlaneseq
  %v3847 = vshrl.u32 %v3846, 7
  %v3848 = vsub.s32 %v3845, %v3847
  %v3849 = vrot.slane %v3835, %v3848
  %v3850 = vcombine.high %v3842, %v3842
  %v3851 = vcombine.high %v3849, %v3849
  %v3852 = vcombine.high %v3788, %v3788
  %v3854 = vunpack.c.l.s4 1983009808
  %v3855 = vunpack.c.0.s8 %v3854
  %v3856 = vlaneseq
  %v3857 = vshrl.u32 %v3856, 7
  %v3858 = vsub.s32 %v3855, %v3857
  %v3859 = vrot.slane %v3788, %v3858
  %v3861 = vunpack.c.l.s4 1983009808
  %v3862 = vunpack.c.0.s8 %v3861
  %v3863 = vlaneseq
  %v3864 = vshrl.u32 %v3863, 7
  %v3865 = vsub.s32 %v3862, %v3864
  %v3866 = vrot.slane %v3852, %v3865
  %v3867 = vcombine.high %v3859, %v3859
  %v3868 = vcombine.high %v3866, %v3866
  %v3869 = vcombine.high %v3789, %v3789
  %v3871 = vunpack.c.l.s4 1983009808
  %v3872 = vunpack.c.0.s8 %v3871
  %v3873 = vlaneseq
  %v3874 = vshrl.u32 %v3873, 7
  %v3875 = vsub.s32 %v3872, %v3874
  %v3876 = vrot.slane %v3789, %v3875
  %v3878 = vunpack.c.l.s4 1983009808
  %v3879 = vunpack.c.0.s8 %v3878
  %v3880 = vlaneseq
  %v3881 = vshrl.u32 %v3880, 7
  %v3882 = vsub.s32 %v3879, %v3881
  %v3883 = vrot.slane %v3869, %v3882
  %v3884 = vcombine.high %v3876, %v3876
  %v3885 = vcombine.high %v3883, %v3883
  %v3886 = vcombine.high %v3790, %v3790
  %v3888 = vunpack.c.l.s4 1983009808
  %v3889 = vunpack.c.0.s8 %v3888
  %v3890 = vlaneseq
  %v3891 = vshrl.u32 %v3890, 7
  %v3892 = vsub.s32 %v3889, %v3891
  %v3893 = vrot.slane %v3790, %v3892
  %v3895 = vunpack.c.l.s4 1983009808
  %v3896 = vunpack.c.0.s8 %v3895
  %v3897 = vlaneseq
  %v3898 = vshrl.u32 %v3897, 7
  %v3899 = vsub.s32 %v3896, %v3898
  %v3900 = vrot.slane %v3886, %v3899
  %v3901 = vcombine.high %v3893, %v3893
  %v3902 = vcombine.high %v3900, %v3900
  %v3903 = vcombine.high %v3791, %v3791
  %v3905 = vunpack.c.l.s4 1983009808
  %v3906 = vunpack.c.0.s8 %v3905
  %v3907 = vlaneseq
  %v3908 = vshrl.u32 %v3907, 7
  %v3909 = vsub.s32 %v3906, %v3908
  %v3910 = vrot.slane %v3791, %v3909
  %v3912 = vunpack.c.l.s4 1983009808
  %v3913 = vunpack.c.0.s8 %v3912
  %v3914 = vlaneseq
  %v3915 = vshrl.u32 %v3914, 7
  %v3916 = vsub.s32 %v3913, %v3915
  %v3917 = vrot.slane %v3903, %v3916
  %v3918 = vcombine.high %v3910, %v3910
  %v3919 = vcombine.high %v3917, %v3917
  %v3920 = vcombine.high %v3792, %v3792
  %v3922 = vunpack.c.l.s4 1983009808
  %v3923 = vunpack.c.0.s8 %v3922
  %v3924 = vlaneseq
  %v3925 = vshrl.u32 %v3924, 7
  %v3926 = vsub.s32 %v3923, %v3925
  %v3927 = vrot.slane %v3792, %v3926
  %v3929 = vunpack.c.l.s4 1983009808
  %v3930 = vunpack.c.0.s8 %v3929
  %v3931 = vlaneseq
  %v3932 = vshrl.u32 %v3931, 7
  %v3933 = vsub.s32 %v3930, %v3932
  %v3934 = vrot.slane %v3920, %v3933
  %v3935 = vcombine.high %v3927, %v3927
  %v3936 = vcombine.high %v3934, %v3934
  %v3969 = vrot.slane %v3808, 7
  %v3970 = vrot.slane %v3969, 2
  %v3971 = vrot.slane %v3816, 7
  %v3972 = vrot.slane %v3971, 2
  %v3973 = vrot.slane %v3815, 7
  %v3974 = vrot.slane %v3973, 2
  %v3975 = vrot.slane %v3817, 7
  %v3976 = vrot.slane %v3975, 2
  %v3977 = vrot.slane %v3825, 7
  %v3978 = vrot.slane %v3977, 2
  %v3979 = vrot.slane %v3833, 7
  %v3980 = vrot.slane %v3979, 2
  %v3981 = vrot.slane %v3832, 7
  %v3982 = vrot.slane %v3981, 2
  %v3983 = vrot.slane %v3834, 7
  %v3984 = vrot.slane %v3983, 2
  %v3985 = vrot.slane %v3842, 7
  %v3986 = vrot.slane %v3985, 2
  %v3987 = vrot.slane %v3850, 7
  %v3988 = vrot.slane %v3987, 2
  %v3989 = vrot.slane %v3849, 7
  %v3990 = vrot.slane %v3989, 2
  %v3991 = vrot.slane %v3851, 7
  %v3992 = vrot.slane %v3991, 2
  %v3993 = vrot.slane %v3859, 7
  %v3994 = vrot.slane %v3993, 2
  %v3995 = vrot.slane %v3867, 7
  %v3996 = vrot.slane %v3995, 2
  %v3997 = vrot.slane %v3866, 7
  %v3998 = vrot.slane %v3997, 2
  %v3999 = vrot.slane %v3868, 7
  %v4000 = vrot.slane %v3999, 2
  %v4001 = vrot.slane %v3876, 7
  %v4002 = vrot.slane %v4001, 2
  %v4003 = vrot.slane %v3884, 7
  %v4004 = vrot.slane %v4003, 2
  %v4005 = vrot.slane %v3883, 7
  %v4006 = vrot.slane %v4005, 2
  %v4007 = vrot.slane %v3885, 7
  %v4008 = vrot.slane %v4007, 2
  %v4009 = vrot.slane %v3893, 7
  %v4010 = vrot.slane %v4009, 2
  %v4011 = vrot.slane %v3901, 7
  %v4012 = vrot.slane %v4011, 2
  %v4013 = vrot.slane %v3900, 7
  %v4014 = vrot.slane %v4013, 2
  %v4015 = vrot.slane %v3902, 7
  %v4016 = vrot.slane %v4015, 2
  %v4017 = vrot.slane %v3910, 7
  %v4018 = vrot.slane %v4017, 2
  %v4019 = vrot.slane %v3918, 7
  %v4020 = vrot.slane %v4019, 2
  %v4021 = vrot.slane %v3917, 7
  %v4022 = vrot.slane %v4021, 2
  %v4023 = vrot.slane %v3919, 7
  %v4024 = vrot.slane %v4023, 2
  %v4025 = vrot.slane %v3927, 7
  %v4026 = vrot.slane %v4025, 2
  %v4027 = vrot.slane %v3935, 7
  %v4028 = vrot.slane %v4027, 2
  %v4029 = vrot.slane %v3934, 7
  %v4030 = vrot.slane %v4029, 2
  %v4031 = vrot.slane %v3936, 7
  %v4032 = vrot.slane %v4031, 2
  %v4065 = vmax.f32 %v3808, %v3970
  %v4066 = vmax.f32 %v3816, %v3972
  %v4067 = vmax.f32 %v3815, %v3974
  %v4068 = vmax.f32 %v3817, %v3976
  %v4069 = vmax.f32 %v3825, %v3978
  %v4070 = vmax.f32 %v3833, %v3980
  %v4071 = vmax.f32 %v3832, %v3982
  %v4072 = vmax.f32 %v3834, %v3984
  %v4073 = vmax.f32 %v3842, %v3986
  %v4074 = vmax.f32 %v3850, %v3988
  %v4075 = vmax.f32 %v3849, %v3990
  %v4076 = vmax.f32 %v3851, %v3992
  %v4077 = vmax.f32 %v3859, %v3994
  %v4078 = vmax.f32 %v3867, %v3996
  %v4079 = vmax.f32 %v3866, %v3998
  %v4080 = vmax.f32 %v3868, %v4000
  %v4081 = vmax.f32 %v3876, %v4002
  %v4082 = vmax.f32 %v3884, %v4004
  %v4083 = vmax.f32 %v3883, %v4006
  %v4084 = vmax.f32 %v3885, %v4008
  %v4085 = vmax.f32 %v3893, %v4010
  %v4086 = vmax.f32 %v3901, %v4012
  %v4087 = vmax.f32 %v3900, %v4014
  %v4088 = vmax.f32 %v3902, %v4016
  %v4089 = vmax.f32 %v3910, %v4018
  %v4090 = vmax.f32 %v3918, %v4020
  %v4091 = vmax.f32 %v3917, %v4022
  %v4092 = vmax.f32 %v3919, %v4024
  %v4093 = vmax.f32 %v3927, %v4026
  %v4094 = vmax.f32 %v3935, %v4028
  %v4095 = vmax.f32 %v3934, %v4030
  %v4096 = vmax.f32 %v3936, %v4032
  %v4097 = vld [vmem:[%s6] sm:$0x1]
  %v4099 = vlaneseq
  %v4100 = vshrl.u32 %v4099, 7
  %v4101 = vsub.s32 0, %v4100
  %v4102 = vrot.slane %v4097, %v4101
  %v4104 = vunpack.c.l.s4 1983009808
  %v4105 = vunpack.c.0.s8 %v4104
  %v4106 = vlaneseq
  %v4107 = vshrl.u32 %v4106, 7
  %v4108 = vsub.s32 %v4105, %v4107
  %v4109 = vrot.slane %v4102, %v4108
  %v4110 = vcombine.high %v4109, %v4109
  %v4111 = vrot.slane %v4109, 1
  %v4112 = vrot.slane %v4110, 1
  %v4117 = vadd.f32 %v4065, %v4109
  %v4118 = vadd.f32 %v4066, %v4111
  %v4119 = vadd.f32 %v4067, %v4110
  %v4120 = vadd.f32 %v4068, %v4112
  %v4121 = vadd.f32 %v4069, %v4109
  %v4122 = vadd.f32 %v4070, %v4111
  %v4123 = vadd.f32 %v4071, %v4110
  %v4124 = vadd.f32 %v4072, %v4112
  %v4125 = vadd.f32 %v4073, %v4109
  %v4126 = vadd.f32 %v4074, %v4111
  %v4127 = vadd.f32 %v4075, %v4110
  %v4128 = vadd.f32 %v4076, %v4112
  %v4129 = vadd.f32 %v4077, %v4109
  %v4130 = vadd.f32 %v4078, %v4111
  %v4131 = vadd.f32 %v4079, %v4110
  %v4132 = vadd.f32 %v4080, %v4112
  %v4133 = vadd.f32 %v4081, %v4109
  %v4134 = vadd.f32 %v4082, %v4111
  %v4135 = vadd.f32 %v4083, %v4110
  %v4136 = vadd.f32 %v4084, %v4112
  %v4137 = vadd.f32 %v4085, %v4109
  %v4138 = vadd.f32 %v4086, %v4111
  %v4139 = vadd.f32 %v4087, %v4110
  %v4140 = vadd.f32 %v4088, %v4112
  %v4141 = vadd.f32 %v4089, %v4109
  %v4142 = vadd.f32 %v4090, %v4111
  %v4143 = vadd.f32 %v4091, %v4110
  %v4144 = vadd.f32 %v4092, %v4112
  %v4145 = vadd.f32 %v4093, %v4109
  %v4146 = vadd.f32 %v4094, %v4111
  %v4147 = vadd.f32 %v4095, %v4110
  %v4148 = vadd.f32 %v4096, %v4112
  %v4149 = vmax.f32 %v4117, 0.0
  %v4150 = vmax.f32 %v4118, 0.0
  %v4151 = vmax.f32 %v4119, 0.0
  %v4152 = vmax.f32 %v4120, 0.0
  %v4153 = vmax.f32 %v4121, 0.0
  %v4154 = vmax.f32 %v4122, 0.0
  %v4155 = vmax.f32 %v4123, 0.0
  %v4156 = vmax.f32 %v4124, 0.0
  %v4157 = vmax.f32 %v4125, 0.0
  %v4158 = vmax.f32 %v4126, 0.0
  %v4159 = vmax.f32 %v4127, 0.0
  %v4160 = vmax.f32 %v4128, 0.0
  %v4161 = vmax.f32 %v4129, 0.0
  %v4162 = vmax.f32 %v4130, 0.0
  %v4163 = vmax.f32 %v4131, 0.0
  %v4164 = vmax.f32 %v4132, 0.0
  %v4165 = vmax.f32 %v4133, 0.0
  %v4166 = vmax.f32 %v4134, 0.0
  %v4167 = vmax.f32 %v4135, 0.0
  %v4168 = vmax.f32 %v4136, 0.0
  %v4169 = vmax.f32 %v4137, 0.0
  %v4170 = vmax.f32 %v4138, 0.0
  %v4171 = vmax.f32 %v4139, 0.0
  %v4172 = vmax.f32 %v4140, 0.0
  %v4173 = vmax.f32 %v4141, 0.0
  %v4174 = vmax.f32 %v4142, 0.0
  %v4175 = vmax.f32 %v4143, 0.0
  %v4176 = vmax.f32 %v4144, 0.0
  %v4177 = vmax.f32 %v4145, 0.0
  %v4178 = vmax.f32 %v4146, 0.0
  %v4179 = vmax.f32 %v4147, 0.0
  %v4180 = vmax.f32 %v4148, 0.0
  %v4181 = vld [vmem:[%s7] sm:$0xff]
  %v4182 = vld [vmem:[%s7 + $0x8] sm:$0xff]
  %v4183 = vld [vmem:[%s7 + $0x10] sm:$0xff]
  %v4184 = vld [vmem:[%s7 + $0x18] sm:$0xff]
  %v4185 = vld [vmem:[%s7 + $0x20] sm:$0xff]
  %v4186 = vld [vmem:[%s7 + $0x28] sm:$0xff]
  %v4187 = vld [vmem:[%s7 + $0x30] sm:$0xff]
  %v4188 = vld [vmem:[%s7 + $0x38] sm:$0xff]
  %s4189 = scalar_lea.vmem %s7, 64
  %v4190 = vld [vmem:[%s4189] sm:$0xff]
  %v4191 = vld [vmem:[%s4189 + $0x8] sm:$0xff]
  %v4192 = vld [vmem:[%s4189 + $0x10] sm:$0xff]
  %v4193 = vld [vmem:[%s4189 + $0x18] sm:$0xff]
  %v4194 = vld [vmem:[%s4189 + $0x20] sm:$0xff]
  %v4195 = vld [vmem:[%s4189 + $0x28] sm:$0xff]
  %v4196 = vld [vmem:[%s4189 + $0x30] sm:$0xff]
  %v4197 = vld [vmem:[%s4189 + $0x38] sm:$0xff]
  %v4206 = vlaneseq
  %v4207 = vshrl.u32 %v4206, 7
  %v4208 = vsub.s32 0, %v4207
  %v4209 = vrot.slane %v4150, %v4208
  %v4210 = vlaneseq
  %v4211 = vshrl.u32 %v4210, 7
  %v4212 = vsub.s32 0, %v4211
  %v4213 = vrot.slane %v4154, %v4212
  %v4214 = vlaneseq
  %v4215 = vshrl.u32 %v4214, 7
  %v4216 = vsub.s32 0, %v4215
  %v4217 = vrot.slane %v4158, %v4216
  %v4218 = vlaneseq
  %v4219 = vshrl.u32 %v4218, 7
  %v4220 = vsub.s32 0, %v4219
  %v4221 = vrot.slane %v4162, %v4220
  %v4222 = vlaneseq
  %v4223 = vshrl.u32 %v4222, 7
  %v4224 = vsub.s32 0, %v4223
  %v4225 = vrot.slane %v4166, %v4224
  %v4226 = vlaneseq
  %v4227 = vshrl.u32 %v4226, 7
  %v4228 = vsub.s32 0, %v4227
  %v4229 = vrot.slane %v4170, %v4228
  %v4230 = vlaneseq
  %v4231 = vshrl.u32 %v4230, 7
  %v4232 = vsub.s32 0, %v4231
  %v4233 = vrot.slane %v4174, %v4232
  %v4234 = vlaneseq
  %v4235 = vshrl.u32 %v4234, 7
  %v4236 = vsub.s32 0, %v4235
  %v4237 = vrot.slane %v4178, %v4236
  %v4238 = vsel %vm2089, %v4213, %v4209
  %v4239 = vsel %vm2091, %v4217, %v4238
  %v4240 = vsel %vm2093, %v4221, %v4239
  %v4241 = vsel %vm2095, %v4225, %v4240
  %v4242 = vsel %vm2097, %v4229, %v4241
  %v4243 = vsel %vm2099, %v4233, %v4242
  %v4244 = vsel %vm2101, %v4237, %v4243
  %vm4245 = vcmask 523264
  %v4246 = vsel %vm4245, %v4244, 0
  %4248 = vmatprep.subr.mxu0 0.0
  %4249 = vmatpush1.msra.mxu0 %v4190
  %4250 = vmatprep.subr.mxu0 0.0
  %4251 = vmatpush1.msra.mxu0 %v4191
  %4252 = vmatprep.subr.mxu0 0.0
  %4253 = vmatpush1.msra.mxu0 %v4192
  %4254 = vmatprep.subr.mxu0 0.0
  %4255 = vmatpush1.msra.mxu0 %v4193
  %4256 = vmatprep.subr.mxu0 0.0
  %4257 = vmatpush1.msra.mxu0 %v4194
  %4258 = vmatprep.subr.mxu0 0.0
  %4259 = vmatpush1.msra.mxu0 %v4195
  %4260 = vmatprep.subr.mxu0 0.0
  %4261 = vmatpush1.msra.mxu0 %v4196
  %4262 = vmatprep.subr.mxu0 0.0
  %4263 = vmatpush1.msra.mxu0 %v4197
  %4264 = vmatprep.subr.mxu0 0.0
  %4265 = vmatpush1.msra.mxu0 0.0
  %4266 = vmatprep.subr.mxu0 0.0
  %4267 = vmatpush1.msra.mxu0 0.0
  %4268 = vmatprep.subr.mxu0 0.0
  %4269 = vmatpush1.msra.mxu0 0.0
  %4270 = vmatprep.subr.mxu0 0.0
  %4271 = vmatpush1.msra.mxu0 0.0
  %4272 = vmatprep.subr.mxu0 0.0
  %4273 = vmatpush1.msra.mxu0 0.0
  %4274 = vmatprep.subr.mxu0 0.0
  %4275 = vmatpush1.msra.mxu0 0.0
  %4276 = vmatprep.subr.mxu0 0.0
  %4277 = vmatpush1.msra.mxu0 0.0
  %4278 = vmatprep.subr.mxu0 0.0
  %4279 = vmatpush1.msra.mxu0 0.0
  %4280 = vmatprep.subr.mxu0 0.0
  %4281 = vmatpush1.msra.mxu0 0.0
  %4282 = vmatprep.subr.mxu0 0.0
  %4283 = vmatpush1.msra.mxu0 0.0
  %4284 = vmatprep.subr.mxu0 0.0
  %4285 = vmatpush1.msra.mxu0 0.0
  %4286 = vmatprep.subr.mxu0 0.0
  %4287 = vmatpush1.msra.mxu0 0.0
  %4288 = vmatprep.subr.mxu0 0.0
  %4289 = vmatpush1.msra.mxu0 0.0
  %4290 = vmatprep.subr.mxu0 0.0
  %4291 = vmatpush1.msra.mxu0 0.0
  %4292 = vmatprep.subr.mxu0 0.0
  %4293 = vmatpush1.msra.mxu0 0.0
  %4294 = vmatprep.subr.mxu0 0.0
  %4295 = vmatpush1.msra.mxu0 0.0
  %4296 = vmatprep.subr.mxu0 0.0
  %4297 = vmatpush1.msra.mxu0 0.0
  %4298 = vmatprep.subr.mxu0 0.0
  %4299 = vmatpush1.msra.mxu0 0.0
  %4300 = vmatprep.subr.mxu0 0.0
  %4301 = vmatpush1.msra.mxu0 0.0
  %4302 = vmatprep.subr.mxu0 0.0
  %4303 = vmatpush1.msra.mxu0 0.0
  %4304 = vmatprep.subr.mxu0 0.0
  %4305 = vmatpush1.msra.mxu0 0.0
  %4306 = vmatprep.subr.mxu0 0.0
  %4307 = vmatpush1.msra.mxu0 0.0
  %4308 = vmatprep.subr.mxu0 0.0
  %4309 = vmatpush1.msra.mxu0 0.0
  %4310 = vmatprep.subr.mxu0 0.0
  %4311 = vmatpush1.msra.mxu0 0.0
  %4312 = vmatprep.mubr.f32.mxu0 0.0
  %4313 = vmatmul.mubr.f32.gmra.mrb[0].mxu0 %v4246
  %v4314 = vpop.f32.mrb[0].mxu0
  %v4315 = vadd.f32 0.0, %v4314
  %v4316 = vpop.f32.mrb[0].mxu0
  %4317 = vdwg.mxu0
  %v4326 = vlaneseq
  %v4327 = vshrl.u32 %v4326, 7
  %v4328 = vsub.s32 0, %v4327
  %v4329 = vrot.slane %v4149, %v4328
  %v4330 = vlaneseq
  %v4331 = vshrl.u32 %v4330, 7
  %v4332 = vsub.s32 0, %v4331
  %v4333 = vrot.slane %v4153, %v4332
  %v4334 = vlaneseq
  %v4335 = vshrl.u32 %v4334, 7
  %v4336 = vsub.s32 0, %v4335
  %v4337 = vrot.slane %v4157, %v4336
  %v4338 = vlaneseq
  %v4339 = vshrl.u32 %v4338, 7
  %v4340 = vsub.s32 0, %v4339
  %v4341 = vrot.slane %v4161, %v4340
  %v4342 = vlaneseq
  %v4343 = vshrl.u32 %v4342, 7
  %v4344 = vsub.s32 0, %v4343
  %v4345 = vrot.slane %v4165, %v4344
  %v4346 = vlaneseq
  %v4347 = vshrl.u32 %v4346, 7
  %v4348 = vsub.s32 0, %v4347
  %v4349 = vrot.slane %v4169, %v4348
  %v4350 = vlaneseq
  %v4351 = vshrl.u32 %v4350, 7
  %v4352 = vsub.s32 0, %v4351
  %v4353 = vrot.slane %v4173, %v4352
  %v4354 = vlaneseq
  %v4355 = vshrl.u32 %v4354, 7
  %v4356 = vsub.s32 0, %v4355
  %v4357 = vrot.slane %v4177, %v4356
  %v4358 = vsel %vm2089, %v4333, %v4329
  %v4359 = vsel %vm2091, %v4337, %v4358
  %v4360 = vsel %vm2093, %v4341, %v4359
  %v4361 = vsel %vm2095, %v4345, %v4360
  %v4362 = vsel %vm2097, %v4349, %v4361
  %v4363 = vsel %vm2099, %v4353, %v4362
  %v4364 = vsel %vm2101, %v4357, %v4363
  %v4365 = vsel %vm4245, %v4364, 0
  %4367 = vmatprep.subr.mxu0 0.0
  %4368 = vmatpush1.msra.mxu0 %v4181
  %4369 = vmatprep.subr.mxu0 0.0
  %4370 = vmatpush1.msra.mxu0 %v4182
  %4371 = vmatprep.subr.mxu0 0.0
  %4372 = vmatpush1.msra.mxu0 %v4183
  %4373 = vmatprep.subr.mxu0 0.0
  %4374 = vmatpush1.msra.mxu0 %v4184
  %4375 = vmatprep.subr.mxu0 0.0
  %4376 = vmatpush1.msra.mxu0 %v4185
  %4377 = vmatprep.subr.mxu0 0.0
  %4378 = vmatpush1.msra.mxu0 %v4186
  %4379 = vmatprep.subr.mxu0 0.0
  %4380 = vmatpush1.msra.mxu0 %v4187
  %4381 = vmatprep.subr.mxu0 0.0
  %4382 = vmatpush1.msra.mxu0 %v4188
  %4383 = vmatprep.subr.mxu0 0.0
  %4384 = vmatpush1.msra.mxu0 0.0
  %4385 = vmatprep.subr.mxu0 0.0
  %4386 = vmatpush1.msra.mxu0 0.0
  %4387 = vmatprep.subr.mxu0 0.0
  %4388 = vmatpush1.msra.mxu0 0.0
  %4389 = vmatprep.subr.mxu0 0.0
  %4390 = vmatpush1.msra.mxu0 0.0
  %4391 = vmatprep.subr.mxu0 0.0
  %4392 = vmatpush1.msra.mxu0 0.0
  %4393 = vmatprep.subr.mxu0 0.0
  %4394 = vmatpush1.msra.mxu0 0.0
  %4395 = vmatprep.subr.mxu0 0.0
  %4396 = vmatpush1.msra.mxu0 0.0
  %4397 = vmatprep.subr.mxu0 0.0
  %4398 = vmatpush1.msra.mxu0 0.0
  %4399 = vmatprep.subr.mxu0 0.0
  %4400 = vmatpush1.msra.mxu0 0.0
  %4401 = vmatprep.subr.mxu0 0.0
  %4402 = vmatpush1.msra.mxu0 0.0
  %4403 = vmatprep.subr.mxu0 0.0
  %4404 = vmatpush1.msra.mxu0 0.0
  %4405 = vmatprep.subr.mxu0 0.0
  %4406 = vmatpush1.msra.mxu0 0.0
  %4407 = vmatprep.subr.mxu0 0.0
  %4408 = vmatpush1.msra.mxu0 0.0
  %4409 = vmatprep.subr.mxu0 0.0
  %4410 = vmatpush1.msra.mxu0 0.0
  %4411 = vmatprep.subr.mxu0 0.0
  %4412 = vmatpush1.msra.mxu0 0.0
  %4413 = vmatprep.subr.mxu0 0.0
  %4414 = vmatpush1.msra.mxu0 0.0
  %4415 = vmatprep.subr.mxu0 0.0
  %4416 = vmatpush1.msra.mxu0 0.0
  %4417 = vmatprep.subr.mxu0 0.0
  %4418 = vmatpush1.msra.mxu0 0.0
  %4419 = vmatprep.subr.mxu0 0.0
  %4420 = vmatpush1.msra.mxu0 0.0
  %4421 = vmatprep.subr.mxu0 0.0
  %4422 = vmatpush1.msra.mxu0 0.0
  %4423 = vmatprep.subr.mxu0 0.0
  %4424 = vmatpush1.msra.mxu0 0.0
  %4425 = vmatprep.subr.mxu0 0.0
  %4426 = vmatpush1.msra.mxu0 0.0
  %4427 = vmatprep.subr.mxu0 0.0
  %4428 = vmatpush1.msra.mxu0 0.0
  %4429 = vmatprep.subr.mxu0 0.0
  %4430 = vmatpush1.msra.mxu0 0.0
  %4431 = vmatprep.mubr.f32.mxu0 0.0
  %4432 = vmatmul.mubr.f32.gmra.mrb[0].mxu0 %v4365
  %v4433 = vpop.f32.mrb[0].mxu0
  %v4434 = vadd.f32 %v4315, %v4433
  %v4435 = vpop.f32.mrb[0].mxu0
  %4436 = vdwg.mxu0
  %s4437 = scalar_lea.vmem %s7, 128
  %v4438 = vld [vmem:[%s4437] sm:$0xff]
  %v4439 = vld [vmem:[%s4437 + $0x8] sm:$0xff]
  %v4440 = vld [vmem:[%s4437 + $0x10] sm:$0xff]
  %v4441 = vld [vmem:[%s4437 + $0x18] sm:$0xff]
  %v4442 = vld [vmem:[%s4437 + $0x20] sm:$0xff]
  %v4443 = vld [vmem:[%s4437 + $0x28] sm:$0xff]
  %v4444 = vld [vmem:[%s4437 + $0x30] sm:$0xff]
  %v4445 = vld [vmem:[%s4437 + $0x38] sm:$0xff]
  %v4454 = vlaneseq
  %v4455 = vshrl.u32 %v4454, 7
  %v4456 = vsub.s32 0, %v4455
  %v4457 = vrot.slane %v4151, %v4456
  %v4458 = vlaneseq
  %v4459 = vshrl.u32 %v4458, 7
  %v4460 = vsub.s32 0, %v4459
  %v4461 = vrot.slane %v4155, %v4460
  %v4462 = vlaneseq
  %v4463 = vshrl.u32 %v4462, 7
  %v4464 = vsub.s32 0, %v4463
  %v4465 = vrot.slane %v4159, %v4464
  %v4466 = vlaneseq
  %v4467 = vshrl.u32 %v4466, 7
  %v4468 = vsub.s32 0, %v4467
  %v4469 = vrot.slane %v4163, %v4468
  %v4470 = vlaneseq
  %v4471 = vshrl.u32 %v4470, 7
  %v4472 = vsub.s32 0, %v4471
  %v4473 = vrot.slane %v4167, %v4472
  %v4474 = vlaneseq
  %v4475 = vshrl.u32 %v4474, 7
  %v4476 = vsub.s32 0, %v4475
  %v4477 = vrot.slane %v4171, %v4476
  %v4478 = vlaneseq
  %v4479 = vshrl.u32 %v4478, 7
  %v4480 = vsub.s32 0, %v4479
  %v4481 = vrot.slane %v4175, %v4480
  %v4482 = vlaneseq
  %v4483 = vshrl.u32 %v4482, 7
  %v4484 = vsub.s32 0, %v4483
  %v4485 = vrot.slane %v4179, %v4484
  %v4486 = vsel %vm2089, %v4461, %v4457
  %v4487 = vsel %vm2091, %v4465, %v4486
  %v4488 = vsel %vm2093, %v4469, %v4487
  %v4489 = vsel %vm2095, %v4473, %v4488
  %v4490 = vsel %vm2097, %v4477, %v4489
  %v4491 = vsel %vm2099, %v4481, %v4490
  %v4492 = vsel %vm2101, %v4485, %v4491
  %v4493 = vsel %vm4245, %v4492, 0
  %4495 = vmatprep.subr.mxu0 0.0
  %4496 = vmatpush1.msra.mxu0 %v4438
  %4497 = vmatprep.subr.mxu0 0.0
  %4498 = vmatpush1.msra.mxu0 %v4439
  %4499 = vmatprep.subr.mxu0 0.0
  %4500 = vmatpush1.msra.mxu0 %v4440
  %4501 = vmatprep.subr.mxu0 0.0
  %4502 = vmatpush1.msra.mxu0 %v4441
  %4503 = vmatprep.subr.mxu0 0.0
  %4504 = vmatpush1.msra.mxu0 %v4442
  %4505 = vmatprep.subr.mxu0 0.0
  %4506 = vmatpush1.msra.mxu0 %v4443
  %4507 = vmatprep.subr.mxu0 0.0
  %4508 = vmatpush1.msra.mxu0 %v4444
  %4509 = vmatprep.subr.mxu0 0.0
  %4510 = vmatpush1.msra.mxu0 %v4445
  %4511 = vmatprep.subr.mxu0 0.0
  %4512 = vmatpush1.msra.mxu0 0.0
  %4513 = vmatprep.subr.mxu0 0.0
  %4514 = vmatpush1.msra.mxu0 0.0
  %4515 = vmatprep.subr.mxu0 0.0
  %4516 = vmatpush1.msra.mxu0 0.0
  %4517 = vmatprep.subr.mxu0 0.0
  %4518 = vmatpush1.msra.mxu0 0.0
  %4519 = vmatprep.subr.mxu0 0.0
  %4520 = vmatpush1.msra.mxu0 0.0
  %4521 = vmatprep.subr.mxu0 0.0
  %4522 = vmatpush1.msra.mxu0 0.0
  %4523 = vmatprep.subr.mxu0 0.0
  %4524 = vmatpush1.msra.mxu0 0.0
  %4525 = vmatprep.subr.mxu0 0.0
  %4526 = vmatpush1.msra.mxu0 0.0
  %4527 = vmatprep.subr.mxu0 0.0
  %4528 = vmatpush1.msra.mxu0 0.0
  %4529 = vmatprep.subr.mxu0 0.0
  %4530 = vmatpush1.msra.mxu0 0.0
  %4531 = vmatprep.subr.mxu0 0.0
  %4532 = vmatpush1.msra.mxu0 0.0
  %4533 = vmatprep.subr.mxu0 0.0
  %4534 = vmatpush1.msra.mxu0 0.0
  %4535 = vmatprep.subr.mxu0 0.0
  %4536 = vmatpush1.msra.mxu0 0.0
  %4537 = vmatprep.subr.mxu0 0.0
  %4538 = vmatpush1.msra.mxu0 0.0
  %4539 = vmatprep.subr.mxu0 0.0
  %4540 = vmatpush1.msra.mxu0 0.0
  %4541 = vmatprep.subr.mxu0 0.0
  %4542 = vmatpush1.msra.mxu0 0.0
  %4543 = vmatprep.subr.mxu0 0.0
  %4544 = vmatpush1.msra.mxu0 0.0
  %4545 = vmatprep.subr.mxu0 0.0
  %4546 = vmatpush1.msra.mxu0 0.0
  %4547 = vmatprep.subr.mxu0 0.0
  %4548 = vmatpush1.msra.mxu0 0.0
  %4549 = vmatprep.subr.mxu0 0.0
  %4550 = vmatpush1.msra.mxu0 0.0
  %4551 = vmatprep.subr.mxu0 0.0
  %4552 = vmatpush1.msra.mxu0 0.0
  %4553 = vmatprep.subr.mxu0 0.0
  %4554 = vmatpush1.msra.mxu0 0.0
  %4555 = vmatprep.subr.mxu0 0.0
  %4556 = vmatpush1.msra.mxu0 0.0
  %4557 = vmatprep.subr.mxu0 0.0
  %4558 = vmatpush1.msra.mxu0 0.0
  %4559 = vmatprep.mubr.f32.mxu0 0.0
  %4560 = vmatmul.mubr.f32.gmra.mrb[0].mxu0 %v4493
  %v4561 = vpop.f32.mrb[0].mxu0
  %v4562 = vadd.f32 0.0, %v4561
  %v4563 = vpop.f32.mrb[0].mxu0
  %4564 = vdwg.mxu0
  %v4565 = vadd.f32 %v4434, %v4562
  %s4566 = scalar_lea.vmem %s7, 192
  %v4567 = vld [vmem:[%s4566] sm:$0xff]
  %v4568 = vld [vmem:[%s4566 + $0x8] sm:$0xff]
  %v4569 = vld [vmem:[%s4566 + $0x10] sm:$0xff]
  %v4570 = vld [vmem:[%s4566 + $0x18] sm:$0xff]
  %v4571 = vld [vmem:[%s4566 + $0x20] sm:$0xff]
  %v4572 = vld [vmem:[%s4566 + $0x28] sm:$0xff]
  %v4573 = vld [vmem:[%s4566 + $0x30] sm:$0xff]
  %v4574 = vld [vmem:[%s4566 + $0x38] sm:$0xff]
  %v4583 = vlaneseq
  %v4584 = vshrl.u32 %v4583, 7
  %v4585 = vsub.s32 0, %v4584
  %v4586 = vrot.slane %v4152, %v4585
  %v4587 = vlaneseq
  %v4588 = vshrl.u32 %v4587, 7
  %v4589 = vsub.s32 0, %v4588
  %v4590 = vrot.slane %v4156, %v4589
  %v4591 = vlaneseq
  %v4592 = vshrl.u32 %v4591, 7
  %v4593 = vsub.s32 0, %v4592
  %v4594 = vrot.slane %v4160, %v4593
  %v4595 = vlaneseq
  %v4596 = vshrl.u32 %v4595, 7
  %v4597 = vsub.s32 0, %v4596
  %v4598 = vrot.slane %v4164, %v4597
  %v4599 = vlaneseq
  %v4600 = vshrl.u32 %v4599, 7
  %v4601 = vsub.s32 0, %v4600
  %v4602 = vrot.slane %v4168, %v4601
  %v4603 = vlaneseq
  %v4604 = vshrl.u32 %v4603, 7
  %v4605 = vsub.s32 0, %v4604
  %v4606 = vrot.slane %v4172, %v4605
  %v4607 = vlaneseq
  %v4608 = vshrl.u32 %v4607, 7
  %v4609 = vsub.s32 0, %v4608
  %v4610 = vrot.slane %v4176, %v4609
  %v4611 = vlaneseq
  %v4612 = vshrl.u32 %v4611, 7
  %v4613 = vsub.s32 0, %v4612
  %v4614 = vrot.slane %v4180, %v4613
  %v4615 = vsel %vm2089, %v4590, %v4586
  %v4616 = vsel %vm2091, %v4594, %v4615
  %v4617 = vsel %vm2093, %v4598, %v4616
  %v4618 = vsel %vm2095, %v4602, %v4617
  %v4619 = vsel %vm2097, %v4606, %v4618
  %v4620 = vsel %vm2099, %v4610, %v4619
  %v4621 = vsel %vm2101, %v4614, %v4620
  %v4622 = vsel %vm4245, %v4621, 0
  %4624 = vmatprep.subr.mxu0 0.0
  %4625 = vmatpush1.msra.mxu0 %v4567
  %4626 = vmatprep.subr.mxu0 0.0
  %4627 = vmatpush1.msra.mxu0 %v4568
  %4628 = vmatprep.subr.mxu0 0.0
  %4629 = vmatpush1.msra.mxu0 %v4569
  %4630 = vmatprep.subr.mxu0 0.0
  %4631 = vmatpush1.msra.mxu0 %v4570
  %4632 = vmatprep.subr.mxu0 0.0
  %4633 = vmatpush1.msra.mxu0 %v4571
  %4634 = vmatprep.subr.mxu0 0.0
  %4635 = vmatpush1.msra.mxu0 %v4572
  %4636 = vmatprep.subr.mxu0 0.0
  %4637 = vmatpush1.msra.mxu0 %v4573
  %4638 = vmatprep.subr.mxu0 0.0
  %4639 = vmatpush1.msra.mxu0 %v4574
  %4640 = vmatprep.subr.mxu0 0.0
  %4641 = vmatpush1.msra.mxu0 0.0
  %4642 = vmatprep.subr.mxu0 0.0
  %4643 = vmatpush1.msra.mxu0 0.0
  %4644 = vmatprep.subr.mxu0 0.0
  %4645 = vmatpush1.msra.mxu0 0.0
  %4646 = vmatprep.subr.mxu0 0.0
  %4647 = vmatpush1.msra.mxu0 0.0
  %4648 = vmatprep.subr.mxu0 0.0
  %4649 = vmatpush1.msra.mxu0 0.0
  %4650 = vmatprep.subr.mxu0 0.0
  %4651 = vmatpush1.msra.mxu0 0.0
  %4652 = vmatprep.subr.mxu0 0.0
  %4653 = vmatpush1.msra.mxu0 0.0
  %4654 = vmatprep.subr.mxu0 0.0
  %4655 = vmatpush1.msra.mxu0 0.0
  %4656 = vmatprep.subr.mxu0 0.0
  %4657 = vmatpush1.msra.mxu0 0.0
  %4658 = vmatprep.subr.mxu0 0.0
  %4659 = vmatpush1.msra.mxu0 0.0
  %4660 = vmatprep.subr.mxu0 0.0
  %4661 = vmatpush1.msra.mxu0 0.0
  %4662 = vmatprep.subr.mxu0 0.0
  %4663 = vmatpush1.msra.mxu0 0.0
  %4664 = vmatprep.subr.mxu0 0.0
  %4665 = vmatpush1.msra.mxu0 0.0
  %4666 = vmatprep.subr.mxu0 0.0
  %4667 = vmatpush1.msra.mxu0 0.0
  %4668 = vmatprep.subr.mxu0 0.0
  %4669 = vmatpush1.msra.mxu0 0.0
  %4670 = vmatprep.subr.mxu0 0.0
  %4671 = vmatpush1.msra.mxu0 0.0
  %4672 = vmatprep.subr.mxu0 0.0
  %4673 = vmatpush1.msra.mxu0 0.0
  %4674 = vmatprep.subr.mxu0 0.0
  %4675 = vmatpush1.msra.mxu0 0.0
  %4676 = vmatprep.subr.mxu0 0.0
  %4677 = vmatpush1.msra.mxu0 0.0
  %4678 = vmatprep.subr.mxu0 0.0
  %4679 = vmatpush1.msra.mxu0 0.0
  %4680 = vmatprep.subr.mxu0 0.0
  %4681 = vmatpush1.msra.mxu0 0.0
  %4682 = vmatprep.subr.mxu0 0.0
  %4683 = vmatpush1.msra.mxu0 0.0
  %4684 = vmatprep.subr.mxu0 0.0
  %4685 = vmatpush1.msra.mxu0 0.0
  %4686 = vmatprep.subr.mxu0 0.0
  %4687 = vmatpush1.msra.mxu0 0.0
  %4688 = vmatprep.mubr.f32.mxu0 0.0
  %4689 = vmatmul.mubr.f32.gmra.mrb[0].mxu0 %v4622
  %v4690 = vpop.f32.mrb[0].mxu0
  %v4691 = vadd.f32 0.0, %v4690
  %v4692 = vpop.f32.mrb[0].mxu0
  %4693 = vdwg.mxu0
  %v4694 = vadd.f32 %v4565, %v4691
  %v4695 = vld [vmem:[%s8] sm:$0x1]
  %v4697 = vlaneseq
  %v4698 = vshrl.u32 %v4697, 7
  %v4699 = vsub.s32 0, %v4698
  %v4700 = vrot.slane %v4695, %v4699
  %v4702 = vadd.f32 %v4694, %v4700
  %v4703 = vmax.f32 %v4702, 0.0
  %v4704 = vld [vmem:[%s9] sm:$0xff]
  %v4705 = vld [vmem:[%s9 + $0x8] sm:$0xff]
  %v4706 = vld [vmem:[%s9 + $0x10] sm:$0xff]
  %v4707 = vld [vmem:[%s9 + $0x18] sm:$0xff]
  %v4708 = vld [vmem:[%s9 + $0x20] sm:$0xff]
  %v4709 = vld [vmem:[%s9 + $0x28] sm:$0xff]
  %v4710 = vld [vmem:[%s9 + $0x30] sm:$0xff]
  %v4711 = vld [vmem:[%s9 + $0x38] sm:$0xff]
  %v4712 = vld [vmem:[%s9 + $0x40] sm:$0xff]
  %v4713 = vld [vmem:[%s9 + $0x48] sm:$0xff]
  %v4714 = vld [vmem:[%s9 + $0x50] sm:$0xff]
  %v4715 = vld [vmem:[%s9 + $0x58] sm:$0xff]
  %v4716 = vld [vmem:[%s9 + $0x60] sm:$0xff]
  %v4717 = vld [vmem:[%s9 + $0x68] sm:$0xff]
  %v4718 = vld [vmem:[%s9 + $0x70] sm:$0xff]
  %v4719 = vld [vmem:[%s9 + $0x78] sm:$0xff]
  %v4720 = vld [vmem:[%s10] sm:$0x1]
  %v4722 = vlaneseq
  %v4723 = vshrl.u32 %v4722, 7
  %v4724 = vsub.s32 0, %v4723
  %v4725 = vrot.slane %v4720, %v4724
  %4727 = vmatprep.subr.mxu0 0.0
  %4728 = vmatpush1.msra.mxu0 %v4704
  %4729 = vmatprep.subr.mxu0 0.0
  %4730 = vmatpush1.msra.mxu0 %v4705
  %4731 = vmatprep.subr.mxu0 0.0
  %4732 = vmatpush1.msra.mxu0 %v4706
  %4733 = vmatprep.subr.mxu0 0.0
  %4734 = vmatpush1.msra.mxu0 %v4707
  %4735 = vmatprep.subr.mxu0 0.0
  %4736 = vmatpush1.msra.mxu0 %v4708
  %4737 = vmatprep.subr.mxu0 0.0
  %4738 = vmatpush1.msra.mxu0 %v4709
  %4739 = vmatprep.subr.mxu0 0.0
  %4740 = vmatpush1.msra.mxu0 %v4710
  %4741 = vmatprep.subr.mxu0 0.0
  %4742 = vmatpush1.msra.mxu0 %v4711
  %4743 = vmatprep.subr.mxu0 0.0
  %4744 = vmatpush1.msra.mxu0 %v4712
  %4745 = vmatprep.subr.mxu0 0.0
  %4746 = vmatpush1.msra.mxu0 %v4713
  %4747 = vmatprep.subr.mxu0 0.0
  %4748 = vmatpush1.msra.mxu0 %v4714
  %4749 = vmatprep.subr.mxu0 0.0
  %4750 = vmatpush1.msra.mxu0 %v4715
  %4751 = vmatprep.subr.mxu0 0.0
  %4752 = vmatpush1.msra.mxu0 %v4716
  %4753 = vmatprep.subr.mxu0 0.0
  %4754 = vmatpush1.msra.mxu0 %v4717
  %4755 = vmatprep.subr.mxu0 0.0
  %4756 = vmatpush1.msra.mxu0 %v4718
  %4757 = vmatprep.subr.mxu0 0.0
  %4758 = vmatpush1.msra.mxu0 %v4719
  %4759 = vmatprep.subr.mxu0 0.0
  %4760 = vmatpush1.msra.mxu0 0.0
  %4761 = vmatprep.subr.mxu0 0.0
  %4762 = vmatpush1.msra.mxu0 0.0
  %4763 = vmatprep.subr.mxu0 0.0
  %4764 = vmatpush1.msra.mxu0 0.0
  %4765 = vmatprep.subr.mxu0 0.0
  %4766 = vmatpush1.msra.mxu0 0.0
  %4767 = vmatprep.subr.mxu0 0.0
  %4768 = vmatpush1.msra.mxu0 0.0
  %4769 = vmatprep.subr.mxu0 0.0
  %4770 = vmatpush1.msra.mxu0 0.0
  %4771 = vmatprep.subr.mxu0 0.0
  %4772 = vmatpush1.msra.mxu0 0.0
  %4773 = vmatprep.subr.mxu0 0.0
  %4774 = vmatpush1.msra.mxu0 0.0
  %4775 = vmatprep.subr.mxu0 0.0
  %4776 = vmatpush1.msra.mxu0 0.0
  %4777 = vmatprep.subr.mxu0 0.0
  %4778 = vmatpush1.msra.mxu0 0.0
  %4779 = vmatprep.subr.mxu0 0.0
  %4780 = vmatpush1.msra.mxu0 0.0
  %4781 = vmatprep.subr.mxu0 0.0
  %4782 = vmatpush1.msra.mxu0 0.0
  %4783 = vmatprep.subr.mxu0 0.0
  %4784 = vmatpush1.msra.mxu0 0.0
  %4785 = vmatprep.subr.mxu0 0.0
  %4786 = vmatpush1.msra.mxu0 0.0
  %4787 = vmatprep.subr.mxu0 0.0
  %4788 = vmatpush1.msra.mxu0 0.0
  %4789 = vmatprep.subr.mxu0 0.0
  %4790 = vmatpush1.msra.mxu0 0.0
  %4791 = vmatprep.mubr.f32.mxu0 0.0
  %4792 = vmatmul.mubr.f32.gmra.mrb[0].mxu0 %v4703
  %v4793 = vpop.f32.mrb[0].mxu0
  %v4794 = vadd.f32 %v4725, %v4793
  %v4795 = vpop.f32.mrb[0].mxu0
  %4796 = vdwg.mxu0
  %v4797 = vmax.f32 %v4794, 0.0
  %v4798 = vld [vmem:[%s11] sm:$0xff]
  %v4799 = vld [vmem:[%s11 + $0x8] sm:$0xff]
  %v4800 = vld [vmem:[%s11 + $0x10] sm:$0xff]
  %v4801 = vld [vmem:[%s11 + $0x18] sm:$0xff]
  %v4802 = vld [vmem:[%s11 + $0x20] sm:$0xff]
  %v4803 = vld [vmem:[%s11 + $0x28] sm:$0xff]
  %v4804 = vld [vmem:[%s11 + $0x30] sm:$0xff]
  %v4805 = vld [vmem:[%s11 + $0x38] sm:$0xff]
  %v4806 = vld [vmem:[%s11 + $0x40] sm:$0xff]
  %v4807 = vld [vmem:[%s11 + $0x48] sm:$0xff]
  %v4808 = vld [vmem:[%s11 + $0x50] sm:$0xff]
  %v4809 = vld [vmem:[%s11 + $0x58] sm:$0xff]
  %v4810 = vld [vmem:[%s11 + $0x60] sm:$0xff]
  %v4811 = vld [vmem:[%s11 + $0x68] sm:$0xff]
  %v4812 = vld [vmem:[%s11 + $0x70] sm:$0xff]
  %v4813 = vld [vmem:[%s11 + $0x78] sm:$0xff]
  %v4814 = vld [vmem:[%s12] sm:$0x1]
  %v4816 = vlaneseq
  %v4817 = vshrl.u32 %v4816, 7
  %v4818 = vsub.s32 0, %v4817
  %v4819 = vrot.slane %v4814, %v4818
  %4821 = vmatprep.subr.mxu0 0.0
  %4822 = vmatpush1.msra.mxu0 %v4798
  %4823 = vmatprep.subr.mxu0 0.0
  %4824 = vmatpush1.msra.mxu0 %v4799
  %4825 = vmatprep.subr.mxu0 0.0
  %4826 = vmatpush1.msra.mxu0 %v4800
  %4827 = vmatprep.subr.mxu0 0.0
  %4828 = vmatpush1.msra.mxu0 %v4801
  %4829 = vmatprep.subr.mxu0 0.0
  %4830 = vmatpush1.msra.mxu0 %v4802
  %4831 = vmatprep.subr.mxu0 0.0
  %4832 = vmatpush1.msra.mxu0 %v4803
  %4833 = vmatprep.subr.mxu0 0.0
  %4834 = vmatpush1.msra.mxu0 %v4804
  %4835 = vmatprep.subr.mxu0 0.0
  %4836 = vmatpush1.msra.mxu0 %v4805
  %4837 = vmatprep.subr.mxu0 0.0
  %4838 = vmatpush1.msra.mxu0 %v4806
  %4839 = vmatprep.subr.mxu0 0.0
  %4840 = vmatpush1.msra.mxu0 %v4807
  %4841 = vmatprep.subr.mxu0 0.0
  %4842 = vmatpush1.msra.mxu0 %v4808
  %4843 = vmatprep.subr.mxu0 0.0
  %4844 = vmatpush1.msra.mxu0 %v4809
  %4845 = vmatprep.subr.mxu0 0.0
  %4846 = vmatpush1.msra.mxu0 %v4810
  %4847 = vmatprep.subr.mxu0 0.0
  %4848 = vmatpush1.msra.mxu0 %v4811
  %4849 = vmatprep.subr.mxu0 0.0
  %4850 = vmatpush1.msra.mxu0 %v4812
  %4851 = vmatprep.subr.mxu0 0.0
  %4852 = vmatpush1.msra.mxu0 %v4813
  %4853 = vmatprep.subr.mxu0 0.0
  %4854 = vmatpush1.msra.mxu0 0.0
  %4855 = vmatprep.subr.mxu0 0.0
  %4856 = vmatpush1.msra.mxu0 0.0
  %4857 = vmatprep.subr.mxu0 0.0
  %4858 = vmatpush1.msra.mxu0 0.0
  %4859 = vmatprep.subr.mxu0 0.0
  %4860 = vmatpush1.msra.mxu0 0.0
  %4861 = vmatprep.subr.mxu0 0.0
  %4862 = vmatpush1.msra.mxu0 0.0
  %4863 = vmatprep.subr.mxu0 0.0
  %4864 = vmatpush1.msra.mxu0 0.0
  %4865 = vmatprep.subr.mxu0 0.0
  %4866 = vmatpush1.msra.mxu0 0.0
  %4867 = vmatprep.subr.mxu0 0.0
  %4868 = vmatpush1.msra.mxu0 0.0
  %4869 = vmatprep.subr.mxu0 0.0
  %4870 = vmatpush1.msra.mxu0 0.0
  %4871 = vmatprep.subr.mxu0 0.0
  %4872 = vmatpush1.msra.mxu0 0.0
  %4873 = vmatprep.subr.mxu0 0.0
  %4874 = vmatpush1.msra.mxu0 0.0
  %4875 = vmatprep.subr.mxu0 0.0
  %4876 = vmatpush1.msra.mxu0 0.0
  %4877 = vmatprep.subr.mxu0 0.0
  %4878 = vmatpush1.msra.mxu0 0.0
  %4879 = vmatprep.subr.mxu0 0.0
  %4880 = vmatpush1.msra.mxu0 0.0
  %4881 = vmatprep.subr.mxu0 0.0
  %4882 = vmatpush1.msra.mxu0 0.0
  %4883 = vmatprep.subr.mxu0 0.0
  %4884 = vmatpush1.msra.mxu0 0.0
  %4885 = vmatprep.mubr.f32.mxu0 0.0
  %4886 = vmatmul.mubr.f32.gmra.mrb[0].mxu0 %v4797
  %v4887 = vpop.f32.mrb[0].mxu0
  %v4888 = vadd.f32 %v4819, %v4887
  %v4889 = vpop.f32.mrb[0].mxu0
  %4890 = vdwg.mxu0
  %4891 = vst [vmem:[%s13] sm:$0xff] %v4888
  // Predicated region
  $region54: #{net_forward.1} parent=0 // pred_check
    _
  $region55: #{net_forward.1} parent=0 // pred_check_branch
    %4893 = sbr.rel (0) target = $region57
  $region56: #{net_forward.1} parent=0 // pred_region
    _
  $region57: #{net_forward.1} parent=0 // pred_fallthru
    _
  // Predicated region
  $region58: #{net_forward.1} parent=0 // pred_check
    _
  $region59: #{net_forward.1} parent=0 // pred_check_branch
    %4895 = sbr.rel (0) target = $region61
  $region60: #{net_forward.1} parent=0 // pred_region
    _
  $region61: #{net_forward.1} parent=0 // pred_fallthru
    _

</llo_original>
